<compile_context>
chip_gen: v5e
topology: v5e:2x2
jax: 0.10.0
libtpu: 0.0.40
codegen_flags: <defaults>
</compile_context>

<pallas_src>
import math

import jax
import jax.numpy as jnp
import numpy as np
from jax.experimental import pallas as pl
from jax.experimental.pallas import tpu as pltpu

# ---- Config (ChatGLM2 SelfAttention, small synthetic sizes) -----------------
NUM_HEADS = 4        # config.num_attention_heads
NUM_KV_HEADS = 2     # config.multi_query_group_num (multi_query_attention=True)
HEAD_SIZE = 128      # config.kv_channels
HIDDEN = 512         # config.hidden_size
SEQ = 16
BATCH = 2

QD = NUM_HEADS * HEAD_SIZE           # query projection width
KD = NUM_KV_HEADS * HEAD_SIZE        # key/value projection width
QKVD = QD + 2 * KD
ROPE = HEAD_SIZE // 2                # GLM applies rotary to half the head dim
HALF = ROPE // 2
GROUP = NUM_HEADS // NUM_KV_HEADS
M = SEQ * BATCH                      # merged (seq, batch) row count

assert 2 * ROPE == HEAD_SIZE
# Power-of-two sizes so the merged mask uses shifts / ands instead of div/mod.
assert M & (M - 1) == 0 and BATCH & (BATCH - 1) == 0 and GROUP & (GROUP - 1) == 0
LOG_M = M.bit_length() - 1
LOG_B = BATCH.bit_length() - 1
LOG_G = GROUP.bit_length() - 1


# --------------------------- Pallas kernel -----------------------------------
def _self_attention_kernel(x_ref, wqkv_ref, bqkv_ref, a_ref, b_ref, wd_ref,
                           out_ref, qkv_scr, q_scr, k_scr, v_scr):
    # Fused QKV projection: bf16 operands, f32 accumulation + bias. Spilled to
    # VMEM scratch so the [M, QKVD] f32 slab never stays live in vregs.
    qkv_scr[...] = jnp.dot(x_ref[...], wqkv_ref[...],
                           preferred_element_type=jnp.float32) + bqkv_ref[...]

    a = a_ref[...]                                                     # [M, D] f32
    b = b_ref[...]                                                     # [M, D] f32

    def rope(u):
        # GLM RoPE in the permuted [x | pass | y | pass] head layout: the rope
        # partner lane sits exactly HEAD_SIZE/2 away, so the rotation is a
        # half-width lane swap (equivalent to roll by HEAD_SIZE//2).
        # head_size**-0.25 (half of the attention scale) is folded into a, b.
        rot = jnp.concatenate(
            [u[:, HEAD_SIZE // 2:], u[:, :HEAD_SIZE // 2]], axis=1)
        return u * a + rot * b

    # RoPE'd query heads stacked along rows [NH*M, D]; rope'd keys and raw
    # values stacked along rows [NKV*M, D]; all stored bf16 for the MXU.
    for h in range(NUM_HEADS):
        q_scr[h * M:(h + 1) * M, :] = rope(
            qkv_scr[:, h * HEAD_SIZE:(h + 1) * HEAD_SIZE]).astype(jnp.bfloat16)
    for g in range(NUM_KV_HEADS):
        k_scr[g * M:(g + 1) * M, :] = rope(
            qkv_scr[:, QD + g * HEAD_SIZE:
                       QD + (g + 1) * HEAD_SIZE]).astype(jnp.bfloat16)
        v_scr[g * M:(g + 1) * M, :] = qkv_scr[
            :, QD + KD + g * HEAD_SIZE:
               QD + KD + (g + 1) * HEAD_SIZE].astype(jnp.bfloat16)

    # Merged (kv-group, batch, causal) mask. Query row r = h*M + m, key column
    # c = g*M + n where m, n are flattened (seq, batch) indices: seq = m >> LOG_B,
    # batch = m & (BATCH-1).  Cross-group entries are masked exactly like
    # cross-batch ones, so a single stacked scores matmul is valid.
    NHM = NUM_HEADS * M
    NKM = NUM_KV_HEADS * M
    rr = jax.lax.broadcasted_iota(jnp.int32, (NHM, NKM), 0)
    cc = jax.lax.broadcasted_iota(jnp.int32, (NHM, NKM), 1)
    mq = rr & (M - 1)
    nk = cc & (M - 1)
    valid = ((rr >> (LOG_M + LOG_G)) == (cc >> LOG_M)) \
        & ((mq & (BATCH - 1)) == (nk & (BATCH - 1))) \
        & ((mq >> LOG_B) >= (nk >> LOG_B))

    # One scores matmul over all heads / KV groups (bf16 operands, f32 acc).
    sc = jax.lax.dot_general(q_scr[...], k_scr[...], (((1,), (1,)), ((), ())),
                             preferred_element_type=jnp.float32)      # [NHM, NKM]
    sc = jnp.where(valid, sc, -1e30)
    mx = jnp.max(sc, axis=-1, keepdims=True)
    p = jnp.exp(sc - mx)
    l = jnp.sum(p, axis=-1, keepdims=True)
    p = (p / l).astype(jnp.bfloat16)            # masked lanes are exactly 0
    o = jnp.dot(p, v_scr[...], preferred_element_type=jnp.float32)    # [NHM, D]

    # Lane-concat per-head outputs -> [M, QD] bf16, single fused dense matmul
    # (row-parallel Linear, no bias).
    att = jnp.concatenate(
        [o[h * M:(h + 1) * M, :] for h in range(NUM_HEADS)],
        axis=-1).astype(jnp.bfloat16)                                  # [M, QD]
    out_ref[...] = jnp.dot(att, wd_ref[...],
                           preferred_element_type=jnp.float32)         # [M, HIDDEN]


# ------------------------ Weight preprocessing --------------------------------
def _head_permutation():
    """Per-head column permutation: GLM interleaved rope layout ->
    [x(HALF) | pass(HALF) | y(HALF) | pass(HALF)], so the rope partner sits
    exactly HEAD_SIZE/2 lanes away (one half-width lane swap in the kernel)."""
    j = np.arange(HEAD_SIZE)
    return np.where(j < HALF, 2 * j,
           np.where(j < 2 * HALF, j + HALF,
           np.where(j < 3 * HALF, 2 * (j - 2 * HALF) + 1, j)))


def preprocess_params(w_qkv, b_qkv, w_dense_t):
    """One-time weight prep: permute q/k head columns of the fused QKV weights
    into the kernel rope layout and cast weights to bf16. Attention scores are
    invariant under a common permutation of q/k head lanes (v is untouched),
    so the module output is unchanged (up to bf16 rounding)."""
    perm = _head_permutation()
    col_perm = np.concatenate(
        [h * HEAD_SIZE + perm for h in range(NUM_HEADS + NUM_KV_HEADS)]
        + [np.arange(QD + KD, QKVD)])
    w_qkv_p = w_qkv[:, col_perm].astype(jnp.bfloat16)
    b_qkv_p = b_qkv[col_perm].reshape(1, QKVD).astype(jnp.float32)
    w_dense_p = w_dense_t.astype(jnp.bfloat16)
    return w_qkv_p, b_qkv_p, w_dense_p


# ----------------------------- Forward wrapper --------------------------------
def self_attention_pallas(hidden_sbh, cos, sin, w_qkv_p, b_qkv_p, w_dense_p):
    S, B, H = hidden_sbh.shape
    # Row-major collapse of (seq, batch): free reshape, no transpose.
    # bf16 activations halve the input DMA (f32 accumulation in-kernel).
    x2d = hidden_sbh.reshape(S * B, H).astype(jnp.bfloat16)

    # Per-position rope coefficients in the permuted head layout, shared by q
    # and k, with HEAD_SIZE**-0.25 folded in (so q.k carries the full scale).
    r_scale = float(HEAD_SIZE) ** -0.25
    cos1, cos2 = cos[:, :HALF], cos[:, HALF:ROPE]
    sin1, sin2 = sin[:, :HALF], sin[:, HALF:ROPE]
    ones = jnp.ones((S, HALF), jnp.float32)
    zeros = jnp.zeros((S, HALF), jnp.float32)
    a_pos = jnp.concatenate([cos1, ones, cos2, ones], axis=-1) * r_scale   # [S, D]
    b_pos = jnp.concatenate([-sin1, zeros, sin2, zeros], axis=-1) * r_scale
    # Flattened row r corresponds to position r // BATCH.
    a_rows = jnp.repeat(a_pos, B, axis=0)                                  # [M, D]
    b_rows = jnp.repeat(b_pos, B, axis=0)

    flops = (2 * M * H * QKVD                                   # QKV projection
             + 4 * (NUM_HEADS * M) * (NUM_KV_HEADS * M) * HEAD_SIZE  # scores + PV
             + 2 * M * QD * H)                                  # dense projection
    bytes_accessed = (x2d.size * 2 + w_qkv_p.size * 2 + b_qkv_p.size * 4
                      + a_rows.size * 4 + b_rows.size * 4
                      + w_dense_p.size * 2 + M * H * 4)

    out2d = pl.pallas_call(
        _self_attention_kernel,
        out_shape=jax.ShapeDtypeStruct((S * B, HIDDEN), jnp.float32),
        scratch_shapes=[
            pltpu.VMEM((M, QKVD), jnp.float32),                     # qkv slab
            pltpu.VMEM((NUM_HEADS * M, HEAD_SIZE), jnp.bfloat16),   # q stacked
            pltpu.VMEM((NUM_KV_HEADS * M, HEAD_SIZE), jnp.bfloat16),  # k stacked
            pltpu.VMEM((NUM_KV_HEADS * M, HEAD_SIZE), jnp.bfloat16),  # v stacked
        ],
        cost_estimate=pl.CostEstimate(
            flops=flops,
            transcendentals=(NUM_HEADS * M) * (NUM_KV_HEADS * M),
            bytes_accessed=bytes_accessed),
    )(x2d, w_qkv_p, b_qkv_p, a_rows, b_rows, w_dense_p)

    return out2d.reshape(S, B, HIDDEN)                                     # [S, B, H]


# --------------------- Pure-JAX reference (torch semantics) -------------------
def _rope_ref(states, cos, sin):
    S_, Hn, Dd = states.shape
    r = Dd // 2
    rope = states[..., :r]
    rope = rope.reshape(S_, Hn, r // 2, 2)
    rope = jnp.swapaxes(rope, -2, -1).reshape(S_, Hn, r)     # _extract_rope
    half = r // 2
    rot = jnp.concatenate([-rope[..., half:], rope[..., :half]], axis=-1)
    rope = rope * cos[:, None, :] + rot * sin[:, None, :]    # ApplyRotaryEmb
    rope = rope.reshape(S_, Hn, 2, half)
    rope = jnp.swapaxes(rope, -2, -1).reshape(S_, Hn, r)     # _fill_rope
    return jnp.concatenate([rope, states[..., r:]], axis=-1)


def self_attention_ref(hidden_sbh, cos, sin, w_qkv, b_qkv, w_dense_t):
    S, B, H = hidden_sbh.shape
    outs = []
    for b in range(B):
        x = hidden_sbh[:, b, :]
        qkv = x @ w_qkv + b_qkv
        q = qkv[:, :QD].reshape(S, NUM_HEADS, HEAD_SIZE)
        k = qkv[:, QD:QD + KD].reshape(S, NUM_KV_HEADS, HEAD_SIZE)
        v = qkv[:, QD + KD:].reshape(S, NUM_KV_HEADS, HEAD_SIZE)
        q = _rope_ref(q, cos, sin)
        k = _rope_ref(k, cos, sin)
        kr = jnp.repeat(k, GROUP, axis=1)
        vr = jnp.repeat(v, GROUP, axis=1)
        sc = jnp.einsum('qhd,khd->hqk', q, kr) / math.sqrt(HEAD_SIZE)
        mask = jnp.tril(jnp.ones((S, S), bool))
        sc = jnp.where(mask[None], sc, -1e30)
        p = jax.nn.softmax(sc, axis=-1)
        o = jnp.einsum('hqk,khd->qhd', p, vr).reshape(S, QD)
        outs.append(o @ w_dense_t)
    return jnp.stack(outs, axis=1)                                    # [S, B, H]


# --------------------------------- Main ---------------------------------------
if __name__ == "__main__":
    key = jax.random.PRNGKey(0)
    k1, k2, k3, k4 = jax.random.split(key, 4)

    hidden = jax.random.normal(k1, (SEQ, BATCH, HIDDEN), jnp.float32)
    # Parameter shapes from __init__:
    #   query_key_value: Linear(hidden, (Hq + 2*Hkv)*head_size, bias=True)
    #   dense:           Linear(Hq*head_size, hidden, bias=False)  (passed as W^T)
    w_qkv = jax.random.normal(k2, (HIDDEN, QKVD), jnp.float32) / math.sqrt(HIDDEN)
    b_qkv = jax.random.normal(k3, (QKVD,), jnp.float32) * 0.02
    w_dense_t = jax.random.normal(k4, (QD, HIDDEN), jnp.float32) / math.sqrt(QD)

    # rotary_pos_emb = (cos, sin), each [seq, head_size // 2] (GLM rotary dim).
    pos = jnp.arange(SEQ, dtype=jnp.float32)
    inv_freq = 1.0 / (10000.0 ** (jnp.arange(0, ROPE, 2, dtype=jnp.float32) / ROPE))
    freqs = jnp.outer(pos, inv_freq)                        # [S, ROPE//2]
    cos = jnp.concatenate([jnp.cos(freqs)] * 2, axis=-1)    # [S, ROPE]
    sin = jnp.concatenate([jnp.sin(freqs)] * 2, axis=-1)

    # One-time weight preprocessing (layout permutation + bf16 cast).
    w_qkv_p, b_qkv_p, w_dense_p = preprocess_params(w_qkv, b_qkv, w_dense_t)

    out = self_attention_pallas(hidden, cos, sin, w_qkv_p, b_qkv_p, w_dense_p)
    out = jax.block_until_ready(out)

    ref = self_attention_ref(hidden, cos, sin, w_qkv, b_qkv, w_dense_t)
    np.testing.assert_allclose(np.asarray(out), np.asarray(ref), rtol=5e-2, atol=5e-2)
    print("KERNEL_OK")
</pallas_src>

<mosaic_0001>
module attributes {stable_mosaic.version = 11 : i64} {
  func.func @_self_attention_kernel(%arg0: memref<32x512xbf16, #tpu.memory_space<vmem>>, %arg1: memref<512x1024xbf16, #tpu.memory_space<vmem>>, %arg2: memref<1x1024xf32, #tpu.memory_space<vmem>>, %arg3: memref<32x128xf32, #tpu.memory_space<vmem>>, %arg4: memref<32x128xf32, #tpu.memory_space<vmem>>, %arg5: memref<512x512xbf16, #tpu.memory_space<vmem>>, %arg6: memref<32x512xf32, #tpu.memory_space<vmem>>, %arg7: memref<32x1024xf32, #tpu.memory_space<vmem>>, %arg8: memref<128x128xbf16, #tpu.memory_space<vmem>>, %arg9: memref<64x128xbf16, #tpu.memory_space<vmem>>, %arg10: memref<64x128xbf16, #tpu.memory_space<vmem>>) attributes {dimension_semantics = [], scalar_prefetch = 0 : i64, scratch_operands = 4 : i64, tpu.core_type = #tpu.core_type<tc>} {
    %c0 = arith.constant 0 : index
    %c0_0 = arith.constant 0 : index
    %0 = vector.load %arg0[%c0, %c0_0] : memref<32x512xbf16, #tpu.memory_space<vmem>>, vector<32x512xbf16>
    %c0_1 = arith.constant 0 : index
    %c0_2 = arith.constant 0 : index
    %1 = vector.load %arg1[%c0_1, %c0_2] : memref<512x1024xbf16, #tpu.memory_space<vmem>>, vector<512x1024xbf16>
    %cst = arith.constant dense<0.000000e+00> : vector<32x1024xf32>
    %2 = tpu.matmul %0, %1, %cst {dimension_numbers = #tpu.dot_dimension_numbers<[1], [0], [0], [1], [0, 0, 1, 1], [], []>} : vector<32x512xbf16>, vector<512x1024xbf16>, vector<32x1024xf32> -> vector<32x1024xf32>
    %c0_3 = arith.constant 0 : index
    %c0_4 = arith.constant 0 : index
    %3 = vector.load %arg2[%c0_3, %c0_4] : memref<1x1024xf32, #tpu.memory_space<vmem>>, vector<1x1024xf32>
    %4 = vector.broadcast %3 : vector<1x1024xf32> to vector<32x1024xf32>
    %5 = arith.addf %2, %4 : vector<32x1024xf32>
    %c0_5 = arith.constant 0 : index
    %c0_6 = arith.constant 0 : index
    %6 = vector.load %arg7[%c0_5, %c0_6] : memref<32x1024xf32, #tpu.memory_space<vmem>>, vector<32x1024xf32>
    tpu.vector_store %arg7[%c0_5, %c0_6], %5 {strides = array<i32>} : memref<32x1024xf32, #tpu.memory_space<vmem>>, vector<32x1024xf32>,
    %c0_7 = arith.constant 0 : index
    %c0_8 = arith.constant 0 : index
    %7 = vector.load %arg3[%c0_7, %c0_8] : memref<32x128xf32, #tpu.memory_space<vmem>>, vector<32x128xf32>
    %c0_9 = arith.constant 0 : index
    %c0_10 = arith.constant 0 : index
    %8 = vector.load %arg4[%c0_9, %c0_10] : memref<32x128xf32, #tpu.memory_space<vmem>>, vector<32x128xf32>
    %c0_11 = arith.constant 0 : index
    %c0_12 = arith.constant 0 : index
    %9 = vector.load %arg7[%c0_11, %c0_12] : memref<32x1024xf32, #tpu.memory_space<vmem>>, vector<32x128xf32>
    %10 = vector.extract_strided_slice %9 {offsets = [0, 64], sizes = [32, 64], strides = [1, 1]} : vector<32x128xf32> to vector<32x64xf32>
    %11 = vector.extract_strided_slice %9 {offsets = [0, 0], sizes = [32, 64], strides = [1, 1]} : vector<32x128xf32> to vector<32x64xf32>
    %12 = tpu.concatenate %10, %11 in 1 : vector<32x64xf32>, vector<32x64xf32> -> vector<32x128xf32>
    %13 = arith.mulf %9, %7 : vector<32x128xf32>
    %14 = arith.mulf %12, %8 : vector<32x128xf32>
    %15 = arith.addf %13, %14 : vector<32x128xf32>
    %16 = arith.truncf %15 : vector<32x128xf32> to vector<32x128xbf16>
    %c0_13 = arith.constant 0 : index
    %c0_14 = arith.constant 0 : index
    %17 = vector.load %arg8[%c0_13, %c0_14] : memref<128x128xbf16, #tpu.memory_space<vmem>>, vector<32x128xbf16>
    tpu.vector_store %arg8[%c0_13, %c0_14], %16 {strides = array<i32>} : memref<128x128xbf16, #tpu.memory_space<vmem>>, vector<32x128xbf16>,
    %c0_15 = arith.constant 0 : index
    %c128 = arith.constant 128 : index
    %18 = vector.load %arg7[%c0_15, %c128] : memref<32x1024xf32, #tpu.memory_space<vmem>>, vector<32x128xf32>
    %19 = vector.extract_strided_slice %18 {offsets = [0, 64], sizes = [32, 64], strides = [1, 1]} : vector<32x128xf32> to vector<32x64xf32>
    %20 = vector.extract_strided_slice %18 {offsets = [0, 0], sizes = [32, 64], strides = [1, 1]} : vector<32x128xf32> to vector<32x64xf32>
    %21 = tpu.concatenate %19, %20 in 1 : vector<32x64xf32>, vector<32x64xf32> -> vector<32x128xf32>
    %22 = arith.mulf %18, %7 : vector<32x128xf32>
    %23 = arith.mulf %21, %8 : vector<32x128xf32>
    %24 = arith.addf %22, %23 : vector<32x128xf32>
    %25 = arith.truncf %24 : vector<32x128xf32> to vector<32x128xbf16>
    %c32 = arith.constant 32 : index
    %c0_16 = arith.constant 0 : index
    %26 = vector.load %arg8[%c32, %c0_16] : memref<128x128xbf16, #tpu.memory_space<vmem>>, vector<32x128xbf16>
    tpu.vector_store %arg8[%c32, %c0_16], %25 {strides = array<i32>} : memref<128x128xbf16, #tpu.memory_space<vmem>>, vector<32x128xbf16>,
    %c0_17 = arith.constant 0 : index
    %c256 = arith.constant 256 : index
    %27 = vector.load %arg7[%c0_17, %c256] : memref<32x1024xf32, #tpu.memory_space<vmem>>, vector<32x128xf32>
    %28 = vector.extract_strided_slice %27 {offsets = [0, 64], sizes = [32, 64], strides = [1, 1]} : vector<32x128xf32> to vector<32x64xf32>
    %29 = vector.extract_strided_slice %27 {offsets = [0, 0], sizes = [32, 64], strides = [1, 1]} : vector<32x128xf32> to vector<32x64xf32>
    %30 = tpu.concatenate %28, %29 in 1 : vector<32x64xf32>, vector<32x64xf32> -> vector<32x128xf32>
    %31 = arith.mulf %27, %7 : vector<32x128xf32>
    %32 = arith.mulf %30, %8 : vector<32x128xf32>
    %33 = arith.addf %31, %32 : vector<32x128xf32>
    %34 = arith.truncf %33 : vector<32x128xf32> to vector<32x128xbf16>
    %c64 = arith.constant 64 : index
    %c0_18 = arith.constant 0 : index
    %35 = vector.load %arg8[%c64, %c0_18] : memref<128x128xbf16, #tpu.memory_space<vmem>>, vector<32x128xbf16>
    tpu.vector_store %arg8[%c64, %c0_18], %34 {strides = array<i32>} : memref<128x128xbf16, #tpu.memory_space<vmem>>, vector<32x128xbf16>,
    %c0_19 = arith.constant 0 : index
    %c384 = arith.constant 384 : index
    %36 = vector.load %arg7[%c0_19, %c384] : memref<32x1024xf32, #tpu.memory_space<vmem>>, vector<32x128xf32>
    %37 = vector.extract_strided_slice %36 {offsets = [0, 64], sizes = [32, 64], strides = [1, 1]} : vector<32x128xf32> to vector<32x64xf32>
    %38 = vector.extract_strided_slice %36 {offsets = [0, 0], sizes = [32, 64], strides = [1, 1]} : vector<32x128xf32> to vector<32x64xf32>
    %39 = tpu.concatenate %37, %38 in 1 : vector<32x64xf32>, vector<32x64xf32> -> vector<32x128xf32>
    %40 = arith.mulf %36, %7 : vector<32x128xf32>
    %41 = arith.mulf %39, %8 : vector<32x128xf32>
    %42 = arith.addf %40, %41 : vector<32x128xf32>
    %43 = arith.truncf %42 : vector<32x128xf32> to vector<32x128xbf16>
    %c96 = arith.constant 96 : index
    %c0_20 = arith.constant 0 : index
    %44 = vector.load %arg8[%c96, %c0_20] : memref<128x128xbf16, #tpu.memory_space<vmem>>, vector<32x128xbf16>
    tpu.vector_store %arg8[%c96, %c0_20], %43 {strides = array<i32>} : memref<128x128xbf16, #tpu.memory_space<vmem>>, vector<32x128xbf16>,
    %c0_21 = arith.constant 0 : index
    %c512 = arith.constant 512 : index
    %45 = vector.load %arg7[%c0_21, %c512] : memref<32x1024xf32, #tpu.memory_space<vmem>>, vector<32x128xf32>
    %46 = vector.extract_strided_slice %45 {offsets = [0, 64], sizes = [32, 64], strides = [1, 1]} : vector<32x128xf32> to vector<32x64xf32>
    %47 = vector.extract_strided_slice %45 {offsets = [0, 0], sizes = [32, 64], strides = [1, 1]} : vector<32x128xf32> to vector<32x64xf32>
    %48 = tpu.concatenate %46, %47 in 1 : vector<32x64xf32>, vector<32x64xf32> -> vector<32x128xf32>
    %49 = arith.mulf %45, %7 : vector<32x128xf32>
    %50 = arith.mulf %48, %8 : vector<32x128xf32>
    %51 = arith.addf %49, %50 : vector<32x128xf32>
    %52 = arith.truncf %51 : vector<32x128xf32> to vector<32x128xbf16>
    %c0_22 = arith.constant 0 : index
    %c0_23 = arith.constant 0 : index
    %53 = vector.load %arg9[%c0_22, %c0_23] : memref<64x128xbf16, #tpu.memory_space<vmem>>, vector<32x128xbf16>
    tpu.vector_store %arg9[%c0_22, %c0_23], %52 {strides = array<i32>} : memref<64x128xbf16, #tpu.memory_space<vmem>>, vector<32x128xbf16>,
    %c0_24 = arith.constant 0 : index
    %c768 = arith.constant 768 : index
    %54 = vector.load %arg7[%c0_24, %c768] : memref<32x1024xf32, #tpu.memory_space<vmem>>, vector<32x128xf32>
    %55 = arith.truncf %54 : vector<32x128xf32> to vector<32x128xbf16>
    %c0_25 = arith.constant 0 : index
    %c0_26 = arith.constant 0 : index
    %56 = vector.load %arg10[%c0_25, %c0_26] : memref<64x128xbf16, #tpu.memory_space<vmem>>, vector<32x128xbf16>
    tpu.vector_store %arg10[%c0_25, %c0_26], %55 {strides = array<i32>} : memref<64x128xbf16, #tpu.memory_space<vmem>>, vector<32x128xbf16>,
    %c0_27 = arith.constant 0 : index
    %c640 = arith.constant 640 : index
    %57 = vector.load %arg7[%c0_27, %c640] : memref<32x1024xf32, #tpu.memory_space<vmem>>, vector<32x128xf32>
    %58 = vector.extract_strided_slice %57 {offsets = [0, 64], sizes = [32, 64], strides = [1, 1]} : vector<32x128xf32> to vector<32x64xf32>
    %59 = vector.extract_strided_slice %57 {offsets = [0, 0], sizes = [32, 64], strides = [1, 1]} : vector<32x128xf32> to vector<32x64xf32>
    %60 = tpu.concatenate %58, %59 in 1 : vector<32x64xf32>, vector<32x64xf32> -> vector<32x128xf32>
    %61 = arith.mulf %57, %7 : vector<32x128xf32>
    %62 = arith.mulf %60, %8 : vector<32x128xf32>
    %63 = arith.addf %61, %62 : vector<32x128xf32>
    %64 = arith.truncf %63 : vector<32x128xf32> to vector<32x128xbf16>
    %c32_28 = arith.constant 32 : index
    %c0_29 = arith.constant 0 : index
    %65 = vector.load %arg9[%c32_28, %c0_29] : memref<64x128xbf16, #tpu.memory_space<vmem>>, vector<32x128xbf16>
    tpu.vector_store %arg9[%c32_28, %c0_29], %64 {strides = array<i32>} : memref<64x128xbf16, #tpu.memory_space<vmem>>, vector<32x128xbf16>,
    %c0_30 = arith.constant 0 : index
    %c896 = arith.constant 896 : index
    %66 = vector.load %arg7[%c0_30, %c896] : memref<32x1024xf32, #tpu.memory_space<vmem>>, vector<32x128xf32>
    %67 = arith.truncf %66 : vector<32x128xf32> to vector<32x128xbf16>
    %c32_31 = arith.constant 32 : index
    %c0_32 = arith.constant 0 : index
    %68 = vector.load %arg10[%c32_31, %c0_32] : memref<64x128xbf16, #tpu.memory_space<vmem>>, vector<32x128xbf16>
    tpu.vector_store %arg10[%c32_31, %c0_32], %67 {strides = array<i32>} : memref<64x128xbf16, #tpu.memory_space<vmem>>, vector<32x128xbf16>,
    %69 = tpu.iota {dimensions = array<i32: 0>} : vector<128x64xi32>
    %70 = tpu.iota {dimensions = array<i32: 1>} : vector<128x64xi32>
    %c31_i32 = arith.constant 31 : i32
    %71 = vector.broadcast %c31_i32 : i32 to vector<128x64xi32>
    %72 = arith.andi %69, %71 : vector<128x64xi32>
    %c31_i32_33 = arith.constant 31 : i32
    %73 = vector.broadcast %c31_i32_33 : i32 to vector<128x64xi32>
    %74 = arith.andi %70, %73 : vector<128x64xi32>
    %c6_i32 = arith.constant 6 : i32
    %75 = vector.broadcast %c6_i32 : i32 to vector<128x64xi32>
    %76 = arith.shrsi %69, %75 : vector<128x64xi32>
    %c5_i32 = arith.constant 5 : i32
    %77 = vector.broadcast %c5_i32 : i32 to vector<128x64xi32>
    %78 = arith.shrsi %70, %77 : vector<128x64xi32>
    %79 = arith.cmpi eq, %76, %78 : vector<128x64xi32>
    %c1_i32 = arith.constant 1 : i32
    %80 = vector.broadcast %c1_i32 : i32 to vector<128x64xi32>
    %81 = arith.andi %72, %80 : vector<128x64xi32>
    %c1_i32_34 = arith.constant 1 : i32
    %82 = vector.broadcast %c1_i32_34 : i32 to vector<128x64xi32>
    %83 = arith.andi %74, %82 : vector<128x64xi32>
    %84 = arith.cmpi eq, %81, %83 : vector<128x64xi32>
    %85 = arith.andi %79, %84 : vector<128x64xi1>
    %c1_i32_35 = arith.constant 1 : i32
    %86 = vector.broadcast %c1_i32_35 : i32 to vector<128x64xi32>
    %87 = arith.shrsi %72, %86 : vector<128x64xi32>
    %c1_i32_36 = arith.constant 1 : i32
    %88 = vector.broadcast %c1_i32_36 : i32 to vector<128x64xi32>
    %89 = arith.shrsi %74, %88 : vector<128x64xi32>
    %90 = arith.cmpi sge, %87, %89 : vector<128x64xi32>
    %91 = arith.andi %85, %90 : vector<128x64xi1>
    %c0_37 = arith.constant 0 : index
    %c0_38 = arith.constant 0 : index
    %92 = vector.load %arg8[%c0_37, %c0_38] : memref<128x128xbf16, #tpu.memory_space<vmem>>, vector<128x128xbf16>
    %c0_39 = arith.constant 0 : index
    %c0_40 = arith.constant 0 : index
    %93 = vector.load %arg9[%c0_39, %c0_40] : memref<64x128xbf16, #tpu.memory_space<vmem>>, vector<64x128xbf16>
    %cst_41 = arith.constant dense<0.000000e+00> : vector<128x64xf32>
    %94 = tpu.matmul %92, %93, %cst_41 {dimension_numbers = #tpu.dot_dimension_numbers<[1], [1], [0], [0], [0, 0, 1, 0], [], []>} : vector<128x128xbf16>, vector<64x128xbf16>, vector<128x64xf32> -> vector<128x64xf32>
    %cst_42 = arith.constant -1.000000e+30 : f32
    %95 = vector.broadcast %cst_42 : f32 to vector<128x64xf32>
    %96 = arith.select %91, %94, %95 : vector<128x64xi1>, vector<128x64xf32>
    %cst_43 = arith.constant dense<0xFF800000> : vector<128xf32>
    %97 = vector.multi_reduction <maximumf>, %96, %cst_43 [1] : vector<128x64xf32> to vector<128xf32>
    %98 = vector.shape_cast %97 : vector<128xf32> to vector<128x1xf32>
    %99 = vector.broadcast %98 : vector<128x1xf32> to vector<128x64xf32>
    %100 = arith.subf %96, %99 : vector<128x64xf32>
    %101 = math.exp %100 : vector<128x64xf32>
    %cst_44 = arith.constant dense<0.000000e+00> : vector<128xf32>
    %102 = vector.multi_reduction <add>, %101, %cst_44 [1] : vector<128x64xf32> to vector<128xf32>
    %103 = vector.shape_cast %102 : vector<128xf32> to vector<128x1xf32>
    %104 = vector.broadcast %103 : vector<128x1xf32> to vector<128x64xf32>
    %105 = arith.divf %101, %104 : vector<128x64xf32>
    %106 = arith.truncf %105 : vector<128x64xf32> to vector<128x64xbf16>
    %c0_45 = arith.constant 0 : index
    %c0_46 = arith.constant 0 : index
    %107 = vector.load %arg10[%c0_45, %c0_46] : memref<64x128xbf16, #tpu.memory_space<vmem>>, vector<64x128xbf16>
    %cst_47 = arith.constant dense<0.000000e+00> : vector<128x128xf32>
    %108 = tpu.matmul %106, %107, %cst_47 {dimension_numbers = #tpu.dot_dimension_numbers<[1], [0], [0], [1], [0, 0, 1, 1], [], []>} : vector<128x64xbf16>, vector<64x128xbf16>, vector<128x128xf32> -> vector<128x128xf32>
    %109 = vector.extract_strided_slice %108 {offsets = [0, 0], sizes = [32, 128], strides = [1, 1]} : vector<128x128xf32> to vector<32x128xf32>
    %110 = vector.extract_strided_slice %108 {offsets = [32, 0], sizes = [32, 128], strides = [1, 1]} : vector<128x128xf32> to vector<32x128xf32>
    %111 = vector.extract_strided_slice %108 {offsets = [64, 0], sizes = [32, 128], strides = [1, 1]} : vector<128x128xf32> to vector<32x128xf32>
    %112 = vector.extract_strided_slice %108 {offsets = [96, 0], sizes = [32, 128], strides = [1, 1]} : vector<128x128xf32> to vector<32x128xf32>
    %113 = tpu.concatenate %109, %110, %111, %112 in 1 : vector<32x128xf32>, vector<32x128xf32>, vector<32x128xf32>, vector<32x128xf32> -> vector<32x512xf32>
    %114 = arith.truncf %113 : vector<32x512xf32> to vector<32x512xbf16>
    %c0_48 = arith.constant 0 : index
    %c0_49 = arith.constant 0 : index
    %115 = vector.load %arg5[%c0_48, %c0_49] : memref<512x512xbf16, #tpu.memory_space<vmem>>, vector<512x512xbf16>
    %cst_50 = arith.constant dense<0.000000e+00> : vector<32x512xf32>
    %116 = tpu.matmul %114, %115, %cst_50 {dimension_numbers = #tpu.dot_dimension_numbers<[1], [0], [0], [1], [0, 0, 1, 1], [], []>} : vector<32x512xbf16>, vector<512x512xbf16>, vector<32x512xf32> -> vector<32x512xf32>
    %c0_51 = arith.constant 0 : index
    %c0_52 = arith.constant 0 : index
    %117 = vector.load %arg6[%c0_51, %c0_52] : memref<32x512xf32, #tpu.memory_space<vmem>>, vector<32x512xf32>
    tpu.vector_store %arg6[%c0_51, %c0_52], %116 {strides = array<i32>} : memref<32x512xf32, #tpu.memory_space<vmem>>, vector<32x512xf32>,
    return
  }
}

</mosaic_0001>

<llo_original>
// kernel: tpu_custom_call.1
$region0: #{tpu_custom_call.1}
  #allocation0 [shape = 'u32[]', space=smem, size = 0x4, offset = 0x4, fixed_abs, tag = 'smem constant byte address 0x4 - core index']
  #allocation1 [shape = 'u32[72,128]{1,0:T(1,128)}', space=vmem, size = 0x9000, scoped, tag = 'internal scratch']
  #allocation2 [shape = 'f32[32,1024]{1,0:T(8,128)}', space=vmem, size = 0x20000, scoped, tag = 'scratch operand']
  #allocation3 [shape = 'bf16[128,128]{1,0:T(8,128)(2,1)}', space=vmem, size = 0x8000, scoped, tag = 'scratch operand']
  #allocation4 [shape = 'bf16[64,128]{1,0:T(8,128)(2,1)}', space=vmem, size = 0x4000, scoped, tag = 'scratch operand']
  #allocation5 [shape = 'bf16[64,128]{1,0:T(8,128)(2,1)}', space=vmem, size = 0x4000, scoped, tag = 'scratch operand']
  %s0 = inlined_call_operand.hbm [shape: bf16[32,512], index: 0, kind: input, shape index: {}]
  %s1 = inlined_call_operand.hbm [shape: bf16[512,1024], index: 1, kind: input, shape index: {}]
  %s2 = inlined_call_operand.hbm [shape: f32[1,1024], index: 2, kind: input, shape index: {}]
  %s3 = inlined_call_operand.hbm [shape: f32[32,128], index: 3, kind: input, shape index: {}]
  %s4 = inlined_call_operand.hbm [shape: f32[32,128], index: 4, kind: input, shape index: {}]
  %s5 = inlined_call_operand.hbm [shape: bf16[512,512], index: 5, kind: input, shape index: {}]
  %s6 = inlined_call_operand.hbm [shape: f32[32,512], index: 6, kind: output, shape index: {}]
  %s7 = sld [smem:[#allocation0]]
  $region58: #{tpu_custom_call.1} parent=0
    _
  %s9 = ssub.s32 1, %s7
  %s10 = scalar_select 0, %s9, %s7
  $region1: #{tpu_custom_call.1} parent=0
    #allocation6 [shape = 'u8[32768]{0}', space=vmem, size = 0x8000, scoped, tag = 'input window, operand 0, single buffered']
    #allocation7 [shape = 's32[1]{0}', space=sflag, size = 0x4, scoped, tag = 'scoped memory for tpu_custom_call.1']
    #allocation8 [shape = 's32[1]{0}', space=sflag, size = 0x4, scoped, tag = 'scoped memory for tpu_custom_call.1']
    #allocation9 [shape = 'u8[1048576]{0}', space=vmem, size = 0x100000, scoped, tag = 'input window, operand 1, single buffered']
    #allocation10 [shape = 's32[1]{0}', space=sflag, size = 0x4, scoped, tag = 'scoped memory for tpu_custom_call.1']
    #allocation11 [shape = 'u8[4096]{0}', space=vmem, size = 0x1000, scoped, tag = 'input window, operand 2, single buffered']
    #allocation12 [shape = 'u8[16384]{0}', space=vmem, size = 0x4000, scoped, tag = 'input window, operand 3, single buffered']
    #allocation13 [shape = 's32[1]{0}', space=sflag, size = 0x4, scoped, tag = 'scoped memory for tpu_custom_call.1']
    #allocation14 [shape = 'u8[16384]{0}', space=vmem, size = 0x4000, scoped, tag = 'input window, operand 4, single buffered']
    #allocation15 [shape = 'u8[524288]{0}', space=vmem, size = 0x80000, scoped, tag = 'input window, operand 5, single buffered']
    #allocation16 [shape = 's32[1]{0}', space=sflag, size = 0x4, scoped, tag = 'scoped memory for tpu_custom_call.1']
    #allocation17 [shape = 'u8[65536]{0}', space=vmem, size = 0x10000, scoped, tag = 'output window, operand 0, single buffered']
    %11 = vsyncpa [#allocation7], 0
    %12 = vsyncpa [#allocation10], 0
    %13 = vsyncpa [#allocation13], 0
    %14 = vsyncpa [#allocation16], 0
    %15 = vsyncpa [#allocation8], 0
    // Predicated region
    $region2: #{tpu_custom_call.1} parent=1 // pred_check
      _
    $region3: #{tpu_custom_call.1} parent=1 // pred_check_branch
      %17 = sbr.rel (0) target = $region5
    $region4: #{tpu_custom_call.1} parent=1 // pred_region
      %19 = vsyncadd [#allocation7], 0
      %s20 = sshll.u32 %s0, 4
      %s21 = int_to_ptr.hbm [resolvable:$true] %s20
      %s22 = sshll.u32 [#allocation6], 4
      %s23 = int_to_ptr.vmem [resolvable:$true] %s22
      %28 = dma.hbm_to_vmem [thread:$0]  %s21, 1024, %s23, [#allocation7], 256, 256, 16
    $region5: #{tpu_custom_call.1} parent=1 // pred_fallthru
      _
    // Predicated region
    $region6: #{tpu_custom_call.1} parent=1 // pred_check
      _
    $region7: #{tpu_custom_call.1} parent=1 // pred_check_branch
      %30 = sbr.rel (0) target = $region9
    $region8: #{tpu_custom_call.1} parent=1 // pred_region
      %32 = vsyncadd [#allocation10], 0
      %s33 = sshll.u32 %s1, 4
      %s34 = int_to_ptr.hbm [resolvable:$true] %s33
      %s35 = sshll.u32 [#allocation9], 4
      %s36 = int_to_ptr.vmem [resolvable:$true] %s35
      %41 = dma.hbm_to_vmem [thread:$0]  %s34, 32768, %s36, [#allocation10], 512, 512, 32
    $region9: #{tpu_custom_call.1} parent=1 // pred_fallthru
      _
    // Predicated region
    $region10: #{tpu_custom_call.1} parent=1 // pred_check
      _
    $region11: #{tpu_custom_call.1} parent=1 // pred_check_branch
      %43 = sbr.rel (0) target = $region13
    $region12: #{tpu_custom_call.1} parent=1 // pred_region
      %45 = vsyncadd [#allocation10], 0
      %s47 = sshll.u32 %s2, 4
      %s48 = int_to_ptr.hbm [resolvable:$true] %s47
      %s49 = sshll.u32 [#allocation11], 4
      %s50 = int_to_ptr.vmem [resolvable:$true] %s49
      %52 = dma.hbm_to_vmem [thread:$0]  %s48, 128, %s50, [#allocation10]
    $region13: #{tpu_custom_call.1} parent=1 // pred_fallthru
      _
    // Predicated region
    $region14: #{tpu_custom_call.1} parent=1 // pred_check
      _
    $region15: #{tpu_custom_call.1} parent=1 // pred_check_branch
      %54 = sbr.rel (0) target = $region17
    $region16: #{tpu_custom_call.1} parent=1 // pred_region
      %56 = vsyncadd [#allocation13], 0
      %s57 = sshll.u32 %s3, 4
      %s58 = int_to_ptr.hbm [resolvable:$true] %s57
      %s59 = sshll.u32 [#allocation12], 4
      %s60 = int_to_ptr.vmem [resolvable:$true] %s59
      %65 = dma.hbm_to_vmem [thread:$0]  %s58, 512, %s60, [#allocation13], 128, 128, 8
    $region17: #{tpu_custom_call.1} parent=1 // pred_fallthru
      _
    // Predicated region
    $region18: #{tpu_custom_call.1} parent=1 // pred_check
      _
    $region19: #{tpu_custom_call.1} parent=1 // pred_check_branch
      %67 = sbr.rel (0) target = $region21
    $region20: #{tpu_custom_call.1} parent=1 // pred_region
      %69 = vsyncadd [#allocation13], 0
      %s70 = sshll.u32 %s4, 4
      %s71 = int_to_ptr.hbm [resolvable:$true] %s70
      %s72 = sshll.u32 [#allocation14], 4
      %s73 = int_to_ptr.vmem [resolvable:$true] %s72
      %78 = dma.hbm_to_vmem [thread:$0]  %s71, 512, %s73, [#allocation13], 128, 128, 8
    $region21: #{tpu_custom_call.1} parent=1 // pred_fallthru
      _
    // Predicated region
    $region22: #{tpu_custom_call.1} parent=1 // pred_check
      _
    $region23: #{tpu_custom_call.1} parent=1 // pred_check_branch
      %80 = sbr.rel (0) target = $region25
    $region24: #{tpu_custom_call.1} parent=1 // pred_region
      %82 = vsyncadd [#allocation16], 0
      %s83 = sshll.u32 %s5, 4
      %s84 = int_to_ptr.hbm [resolvable:$true] %s83
      %s85 = sshll.u32 [#allocation15], 4
      %s86 = int_to_ptr.vmem [resolvable:$true] %s85
      %91 = dma.hbm_to_vmem [thread:$0]  %s84, 16384, %s86, [#allocation16], 256, 256, 16
    $region25: #{tpu_custom_call.1} parent=1 // pred_fallthru
      _
    // Predicated region
    $region26: #{tpu_custom_call.1} parent=1 // pred_check
      _
    $region27: #{tpu_custom_call.1} parent=1 // pred_check_branch
      %93 = sbr.rel (0) target = $region29
    $region28: #{tpu_custom_call.1} parent=1 // pred_region
      %95 = dma.done [#allocation7], 1024
    $region29: #{tpu_custom_call.1} parent=1 // pred_fallthru
      _
    // Predicated region
    $region30: #{tpu_custom_call.1} parent=1 // pred_check
      _
    $region31: #{tpu_custom_call.1} parent=1 // pred_check_branch
      %97 = sbr.rel (0) target = $region33
    $region32: #{tpu_custom_call.1} parent=1 // pred_region
      %99 = dma.done [#allocation10], 32768
    $region33: #{tpu_custom_call.1} parent=1 // pred_fallthru
      _
    // Predicated region
    $region34: #{tpu_custom_call.1} parent=1 // pred_check
      _
    $region35: #{tpu_custom_call.1} parent=1 // pred_check_branch
      %101 = sbr.rel (0) target = $region37
    $region36: #{tpu_custom_call.1} parent=1 // pred_region
      %103 = dma.done [#allocation10], 128
    $region37: #{tpu_custom_call.1} parent=1 // pred_fallthru
      _
    // Predicated region
    $region38: #{tpu_custom_call.1} parent=1 // pred_check
      _
    $region39: #{tpu_custom_call.1} parent=1 // pred_check_branch
      %105 = sbr.rel (0) target = $region41
    $region40: #{tpu_custom_call.1} parent=1 // pred_region
      %107 = dma.done [#allocation13], 512
    $region41: #{tpu_custom_call.1} parent=1 // pred_fallthru
      _
    // Predicated region
    $region42: #{tpu_custom_call.1} parent=1 // pred_check
      _
    $region43: #{tpu_custom_call.1} parent=1 // pred_check_branch
      %109 = sbr.rel (0) target = $region45
    $region44: #{tpu_custom_call.1} parent=1 // pred_region
      %111 = dma.done [#allocation13], 512
    $region45: #{tpu_custom_call.1} parent=1 // pred_fallthru
      _
    // Predicated region
    $region46: #{tpu_custom_call.1} parent=1 // pred_check
      _
    $region47: #{tpu_custom_call.1} parent=1 // pred_check_branch
      %113 = sbr.rel (0) target = $region49
    $region48: #{tpu_custom_call.1} parent=1 // pred_region
      %115 = dma.done [#allocation16], 16384
    $region49: #{tpu_custom_call.1} parent=1 // pred_fallthru
      _
    %v117 = vld [vmem:[#allocation6] sm:$0xff]
    %v118 = vld [vmem:[#allocation6 + $0x8] sm:$0xff]
    %v119 = vld [vmem:[#allocation6 + $0x10] sm:$0xff]
    %v120 = vld [vmem:[#allocation6 + $0x18] sm:$0xff]
    %v121 = vld [vmem:[#allocation6 + $0x20] sm:$0xff]
    %v122 = vld [vmem:[#allocation6 + $0x28] sm:$0xff]
    %v123 = vld [vmem:[#allocation6 + $0x30] sm:$0xff]
    %v124 = vld [vmem:[#allocation6 + $0x38] sm:$0xff]
    %v125 = vld [vmem:[#allocation9] sm:$0xff]
    %v126 = vld [vmem:[#allocation9 + $0x8] sm:$0xff]
    %v127 = vld [vmem:[#allocation9 + $0x10] sm:$0xff]
    %v128 = vld [vmem:[#allocation9 + $0x18] sm:$0xff]
    %v129 = vld [vmem:[#allocation9 + $0x20] sm:$0xff]
    %v130 = vld [vmem:[#allocation9 + $0x28] sm:$0xff]
    %v131 = vld [vmem:[#allocation9 + $0x30] sm:$0xff]
    %v132 = vld [vmem:[#allocation9 + $0x38] sm:$0xff]
    %v133 = vld [vmem:[#allocation9 + $0x40] sm:$0xff]
    %v134 = vld [vmem:[#allocation9 + $0x48] sm:$0xff]
    %v135 = vld [vmem:[#allocation9 + $0x50] sm:$0xff]
    %v136 = vld [vmem:[#allocation9 + $0x58] sm:$0xff]
    %v137 = vld [vmem:[#allocation9 + $0x60] sm:$0xff]
    %v138 = vld [vmem:[#allocation9 + $0x68] sm:$0xff]
    %v139 = vld [vmem:[#allocation9 + $0x70] sm:$0xff]
    %v140 = vld [vmem:[#allocation9 + $0x78] sm:$0xff]
    %v141 = vld [vmem:[#allocation9 + $0x80] sm:$0xff]
    %v142 = vld [vmem:[#allocation9 + $0x88] sm:$0xff]
    %v143 = vld [vmem:[#allocation9 + $0x90] sm:$0xff]
    %v144 = vld [vmem:[#allocation9 + $0x98] sm:$0xff]
    %v145 = vld [vmem:[#allocation9 + $0xa0] sm:$0xff]
    %v146 = vld [vmem:[#allocation9 + $0xa8] sm:$0xff]
    %v147 = vld [vmem:[#allocation9 + $0xb0] sm:$0xff]
    %v148 = vld [vmem:[#allocation9 + $0xb8] sm:$0xff]
    %v149 = vld [vmem:[#allocation9 + $0xc0] sm:$0xff]
    %v150 = vld [vmem:[#allocation9 + $0xc8] sm:$0xff]
    %v151 = vld [vmem:[#allocation9 + $0xd0] sm:$0xff]
    %v152 = vld [vmem:[#allocation9 + $0xd8] sm:$0xff]
    %v153 = vld [vmem:[#allocation9 + $0xe0] sm:$0xff]
    %v154 = vld [vmem:[#allocation9 + $0xe8] sm:$0xff]
    %v155 = vld [vmem:[#allocation9 + $0xf0] sm:$0xff]
    %v156 = vld [vmem:[#allocation9 + $0xf8] sm:$0xff]
    %v157 = vld [vmem:[#allocation9 + $0x100] sm:$0xff]
    %v158 = vld [vmem:[#allocation9 + $0x108] sm:$0xff]
    %v159 = vld [vmem:[#allocation9 + $0x110] sm:$0xff]
    %v160 = vld [vmem:[#allocation9 + $0x118] sm:$0xff]
    %v161 = vld [vmem:[#allocation9 + $0x120] sm:$0xff]
    %v162 = vld [vmem:[#allocation9 + $0x128] sm:$0xff]
    %v163 = vld [vmem:[#allocation9 + $0x130] sm:$0xff]
    %v164 = vld [vmem:[#allocation9 + $0x138] sm:$0xff]
    %v165 = vld [vmem:[#allocation9 + $0x140] sm:$0xff]
    %v166 = vld [vmem:[#allocation9 + $0x148] sm:$0xff]
    %v167 = vld [vmem:[#allocation9 + $0x150] sm:$0xff]
    %v168 = vld [vmem:[#allocation9 + $0x158] sm:$0xff]
    %v169 = vld [vmem:[#allocation9 + $0x160] sm:$0xff]
    %v170 = vld [vmem:[#allocation9 + $0x168] sm:$0xff]
    %v171 = vld [vmem:[#allocation9 + $0x170] sm:$0xff]
    %v172 = vld [vmem:[#allocation9 + $0x178] sm:$0xff]
    %v173 = vld [vmem:[#allocation9 + $0x180] sm:$0xff]
    %v174 = vld [vmem:[#allocation9 + $0x188] sm:$0xff]
    %v175 = vld [vmem:[#allocation9 + $0x190] sm:$0xff]
    %v176 = vld [vmem:[#allocation9 + $0x198] sm:$0xff]
    %v177 = vld [vmem:[#allocation9 + $0x1a0] sm:$0xff]
    %v178 = vld [vmem:[#allocation9 + $0x1a8] sm:$0xff]
    %v179 = vld [vmem:[#allocation9 + $0x1b0] sm:$0xff]
    %v180 = vld [vmem:[#allocation9 + $0x1b8] sm:$0xff]
    %v181 = vld [vmem:[#allocation9 + $0x1c0] sm:$0xff]
    %v182 = vld [vmem:[#allocation9 + $0x1c8] sm:$0xff]
    %v183 = vld [vmem:[#allocation9 + $0x1d0] sm:$0xff]
    %v184 = vld [vmem:[#allocation9 + $0x1d8] sm:$0xff]
    %v185 = vld [vmem:[#allocation9 + $0x1e0] sm:$0xff]
    %v186 = vld [vmem:[#allocation9 + $0x1e8] sm:$0xff]
    %v187 = vld [vmem:[#allocation9 + $0x1f0] sm:$0xff]
    %v188 = vld [vmem:[#allocation9 + $0x1f8] sm:$0xff]
    %v189 = vld [vmem:[#allocation9 + $0x200] sm:$0xff]
    %v190 = vld [vmem:[#allocation9 + $0x208] sm:$0xff]
    %v191 = vld [vmem:[#allocation9 + $0x210] sm:$0xff]
    %v192 = vld [vmem:[#allocation9 + $0x218] sm:$0xff]
    %v193 = vld [vmem:[#allocation9 + $0x220] sm:$0xff]
    %v194 = vld [vmem:[#allocation9 + $0x228] sm:$0xff]
    %v195 = vld [vmem:[#allocation9 + $0x230] sm:$0xff]
    %v196 = vld [vmem:[#allocation9 + $0x238] sm:$0xff]
    %v197 = vld [vmem:[#allocation9 + $0x240] sm:$0xff]
    %v198 = vld [vmem:[#allocation9 + $0x248] sm:$0xff]
    %v199 = vld [vmem:[#allocation9 + $0x250] sm:$0xff]
    %v200 = vld [vmem:[#allocation9 + $0x258] sm:$0xff]
    %v201 = vld [vmem:[#allocation9 + $0x260] sm:$0xff]
    %v202 = vld [vmem:[#allocation9 + $0x268] sm:$0xff]
    %v203 = vld [vmem:[#allocation9 + $0x270] sm:$0xff]
    %v204 = vld [vmem:[#allocation9 + $0x278] sm:$0xff]
    %v205 = vld [vmem:[#allocation9 + $0x280] sm:$0xff]
    %v206 = vld [vmem:[#allocation9 + $0x288] sm:$0xff]
    %v207 = vld [vmem:[#allocation9 + $0x290] sm:$0xff]
    %v208 = vld [vmem:[#allocation9 + $0x298] sm:$0xff]
    %v209 = vld [vmem:[#allocation9 + $0x2a0] sm:$0xff]
    %v210 = vld [vmem:[#allocation9 + $0x2a8] sm:$0xff]
    %v211 = vld [vmem:[#allocation9 + $0x2b0] sm:$0xff]
    %v212 = vld [vmem:[#allocation9 + $0x2b8] sm:$0xff]
    %v213 = vld [vmem:[#allocation9 + $0x2c0] sm:$0xff]
    %v214 = vld [vmem:[#allocation9 + $0x2c8] sm:$0xff]
    %v215 = vld [vmem:[#allocation9 + $0x2d0] sm:$0xff]
    %v216 = vld [vmem:[#allocation9 + $0x2d8] sm:$0xff]
    %v217 = vld [vmem:[#allocation9 + $0x2e0] sm:$0xff]
    %v218 = vld [vmem:[#allocation9 + $0x2e8] sm:$0xff]
    %v219 = vld [vmem:[#allocation9 + $0x2f0] sm:$0xff]
    %v220 = vld [vmem:[#allocation9 + $0x2f8] sm:$0xff]
    %v221 = vld [vmem:[#allocation9 + $0x300] sm:$0xff]
    %v222 = vld [vmem:[#allocation9 + $0x308] sm:$0xff]
    %v223 = vld [vmem:[#allocation9 + $0x310] sm:$0xff]
    %v224 = vld [vmem:[#allocation9 + $0x318] sm:$0xff]
    %v225 = vld [vmem:[#allocation9 + $0x320] sm:$0xff]
    %v226 = vld [vmem:[#allocation9 + $0x328] sm:$0xff]
    %v227 = vld [vmem:[#allocation9 + $0x330] sm:$0xff]
    %v228 = vld [vmem:[#allocation9 + $0x338] sm:$0xff]
    %v229 = vld [vmem:[#allocation9 + $0x340] sm:$0xff]
    %v230 = vld [vmem:[#allocation9 + $0x348] sm:$0xff]
    %v231 = vld [vmem:[#allocation9 + $0x350] sm:$0xff]
    %v232 = vld [vmem:[#allocation9 + $0x358] sm:$0xff]
    %v233 = vld [vmem:[#allocation9 + $0x360] sm:$0xff]
    %v234 = vld [vmem:[#allocation9 + $0x368] sm:$0xff]
    %v235 = vld [vmem:[#allocation9 + $0x370] sm:$0xff]
    %v236 = vld [vmem:[#allocation9 + $0x378] sm:$0xff]
    %v237 = vld [vmem:[#allocation9 + $0x380] sm:$0xff]
    %v238 = vld [vmem:[#allocation9 + $0x388] sm:$0xff]
    %v239 = vld [vmem:[#allocation9 + $0x390] sm:$0xff]
    %v240 = vld [vmem:[#allocation9 + $0x398] sm:$0xff]
    %v241 = vld [vmem:[#allocation9 + $0x3a0] sm:$0xff]
    %v242 = vld [vmem:[#allocation9 + $0x3a8] sm:$0xff]
    %v243 = vld [vmem:[#allocation9 + $0x3b0] sm:$0xff]
    %v244 = vld [vmem:[#allocation9 + $0x3b8] sm:$0xff]
    %v245 = vld [vmem:[#allocation9 + $0x3c0] sm:$0xff]
    %v246 = vld [vmem:[#allocation9 + $0x3c8] sm:$0xff]
    %v247 = vld [vmem:[#allocation9 + $0x3d0] sm:$0xff]
    %v248 = vld [vmem:[#allocation9 + $0x3d8] sm:$0xff]
    %v249 = vld [vmem:[#allocation9 + $0x3e0] sm:$0xff]
    %v250 = vld [vmem:[#allocation9 + $0x3e8] sm:$0xff]
    %v251 = vld [vmem:[#allocation9 + $0x3f0] sm:$0xff]
    %v252 = vld [vmem:[#allocation9 + $0x3f8] sm:$0xff]
    %v253 = vld [vmem:[#allocation9 + $0x400] sm:$0xff]
    %v254 = vld [vmem:[#allocation9 + $0x408] sm:$0xff]
    %v255 = vld [vmem:[#allocation9 + $0x410] sm:$0xff]
    %v256 = vld [vmem:[#allocation9 + $0x418] sm:$0xff]
    %v257 = vld [vmem:[#allocation9 + $0x420] sm:$0xff]
    %v258 = vld [vmem:[#allocation9 + $0x428] sm:$0xff]
    %v259 = vld [vmem:[#allocation9 + $0x430] sm:$0xff]
    %v260 = vld [vmem:[#allocation9 + $0x438] sm:$0xff]
    %v261 = vld [vmem:[#allocation9 + $0x440] sm:$0xff]
    %v262 = vld [vmem:[#allocation9 + $0x448] sm:$0xff]
    %v263 = vld [vmem:[#allocation9 + $0x450] sm:$0xff]
    %v264 = vld [vmem:[#allocation9 + $0x458] sm:$0xff]
    %v265 = vld [vmem:[#allocation9 + $0x460] sm:$0xff]
    %v266 = vld [vmem:[#allocation9 + $0x468] sm:$0xff]
    %v267 = vld [vmem:[#allocation9 + $0x470] sm:$0xff]
    %v268 = vld [vmem:[#allocation9 + $0x478] sm:$0xff]
    %v269 = vld [vmem:[#allocation9 + $0x480] sm:$0xff]
    %v270 = vld [vmem:[#allocation9 + $0x488] sm:$0xff]
    %v271 = vld [vmem:[#allocation9 + $0x490] sm:$0xff]
    %v272 = vld [vmem:[#allocation9 + $0x498] sm:$0xff]
    %v273 = vld [vmem:[#allocation9 + $0x4a0] sm:$0xff]
    %v274 = vld [vmem:[#allocation9 + $0x4a8] sm:$0xff]
    %v275 = vld [vmem:[#allocation9 + $0x4b0] sm:$0xff]
    %v276 = vld [vmem:[#allocation9 + $0x4b8] sm:$0xff]
    %v277 = vld [vmem:[#allocation9 + $0x4c0] sm:$0xff]
    %v278 = vld [vmem:[#allocation9 + $0x4c8] sm:$0xff]
    %v279 = vld [vmem:[#allocation9 + $0x4d0] sm:$0xff]
    %v280 = vld [vmem:[#allocation9 + $0x4d8] sm:$0xff]
    %v281 = vld [vmem:[#allocation9 + $0x4e0] sm:$0xff]
    %v282 = vld [vmem:[#allocation9 + $0x4e8] sm:$0xff]
    %v283 = vld [vmem:[#allocation9 + $0x4f0] sm:$0xff]
    %v284 = vld [vmem:[#allocation9 + $0x4f8] sm:$0xff]
    %v285 = vld [vmem:[#allocation9 + $0x500] sm:$0xff]
    %v286 = vld [vmem:[#allocation9 + $0x508] sm:$0xff]
    %v287 = vld [vmem:[#allocation9 + $0x510] sm:$0xff]
    %v288 = vld [vmem:[#allocation9 + $0x518] sm:$0xff]
    %v289 = vld [vmem:[#allocation9 + $0x520] sm:$0xff]
    %v290 = vld [vmem:[#allocation9 + $0x528] sm:$0xff]
    %v291 = vld [vmem:[#allocation9 + $0x530] sm:$0xff]
    %v292 = vld [vmem:[#allocation9 + $0x538] sm:$0xff]
    %v293 = vld [vmem:[#allocation9 + $0x540] sm:$0xff]
    %v294 = vld [vmem:[#allocation9 + $0x548] sm:$0xff]
    %v295 = vld [vmem:[#allocation9 + $0x550] sm:$0xff]
    %v296 = vld [vmem:[#allocation9 + $0x558] sm:$0xff]
    %v297 = vld [vmem:[#allocation9 + $0x560] sm:$0xff]
    %v298 = vld [vmem:[#allocation9 + $0x568] sm:$0xff]
    %v299 = vld [vmem:[#allocation9 + $0x570] sm:$0xff]
    %v300 = vld [vmem:[#allocation9 + $0x578] sm:$0xff]
    %v301 = vld [vmem:[#allocation9 + $0x580] sm:$0xff]
    %v302 = vld [vmem:[#allocation9 + $0x588] sm:$0xff]
    %v303 = vld [vmem:[#allocation9 + $0x590] sm:$0xff]
    %v304 = vld [vmem:[#allocation9 + $0x598] sm:$0xff]
    %v305 = vld [vmem:[#allocation9 + $0x5a0] sm:$0xff]
    %v306 = vld [vmem:[#allocation9 + $0x5a8] sm:$0xff]
    %v307 = vld [vmem:[#allocation9 + $0x5b0] sm:$0xff]
    %v308 = vld [vmem:[#allocation9 + $0x5b8] sm:$0xff]
    %v309 = vld [vmem:[#allocation9 + $0x5c0] sm:$0xff]
    %v310 = vld [vmem:[#allocation9 + $0x5c8] sm:$0xff]
    %v311 = vld [vmem:[#allocation9 + $0x5d0] sm:$0xff]
    %v312 = vld [vmem:[#allocation9 + $0x5d8] sm:$0xff]
    %v313 = vld [vmem:[#allocation9 + $0x5e0] sm:$0xff]
    %v314 = vld [vmem:[#allocation9 + $0x5e8] sm:$0xff]
    %v315 = vld [vmem:[#allocation9 + $0x5f0] sm:$0xff]
    %v316 = vld [vmem:[#allocation9 + $0x5f8] sm:$0xff]
    %v317 = vld [vmem:[#allocation9 + $0x600] sm:$0xff]
    %v318 = vld [vmem:[#allocation9 + $0x608] sm:$0xff]
    %v319 = vld [vmem:[#allocation9 + $0x610] sm:$0xff]
    %v320 = vld [vmem:[#allocation9 + $0x618] sm:$0xff]
    %v321 = vld [vmem:[#allocation9 + $0x620] sm:$0xff]
    %v322 = vld [vmem:[#allocation9 + $0x628] sm:$0xff]
    %v323 = vld [vmem:[#allocation9 + $0x630] sm:$0xff]
    %v324 = vld [vmem:[#allocation9 + $0x638] sm:$0xff]
    %v325 = vld [vmem:[#allocation9 + $0x640] sm:$0xff]
    %v326 = vld [vmem:[#allocation9 + $0x648] sm:$0xff]
    %v327 = vld [vmem:[#allocation9 + $0x650] sm:$0xff]
    %v328 = vld [vmem:[#allocation9 + $0x658] sm:$0xff]
    %v329 = vld [vmem:[#allocation9 + $0x660] sm:$0xff]
    %v330 = vld [vmem:[#allocation9 + $0x668] sm:$0xff]
    %v331 = vld [vmem:[#allocation9 + $0x670] sm:$0xff]
    %v332 = vld [vmem:[#allocation9 + $0x678] sm:$0xff]
    %v333 = vld [vmem:[#allocation9 + $0x680] sm:$0xff]
    %v334 = vld [vmem:[#allocation9 + $0x688] sm:$0xff]
    %v335 = vld [vmem:[#allocation9 + $0x690] sm:$0xff]
    %v336 = vld [vmem:[#allocation9 + $0x698] sm:$0xff]
    %v337 = vld [vmem:[#allocation9 + $0x6a0] sm:$0xff]
    %v338 = vld [vmem:[#allocation9 + $0x6a8] sm:$0xff]
    %v339 = vld [vmem:[#allocation9 + $0x6b0] sm:$0xff]
    %v340 = vld [vmem:[#allocation9 + $0x6b8] sm:$0xff]
    %v341 = vld [vmem:[#allocation9 + $0x6c0] sm:$0xff]
    %v342 = vld [vmem:[#allocation9 + $0x6c8] sm:$0xff]
    %v343 = vld [vmem:[#allocation9 + $0x6d0] sm:$0xff]
    %v344 = vld [vmem:[#allocation9 + $0x6d8] sm:$0xff]
    %v345 = vld [vmem:[#allocation9 + $0x6e0] sm:$0xff]
    %v346 = vld [vmem:[#allocation9 + $0x6e8] sm:$0xff]
    %v347 = vld [vmem:[#allocation9 + $0x6f0] sm:$0xff]
    %v348 = vld [vmem:[#allocation9 + $0x6f8] sm:$0xff]
    %v349 = vld [vmem:[#allocation9 + $0x700] sm:$0xff]
    %v350 = vld [vmem:[#allocation9 + $0x708] sm:$0xff]
    %v351 = vld [vmem:[#allocation9 + $0x710] sm:$0xff]
    %v352 = vld [vmem:[#allocation9 + $0x718] sm:$0xff]
    %v353 = vld [vmem:[#allocation9 + $0x720] sm:$0xff]
    %v354 = vld [vmem:[#allocation9 + $0x728] sm:$0xff]
    %v355 = vld [vmem:[#allocation9 + $0x730] sm:$0xff]
    %v356 = vld [vmem:[#allocation9 + $0x738] sm:$0xff]
    %v357 = vld [vmem:[#allocation9 + $0x740] sm:$0xff]
    %v358 = vld [vmem:[#allocation9 + $0x748] sm:$0xff]
    %v359 = vld [vmem:[#allocation9 + $0x750] sm:$0xff]
    %v360 = vld [vmem:[#allocation9 + $0x758] sm:$0xff]
    %v361 = vld [vmem:[#allocation9 + $0x760] sm:$0xff]
    %v362 = vld [vmem:[#allocation9 + $0x768] sm:$0xff]
    %v363 = vld [vmem:[#allocation9 + $0x770] sm:$0xff]
    %v364 = vld [vmem:[#allocation9 + $0x778] sm:$0xff]
    %v365 = vld [vmem:[#allocation9 + $0x780] sm:$0xff]
    %v366 = vld [vmem:[#allocation9 + $0x788] sm:$0xff]
    %v367 = vld [vmem:[#allocation9 + $0x790] sm:$0xff]
    %v368 = vld [vmem:[#allocation9 + $0x798] sm:$0xff]
    %v369 = vld [vmem:[#allocation9 + $0x7a0] sm:$0xff]
    %v370 = vld [vmem:[#allocation9 + $0x7a8] sm:$0xff]
    %v371 = vld [vmem:[#allocation9 + $0x7b0] sm:$0xff]
    %v372 = vld [vmem:[#allocation9 + $0x7b8] sm:$0xff]
    %v373 = vld [vmem:[#allocation9 + $0x7c0] sm:$0xff]
    %v374 = vld [vmem:[#allocation9 + $0x7c8] sm:$0xff]
    %v375 = vld [vmem:[#allocation9 + $0x7d0] sm:$0xff]
    %v376 = vld [vmem:[#allocation9 + $0x7d8] sm:$0xff]
    %v377 = vld [vmem:[#allocation9 + $0x7e0] sm:$0xff]
    %v378 = vld [vmem:[#allocation9 + $0x7e8] sm:$0xff]
    %v379 = vld [vmem:[#allocation9 + $0x7f0] sm:$0xff]
    %v380 = vld [vmem:[#allocation9 + $0x7f8] sm:$0xff]
    %v381 = vld [vmem:[#allocation11] sm:$0xff]
    %v383 = vperm.slane %v381, 0
    %v384 = vperm.slane %v381, 1
    %v385 = vperm.slane %v381, 2
    %v386 = vperm.slane %v381, 3
    %v387 = vperm.slane %v381, 4
    %v388 = vperm.slane %v381, 5
    %v389 = vperm.slane %v381, 6
    %v390 = vperm.slane %v381, 7
    %v407 = vunpack.c.l.b16 %v117
    %v408 = vunpack.c.h.b16 %v117
    %v409 = vunpack.c.l.b16 %v118
    %v410 = vunpack.c.h.b16 %v118
    %v411 = vunpack.c.l.b16 %v119
    %v412 = vunpack.c.h.b16 %v119
    %v413 = vunpack.c.l.b16 %v120
    %v414 = vunpack.c.h.b16 %v120
    %v415 = vunpack.c.l.b16 %v121
    %v416 = vunpack.c.h.b16 %v121
    %v417 = vunpack.c.l.b16 %v122
    %v418 = vunpack.c.h.b16 %v122
    %v419 = vunpack.c.l.b16 %v123
    %v420 = vunpack.c.h.b16 %v123
    %v421 = vunpack.c.l.b16 %v124
    %v422 = vunpack.c.h.b16 %v124
    %v423 = vpack.c.b16 %v411, %v407
    %v424 = vpack.c.b16 %v412, %v408
    %v425 = vpack.c.b16 %v413, %v409
    %v426 = vpack.c.b16 %v414, %v410
    %v427 = vpack.c.b16 %v419, %v415
    %v428 = vpack.c.b16 %v420, %v416
    %v429 = vpack.c.b16 %v421, %v417
    %v430 = vpack.c.b16 %v422, %v418
    %v695 = vunpack.c.l.b16 %v125
    %v696 = vunpack.c.h.b16 %v125
    %v697 = vunpack.c.l.b16 %v126
    %v698 = vunpack.c.h.b16 %v126
    %v699 = vunpack.c.l.b16 %v127
    %v700 = vunpack.c.h.b16 %v127
    %v701 = vunpack.c.l.b16 %v128
    %v702 = vunpack.c.h.b16 %v128
    %v703 = vunpack.c.l.b16 %v129
    %v704 = vunpack.c.h.b16 %v129
    %v705 = vunpack.c.l.b16 %v130
    %v706 = vunpack.c.h.b16 %v130
    %v707 = vunpack.c.l.b16 %v131
    %v708 = vunpack.c.h.b16 %v131
    %v709 = vunpack.c.l.b16 %v132
    %v710 = vunpack.c.h.b16 %v132
    %v711 = vunpack.c.l.b16 %v133
    %v712 = vunpack.c.h.b16 %v133
    %v713 = vunpack.c.l.b16 %v134
    %v714 = vunpack.c.h.b16 %v134
    %v715 = vunpack.c.l.b16 %v135
    %v716 = vunpack.c.h.b16 %v135
    %v717 = vunpack.c.l.b16 %v136
    %v718 = vunpack.c.h.b16 %v136
    %v719 = vunpack.c.l.b16 %v137
    %v720 = vunpack.c.h.b16 %v137
    %v721 = vunpack.c.l.b16 %v138
    %v722 = vunpack.c.h.b16 %v138
    %v723 = vunpack.c.l.b16 %v139
    %v724 = vunpack.c.h.b16 %v139
    %v725 = vunpack.c.l.b16 %v140
    %v726 = vunpack.c.h.b16 %v140
    %v727 = vunpack.c.l.b16 %v141
    %v728 = vunpack.c.h.b16 %v141
    %v729 = vunpack.c.l.b16 %v142
    %v730 = vunpack.c.h.b16 %v142
    %v731 = vunpack.c.l.b16 %v143
    %v732 = vunpack.c.h.b16 %v143
    %v733 = vunpack.c.l.b16 %v144
    %v734 = vunpack.c.h.b16 %v144
    %v735 = vunpack.c.l.b16 %v145
    %v736 = vunpack.c.h.b16 %v145
    %v737 = vunpack.c.l.b16 %v146
    %v738 = vunpack.c.h.b16 %v146
    %v739 = vunpack.c.l.b16 %v147
    %v740 = vunpack.c.h.b16 %v147
    %v741 = vunpack.c.l.b16 %v148
    %v742 = vunpack.c.h.b16 %v148
    %v743 = vunpack.c.l.b16 %v149
    %v744 = vunpack.c.h.b16 %v149
    %v745 = vunpack.c.l.b16 %v150
    %v746 = vunpack.c.h.b16 %v150
    %v747 = vunpack.c.l.b16 %v151
    %v748 = vunpack.c.h.b16 %v151
    %v749 = vunpack.c.l.b16 %v152
    %v750 = vunpack.c.h.b16 %v152
    %v751 = vunpack.c.l.b16 %v153
    %v752 = vunpack.c.h.b16 %v153
    %v753 = vunpack.c.l.b16 %v154
    %v754 = vunpack.c.h.b16 %v154
    %v755 = vunpack.c.l.b16 %v155
    %v756 = vunpack.c.h.b16 %v155
    %v757 = vunpack.c.l.b16 %v156
    %v758 = vunpack.c.h.b16 %v156
    %v759 = vunpack.c.l.b16 %v157
    %v760 = vunpack.c.h.b16 %v157
    %v761 = vunpack.c.l.b16 %v158
    %v762 = vunpack.c.h.b16 %v158
    %v763 = vunpack.c.l.b16 %v159
    %v764 = vunpack.c.h.b16 %v159
    %v765 = vunpack.c.l.b16 %v160
    %v766 = vunpack.c.h.b16 %v160
    %v767 = vunpack.c.l.b16 %v161
    %v768 = vunpack.c.h.b16 %v161
    %v769 = vunpack.c.l.b16 %v162
    %v770 = vunpack.c.h.b16 %v162
    %v771 = vunpack.c.l.b16 %v163
    %v772 = vunpack.c.h.b16 %v163
    %v773 = vunpack.c.l.b16 %v164
    %v774 = vunpack.c.h.b16 %v164
    %v775 = vunpack.c.l.b16 %v165
    %v776 = vunpack.c.h.b16 %v165
    %v777 = vunpack.c.l.b16 %v166
    %v778 = vunpack.c.h.b16 %v166
    %v779 = vunpack.c.l.b16 %v167
    %v780 = vunpack.c.h.b16 %v167
    %v781 = vunpack.c.l.b16 %v168
    %v782 = vunpack.c.h.b16 %v168
    %v783 = vunpack.c.l.b16 %v169
    %v784 = vunpack.c.h.b16 %v169
    %v785 = vunpack.c.l.b16 %v170
    %v786 = vunpack.c.h.b16 %v170
    %v787 = vunpack.c.l.b16 %v171
    %v788 = vunpack.c.h.b16 %v171
    %v789 = vunpack.c.l.b16 %v172
    %v790 = vunpack.c.h.b16 %v172
    %v791 = vunpack.c.l.b16 %v173
    %v792 = vunpack.c.h.b16 %v173
    %v793 = vunpack.c.l.b16 %v174
    %v794 = vunpack.c.h.b16 %v174
    %v795 = vunpack.c.l.b16 %v175
    %v796 = vunpack.c.h.b16 %v175
    %v797 = vunpack.c.l.b16 %v176
    %v798 = vunpack.c.h.b16 %v176
    %v799 = vunpack.c.l.b16 %v177
    %v800 = vunpack.c.h.b16 %v177
    %v801 = vunpack.c.l.b16 %v178
    %v802 = vunpack.c.h.b16 %v178
    %v803 = vunpack.c.l.b16 %v179
    %v804 = vunpack.c.h.b16 %v179
    %v805 = vunpack.c.l.b16 %v180
    %v806 = vunpack.c.h.b16 %v180
    %v807 = vunpack.c.l.b16 %v181
    %v808 = vunpack.c.h.b16 %v181
    %v809 = vunpack.c.l.b16 %v182
    %v810 = vunpack.c.h.b16 %v182
    %v811 = vunpack.c.l.b16 %v183
    %v812 = vunpack.c.h.b16 %v183
    %v813 = vunpack.c.l.b16 %v184
    %v814 = vunpack.c.h.b16 %v184
    %v815 = vunpack.c.l.b16 %v185
    %v816 = vunpack.c.h.b16 %v185
    %v817 = vunpack.c.l.b16 %v186
    %v818 = vunpack.c.h.b16 %v186
    %v819 = vunpack.c.l.b16 %v187
    %v820 = vunpack.c.h.b16 %v187
    %v821 = vunpack.c.l.b16 %v188
    %v822 = vunpack.c.h.b16 %v188
    %v823 = vunpack.c.l.b16 %v189
    %v824 = vunpack.c.h.b16 %v189
    %v825 = vunpack.c.l.b16 %v190
    %v826 = vunpack.c.h.b16 %v190
    %v827 = vunpack.c.l.b16 %v191
    %v828 = vunpack.c.h.b16 %v191
    %v829 = vunpack.c.l.b16 %v192
    %v830 = vunpack.c.h.b16 %v192
    %v831 = vunpack.c.l.b16 %v193
    %v832 = vunpack.c.h.b16 %v193
    %v833 = vunpack.c.l.b16 %v194
    %v834 = vunpack.c.h.b16 %v194
    %v835 = vunpack.c.l.b16 %v195
    %v836 = vunpack.c.h.b16 %v195
    %v837 = vunpack.c.l.b16 %v196
    %v838 = vunpack.c.h.b16 %v196
    %v839 = vunpack.c.l.b16 %v197
    %v840 = vunpack.c.h.b16 %v197
    %v841 = vunpack.c.l.b16 %v198
    %v842 = vunpack.c.h.b16 %v198
    %v843 = vunpack.c.l.b16 %v199
    %v844 = vunpack.c.h.b16 %v199
    %v845 = vunpack.c.l.b16 %v200
    %v846 = vunpack.c.h.b16 %v200
    %v847 = vunpack.c.l.b16 %v201
    %v848 = vunpack.c.h.b16 %v201
    %v849 = vunpack.c.l.b16 %v202
    %v850 = vunpack.c.h.b16 %v202
    %v851 = vunpack.c.l.b16 %v203
    %v852 = vunpack.c.h.b16 %v203
    %v853 = vunpack.c.l.b16 %v204
    %v854 = vunpack.c.h.b16 %v204
    %v855 = vunpack.c.l.b16 %v205
    %v856 = vunpack.c.h.b16 %v205
    %v857 = vunpack.c.l.b16 %v206
    %v858 = vunpack.c.h.b16 %v206
    %v859 = vunpack.c.l.b16 %v207
    %v860 = vunpack.c.h.b16 %v207
    %v861 = vunpack.c.l.b16 %v208
    %v862 = vunpack.c.h.b16 %v208
    %v863 = vunpack.c.l.b16 %v209
    %v864 = vunpack.c.h.b16 %v209
    %v865 = vunpack.c.l.b16 %v210
    %v866 = vunpack.c.h.b16 %v210
    %v867 = vunpack.c.l.b16 %v211
    %v868 = vunpack.c.h.b16 %v211
    %v869 = vunpack.c.l.b16 %v212
    %v870 = vunpack.c.h.b16 %v212
    %v871 = vunpack.c.l.b16 %v213
    %v872 = vunpack.c.h.b16 %v213
    %v873 = vunpack.c.l.b16 %v214
    %v874 = vunpack.c.h.b16 %v214
    %v875 = vunpack.c.l.b16 %v215
    %v876 = vunpack.c.h.b16 %v215
    %v877 = vunpack.c.l.b16 %v216
    %v878 = vunpack.c.h.b16 %v216
    %v879 = vunpack.c.l.b16 %v217
    %v880 = vunpack.c.h.b16 %v217
    %v881 = vunpack.c.l.b16 %v218
    %v882 = vunpack.c.h.b16 %v218
    %v883 = vunpack.c.l.b16 %v219
    %v884 = vunpack.c.h.b16 %v219
    %v885 = vunpack.c.l.b16 %v220
    %v886 = vunpack.c.h.b16 %v220
    %v887 = vunpack.c.l.b16 %v221
    %v888 = vunpack.c.h.b16 %v221
    %v889 = vunpack.c.l.b16 %v222
    %v890 = vunpack.c.h.b16 %v222
    %v891 = vunpack.c.l.b16 %v223
    %v892 = vunpack.c.h.b16 %v223
    %v893 = vunpack.c.l.b16 %v224
    %v894 = vunpack.c.h.b16 %v224
    %v895 = vunpack.c.l.b16 %v225
    %v896 = vunpack.c.h.b16 %v225
    %v897 = vunpack.c.l.b16 %v226
    %v898 = vunpack.c.h.b16 %v226
    %v899 = vunpack.c.l.b16 %v227
    %v900 = vunpack.c.h.b16 %v227
    %v901 = vunpack.c.l.b16 %v228
    %v902 = vunpack.c.h.b16 %v228
    %v903 = vunpack.c.l.b16 %v229
    %v904 = vunpack.c.h.b16 %v229
    %v905 = vunpack.c.l.b16 %v230
    %v906 = vunpack.c.h.b16 %v230
    %v907 = vunpack.c.l.b16 %v231
    %v908 = vunpack.c.h.b16 %v231
    %v909 = vunpack.c.l.b16 %v232
    %v910 = vunpack.c.h.b16 %v232
    %v911 = vunpack.c.l.b16 %v233
    %v912 = vunpack.c.h.b16 %v233
    %v913 = vunpack.c.l.b16 %v234
    %v914 = vunpack.c.h.b16 %v234
    %v915 = vunpack.c.l.b16 %v235
    %v916 = vunpack.c.h.b16 %v235
    %v917 = vunpack.c.l.b16 %v236
    %v918 = vunpack.c.h.b16 %v236
    %v919 = vunpack.c.l.b16 %v237
    %v920 = vunpack.c.h.b16 %v237
    %v921 = vunpack.c.l.b16 %v238
    %v922 = vunpack.c.h.b16 %v238
    %v923 = vunpack.c.l.b16 %v239
    %v924 = vunpack.c.h.b16 %v239
    %v925 = vunpack.c.l.b16 %v240
    %v926 = vunpack.c.h.b16 %v240
    %v927 = vunpack.c.l.b16 %v241
    %v928 = vunpack.c.h.b16 %v241
    %v929 = vunpack.c.l.b16 %v242
    %v930 = vunpack.c.h.b16 %v242
    %v931 = vunpack.c.l.b16 %v243
    %v932 = vunpack.c.h.b16 %v243
    %v933 = vunpack.c.l.b16 %v244
    %v934 = vunpack.c.h.b16 %v244
    %v935 = vunpack.c.l.b16 %v245
    %v936 = vunpack.c.h.b16 %v245
    %v937 = vunpack.c.l.b16 %v246
    %v938 = vunpack.c.h.b16 %v246
    %v939 = vunpack.c.l.b16 %v247
    %v940 = vunpack.c.h.b16 %v247
    %v941 = vunpack.c.l.b16 %v248
    %v942 = vunpack.c.h.b16 %v248
    %v943 = vunpack.c.l.b16 %v249
    %v944 = vunpack.c.h.b16 %v249
    %v945 = vunpack.c.l.b16 %v250
    %v946 = vunpack.c.h.b16 %v250
    %v947 = vunpack.c.l.b16 %v251
    %v948 = vunpack.c.h.b16 %v251
    %v949 = vunpack.c.l.b16 %v252
    %v950 = vunpack.c.h.b16 %v252
    %v951 = vunpack.c.l.b16 %v253
    %v952 = vunpack.c.h.b16 %v253
    %v953 = vunpack.c.l.b16 %v254
    %v954 = vunpack.c.h.b16 %v254
    %v955 = vunpack.c.l.b16 %v255
    %v956 = vunpack.c.h.b16 %v255
    %v957 = vunpack.c.l.b16 %v256
    %v958 = vunpack.c.h.b16 %v256
    %v959 = vunpack.c.l.b16 %v257
    %v960 = vunpack.c.h.b16 %v257
    %v961 = vunpack.c.l.b16 %v258
    %v962 = vunpack.c.h.b16 %v258
    %v963 = vunpack.c.l.b16 %v259
    %v964 = vunpack.c.h.b16 %v259
    %v965 = vunpack.c.l.b16 %v260
    %v966 = vunpack.c.h.b16 %v260
    %v967 = vunpack.c.l.b16 %v261
    %v968 = vunpack.c.h.b16 %v261
    %v969 = vunpack.c.l.b16 %v262
    %v970 = vunpack.c.h.b16 %v262
    %v971 = vunpack.c.l.b16 %v263
    %v972 = vunpack.c.h.b16 %v263
    %v973 = vunpack.c.l.b16 %v264
    %v974 = vunpack.c.h.b16 %v264
    %v975 = vunpack.c.l.b16 %v265
    %v976 = vunpack.c.h.b16 %v265
    %v977 = vunpack.c.l.b16 %v266
    %v978 = vunpack.c.h.b16 %v266
    %v979 = vunpack.c.l.b16 %v267
    %v980 = vunpack.c.h.b16 %v267
    %v981 = vunpack.c.l.b16 %v268
    %v982 = vunpack.c.h.b16 %v268
    %v983 = vunpack.c.l.b16 %v269
    %v984 = vunpack.c.h.b16 %v269
    %v985 = vunpack.c.l.b16 %v270
    %v986 = vunpack.c.h.b16 %v270
    %v987 = vunpack.c.l.b16 %v271
    %v988 = vunpack.c.h.b16 %v271
    %v989 = vunpack.c.l.b16 %v272
    %v990 = vunpack.c.h.b16 %v272
    %v991 = vunpack.c.l.b16 %v273
    %v992 = vunpack.c.h.b16 %v273
    %v993 = vunpack.c.l.b16 %v274
    %v994 = vunpack.c.h.b16 %v274
    %v995 = vunpack.c.l.b16 %v275
    %v996 = vunpack.c.h.b16 %v275
    %v997 = vunpack.c.l.b16 %v276
    %v998 = vunpack.c.h.b16 %v276
    %v999 = vunpack.c.l.b16 %v277
    %v1000 = vunpack.c.h.b16 %v277
    %v1001 = vunpack.c.l.b16 %v278
    %v1002 = vunpack.c.h.b16 %v278
    %v1003 = vunpack.c.l.b16 %v279
    %v1004 = vunpack.c.h.b16 %v279
    %v1005 = vunpack.c.l.b16 %v280
    %v1006 = vunpack.c.h.b16 %v280
    %v1007 = vunpack.c.l.b16 %v281
    %v1008 = vunpack.c.h.b16 %v281
    %v1009 = vunpack.c.l.b16 %v282
    %v1010 = vunpack.c.h.b16 %v282
    %v1011 = vunpack.c.l.b16 %v283
    %v1012 = vunpack.c.h.b16 %v283
    %v1013 = vunpack.c.l.b16 %v284
    %v1014 = vunpack.c.h.b16 %v284
    %v1015 = vunpack.c.l.b16 %v285
    %v1016 = vunpack.c.h.b16 %v285
    %v1017 = vunpack.c.l.b16 %v286
    %v1018 = vunpack.c.h.b16 %v286
    %v1019 = vunpack.c.l.b16 %v287
    %v1020 = vunpack.c.h.b16 %v287
    %v1021 = vunpack.c.l.b16 %v288
    %v1022 = vunpack.c.h.b16 %v288
    %v1023 = vunpack.c.l.b16 %v289
    %v1024 = vunpack.c.h.b16 %v289
    %v1025 = vunpack.c.l.b16 %v290
    %v1026 = vunpack.c.h.b16 %v290
    %v1027 = vunpack.c.l.b16 %v291
    %v1028 = vunpack.c.h.b16 %v291
    %v1029 = vunpack.c.l.b16 %v292
    %v1030 = vunpack.c.h.b16 %v292
    %v1031 = vunpack.c.l.b16 %v293
    %v1032 = vunpack.c.h.b16 %v293
    %v1033 = vunpack.c.l.b16 %v294
    %v1034 = vunpack.c.h.b16 %v294
    %v1035 = vunpack.c.l.b16 %v295
    %v1036 = vunpack.c.h.b16 %v295
    %v1037 = vunpack.c.l.b16 %v296
    %v1038 = vunpack.c.h.b16 %v296
    %v1039 = vunpack.c.l.b16 %v297
    %v1040 = vunpack.c.h.b16 %v297
    %v1041 = vunpack.c.l.b16 %v298
    %v1042 = vunpack.c.h.b16 %v298
    %v1043 = vunpack.c.l.b16 %v299
    %v1044 = vunpack.c.h.b16 %v299
    %v1045 = vunpack.c.l.b16 %v300
    %v1046 = vunpack.c.h.b16 %v300
    %v1047 = vunpack.c.l.b16 %v301
    %v1048 = vunpack.c.h.b16 %v301
    %v1049 = vunpack.c.l.b16 %v302
    %v1050 = vunpack.c.h.b16 %v302
    %v1051 = vunpack.c.l.b16 %v303
    %v1052 = vunpack.c.h.b16 %v303
    %v1053 = vunpack.c.l.b16 %v304
    %v1054 = vunpack.c.h.b16 %v304
    %v1055 = vunpack.c.l.b16 %v305
    %v1056 = vunpack.c.h.b16 %v305
    %v1057 = vunpack.c.l.b16 %v306
    %v1058 = vunpack.c.h.b16 %v306
    %v1059 = vunpack.c.l.b16 %v307
    %v1060 = vunpack.c.h.b16 %v307
    %v1061 = vunpack.c.l.b16 %v308
    %v1062 = vunpack.c.h.b16 %v308
    %v1063 = vunpack.c.l.b16 %v309
    %v1064 = vunpack.c.h.b16 %v309
    %v1065 = vunpack.c.l.b16 %v310
    %v1066 = vunpack.c.h.b16 %v310
    %v1067 = vunpack.c.l.b16 %v311
    %v1068 = vunpack.c.h.b16 %v311
    %v1069 = vunpack.c.l.b16 %v312
    %v1070 = vunpack.c.h.b16 %v312
    %v1071 = vunpack.c.l.b16 %v313
    %v1072 = vunpack.c.h.b16 %v313
    %v1073 = vunpack.c.l.b16 %v314
    %v1074 = vunpack.c.h.b16 %v314
    %v1075 = vunpack.c.l.b16 %v315
    %v1076 = vunpack.c.h.b16 %v315
    %v1077 = vunpack.c.l.b16 %v316
    %v1078 = vunpack.c.h.b16 %v316
    %v1079 = vunpack.c.l.b16 %v317
    %v1080 = vunpack.c.h.b16 %v317
    %v1081 = vunpack.c.l.b16 %v318
    %v1082 = vunpack.c.h.b16 %v318
    %v1083 = vunpack.c.l.b16 %v319
    %v1084 = vunpack.c.h.b16 %v319
    %v1085 = vunpack.c.l.b16 %v320
    %v1086 = vunpack.c.h.b16 %v320
    %v1087 = vunpack.c.l.b16 %v321
    %v1088 = vunpack.c.h.b16 %v321
    %v1089 = vunpack.c.l.b16 %v322
    %v1090 = vunpack.c.h.b16 %v322
    %v1091 = vunpack.c.l.b16 %v323
    %v1092 = vunpack.c.h.b16 %v323
    %v1093 = vunpack.c.l.b16 %v324
    %v1094 = vunpack.c.h.b16 %v324
    %v1095 = vunpack.c.l.b16 %v325
    %v1096 = vunpack.c.h.b16 %v325
    %v1097 = vunpack.c.l.b16 %v326
    %v1098 = vunpack.c.h.b16 %v326
    %v1099 = vunpack.c.l.b16 %v327
    %v1100 = vunpack.c.h.b16 %v327
    %v1101 = vunpack.c.l.b16 %v328
    %v1102 = vunpack.c.h.b16 %v328
    %v1103 = vunpack.c.l.b16 %v329
    %v1104 = vunpack.c.h.b16 %v329
    %v1105 = vunpack.c.l.b16 %v330
    %v1106 = vunpack.c.h.b16 %v330
    %v1107 = vunpack.c.l.b16 %v331
    %v1108 = vunpack.c.h.b16 %v331
    %v1109 = vunpack.c.l.b16 %v332
    %v1110 = vunpack.c.h.b16 %v332
    %v1111 = vunpack.c.l.b16 %v333
    %v1112 = vunpack.c.h.b16 %v333
    %v1113 = vunpack.c.l.b16 %v334
    %v1114 = vunpack.c.h.b16 %v334
    %v1115 = vunpack.c.l.b16 %v335
    %v1116 = vunpack.c.h.b16 %v335
    %v1117 = vunpack.c.l.b16 %v336
    %v1118 = vunpack.c.h.b16 %v336
    %v1119 = vunpack.c.l.b16 %v337
    %v1120 = vunpack.c.h.b16 %v337
    %v1121 = vunpack.c.l.b16 %v338
    %v1122 = vunpack.c.h.b16 %v338
    %v1123 = vunpack.c.l.b16 %v339
    %v1124 = vunpack.c.h.b16 %v339
    %v1125 = vunpack.c.l.b16 %v340
    %v1126 = vunpack.c.h.b16 %v340
    %v1127 = vunpack.c.l.b16 %v341
    %v1128 = vunpack.c.h.b16 %v341
    %v1129 = vunpack.c.l.b16 %v342
    %v1130 = vunpack.c.h.b16 %v342
    %v1131 = vunpack.c.l.b16 %v343
    %v1132 = vunpack.c.h.b16 %v343
    %v1133 = vunpack.c.l.b16 %v344
    %v1134 = vunpack.c.h.b16 %v344
    %v1135 = vunpack.c.l.b16 %v345
    %v1136 = vunpack.c.h.b16 %v345
    %v1137 = vunpack.c.l.b16 %v346
    %v1138 = vunpack.c.h.b16 %v346
    %v1139 = vunpack.c.l.b16 %v347
    %v1140 = vunpack.c.h.b16 %v347
    %v1141 = vunpack.c.l.b16 %v348
    %v1142 = vunpack.c.h.b16 %v348
    %v1143 = vunpack.c.l.b16 %v349
    %v1144 = vunpack.c.h.b16 %v349
    %v1145 = vunpack.c.l.b16 %v350
    %v1146 = vunpack.c.h.b16 %v350
    %v1147 = vunpack.c.l.b16 %v351
    %v1148 = vunpack.c.h.b16 %v351
    %v1149 = vunpack.c.l.b16 %v352
    %v1150 = vunpack.c.h.b16 %v352
    %v1151 = vunpack.c.l.b16 %v353
    %v1152 = vunpack.c.h.b16 %v353
    %v1153 = vunpack.c.l.b16 %v354
    %v1154 = vunpack.c.h.b16 %v354
    %v1155 = vunpack.c.l.b16 %v355
    %v1156 = vunpack.c.h.b16 %v355
    %v1157 = vunpack.c.l.b16 %v356
    %v1158 = vunpack.c.h.b16 %v356
    %v1159 = vunpack.c.l.b16 %v357
    %v1160 = vunpack.c.h.b16 %v357
    %v1161 = vunpack.c.l.b16 %v358
    %v1162 = vunpack.c.h.b16 %v358
    %v1163 = vunpack.c.l.b16 %v359
    %v1164 = vunpack.c.h.b16 %v359
    %v1165 = vunpack.c.l.b16 %v360
    %v1166 = vunpack.c.h.b16 %v360
    %v1167 = vunpack.c.l.b16 %v361
    %v1168 = vunpack.c.h.b16 %v361
    %v1169 = vunpack.c.l.b16 %v362
    %v1170 = vunpack.c.h.b16 %v362
    %v1171 = vunpack.c.l.b16 %v363
    %v1172 = vunpack.c.h.b16 %v363
    %v1173 = vunpack.c.l.b16 %v364
    %v1174 = vunpack.c.h.b16 %v364
    %v1175 = vunpack.c.l.b16 %v365
    %v1176 = vunpack.c.h.b16 %v365
    %v1177 = vunpack.c.l.b16 %v366
    %v1178 = vunpack.c.h.b16 %v366
    %v1179 = vunpack.c.l.b16 %v367
    %v1180 = vunpack.c.h.b16 %v367
    %v1181 = vunpack.c.l.b16 %v368
    %v1182 = vunpack.c.h.b16 %v368
    %v1183 = vunpack.c.l.b16 %v369
    %v1184 = vunpack.c.h.b16 %v369
    %v1185 = vunpack.c.l.b16 %v370
    %v1186 = vunpack.c.h.b16 %v370
    %v1187 = vunpack.c.l.b16 %v371
    %v1188 = vunpack.c.h.b16 %v371
    %v1189 = vunpack.c.l.b16 %v372
    %v1190 = vunpack.c.h.b16 %v372
    %v1191 = vunpack.c.l.b16 %v373
    %v1192 = vunpack.c.h.b16 %v373
    %v1193 = vunpack.c.l.b16 %v374
    %v1194 = vunpack.c.h.b16 %v374
    %v1195 = vunpack.c.l.b16 %v375
    %v1196 = vunpack.c.h.b16 %v375
    %v1197 = vunpack.c.l.b16 %v376
    %v1198 = vunpack.c.h.b16 %v376
    %v1199 = vunpack.c.l.b16 %v377
    %v1200 = vunpack.c.h.b16 %v377
    %v1201 = vunpack.c.l.b16 %v378
    %v1202 = vunpack.c.h.b16 %v378
    %v1203 = vunpack.c.l.b16 %v379
    %v1204 = vunpack.c.h.b16 %v379
    %v1205 = vunpack.c.l.b16 %v380
    %v1206 = vunpack.c.h.b16 %v380
    %v1207 = vpack.c.b16 %v703, %v695
    %v1208 = vpack.c.b16 %v704, %v696
    %v1209 = vpack.c.b16 %v705, %v697
    %v1210 = vpack.c.b16 %v706, %v698
    %v1211 = vpack.c.b16 %v707, %v699
    %v1212 = vpack.c.b16 %v708, %v700
    %v1213 = vpack.c.b16 %v709, %v701
    %v1214 = vpack.c.b16 %v710, %v702
    %v1215 = vpack.c.b16 %v719, %v711
    %v1216 = vpack.c.b16 %v720, %v712
    %v1217 = vpack.c.b16 %v721, %v713
    %v1218 = vpack.c.b16 %v722, %v714
    %v1219 = vpack.c.b16 %v723, %v715
    %v1220 = vpack.c.b16 %v724, %v716
    %v1221 = vpack.c.b16 %v725, %v717
    %v1222 = vpack.c.b16 %v726, %v718
    %v1223 = vpack.c.b16 %v735, %v727
    %v1224 = vpack.c.b16 %v736, %v728
    %v1225 = vpack.c.b16 %v737, %v729
    %v1226 = vpack.c.b16 %v738, %v730
    %v1227 = vpack.c.b16 %v739, %v731
    %v1228 = vpack.c.b16 %v740, %v732
    %v1229 = vpack.c.b16 %v741, %v733
    %v1230 = vpack.c.b16 %v742, %v734
    %v1231 = vpack.c.b16 %v751, %v743
    %v1232 = vpack.c.b16 %v752, %v744
    %v1233 = vpack.c.b16 %v753, %v745
    %v1234 = vpack.c.b16 %v754, %v746
    %v1235 = vpack.c.b16 %v755, %v747
    %v1236 = vpack.c.b16 %v756, %v748
    %v1237 = vpack.c.b16 %v757, %v749
    %v1238 = vpack.c.b16 %v758, %v750
    %v1239 = vpack.c.b16 %v767, %v759
    %v1240 = vpack.c.b16 %v768, %v760
    %v1241 = vpack.c.b16 %v769, %v761
    %v1242 = vpack.c.b16 %v770, %v762
    %v1243 = vpack.c.b16 %v771, %v763
    %v1244 = vpack.c.b16 %v772, %v764
    %v1245 = vpack.c.b16 %v773, %v765
    %v1246 = vpack.c.b16 %v774, %v766
    %v1247 = vpack.c.b16 %v783, %v775
    %v1248 = vpack.c.b16 %v784, %v776
    %v1249 = vpack.c.b16 %v785, %v777
    %v1250 = vpack.c.b16 %v786, %v778
    %v1251 = vpack.c.b16 %v787, %v779
    %v1252 = vpack.c.b16 %v788, %v780
    %v1253 = vpack.c.b16 %v789, %v781
    %v1254 = vpack.c.b16 %v790, %v782
    %v1255 = vpack.c.b16 %v799, %v791
    %v1256 = vpack.c.b16 %v800, %v792
    %v1257 = vpack.c.b16 %v801, %v793
    %v1258 = vpack.c.b16 %v802, %v794
    %v1259 = vpack.c.b16 %v803, %v795
    %v1260 = vpack.c.b16 %v804, %v796
    %v1261 = vpack.c.b16 %v805, %v797
    %v1262 = vpack.c.b16 %v806, %v798
    %v1263 = vpack.c.b16 %v815, %v807
    %v1264 = vpack.c.b16 %v816, %v808
    %v1265 = vpack.c.b16 %v817, %v809
    %v1266 = vpack.c.b16 %v818, %v810
    %v1267 = vpack.c.b16 %v819, %v811
    %v1268 = vpack.c.b16 %v820, %v812
    %v1269 = vpack.c.b16 %v821, %v813
    %v1270 = vpack.c.b16 %v822, %v814
    %v1271 = vpack.c.b16 %v831, %v823
    %v1272 = vpack.c.b16 %v832, %v824
    %v1273 = vpack.c.b16 %v833, %v825
    %v1274 = vpack.c.b16 %v834, %v826
    %v1275 = vpack.c.b16 %v835, %v827
    %v1276 = vpack.c.b16 %v836, %v828
    %v1277 = vpack.c.b16 %v837, %v829
    %v1278 = vpack.c.b16 %v838, %v830
    %v1279 = vpack.c.b16 %v847, %v839
    %v1280 = vpack.c.b16 %v848, %v840
    %v1281 = vpack.c.b16 %v849, %v841
    %v1282 = vpack.c.b16 %v850, %v842
    %v1283 = vpack.c.b16 %v851, %v843
    %v1284 = vpack.c.b16 %v852, %v844
    %v1285 = vpack.c.b16 %v853, %v845
    %v1286 = vpack.c.b16 %v854, %v846
    %v1287 = vpack.c.b16 %v863, %v855
    %v1288 = vpack.c.b16 %v864, %v856
    %v1289 = vpack.c.b16 %v865, %v857
    %v1290 = vpack.c.b16 %v866, %v858
    %v1291 = vpack.c.b16 %v867, %v859
    %v1292 = vpack.c.b16 %v868, %v860
    %v1293 = vpack.c.b16 %v869, %v861
    %v1294 = vpack.c.b16 %v870, %v862
    %v1295 = vpack.c.b16 %v879, %v871
    %v1296 = vpack.c.b16 %v880, %v872
    %v1297 = vpack.c.b16 %v881, %v873
    %v1298 = vpack.c.b16 %v882, %v874
    %v1299 = vpack.c.b16 %v883, %v875
    %v1300 = vpack.c.b16 %v884, %v876
    %v1301 = vpack.c.b16 %v885, %v877
    %v1302 = vpack.c.b16 %v886, %v878
    %v1303 = vpack.c.b16 %v895, %v887
    %v1304 = vpack.c.b16 %v896, %v888
    %v1305 = vpack.c.b16 %v897, %v889
    %v1306 = vpack.c.b16 %v898, %v890
    %v1307 = vpack.c.b16 %v899, %v891
    %v1308 = vpack.c.b16 %v900, %v892
    %v1309 = vpack.c.b16 %v901, %v893
    %v1310 = vpack.c.b16 %v902, %v894
    %v1311 = vpack.c.b16 %v911, %v903
    %v1312 = vpack.c.b16 %v912, %v904
    %v1313 = vpack.c.b16 %v913, %v905
    %v1314 = vpack.c.b16 %v914, %v906
    %v1315 = vpack.c.b16 %v915, %v907
    %v1316 = vpack.c.b16 %v916, %v908
    %v1317 = vpack.c.b16 %v917, %v909
    %v1318 = vpack.c.b16 %v918, %v910
    %v1319 = vpack.c.b16 %v927, %v919
    %v1320 = vpack.c.b16 %v928, %v920
    %v1321 = vpack.c.b16 %v929, %v921
    %v1322 = vpack.c.b16 %v930, %v922
    %v1323 = vpack.c.b16 %v931, %v923
    %v1324 = vpack.c.b16 %v932, %v924
    %v1325 = vpack.c.b16 %v933, %v925
    %v1326 = vpack.c.b16 %v934, %v926
    %v1327 = vpack.c.b16 %v943, %v935
    %v1328 = vpack.c.b16 %v944, %v936
    %v1329 = vpack.c.b16 %v945, %v937
    %v1330 = vpack.c.b16 %v946, %v938
    %v1331 = vpack.c.b16 %v947, %v939
    %v1332 = vpack.c.b16 %v948, %v940
    %v1333 = vpack.c.b16 %v949, %v941
    %v1334 = vpack.c.b16 %v950, %v942
    %v1335 = vpack.c.b16 %v959, %v951
    %v1336 = vpack.c.b16 %v960, %v952
    %v1337 = vpack.c.b16 %v961, %v953
    %v1338 = vpack.c.b16 %v962, %v954
    %v1339 = vpack.c.b16 %v963, %v955
    %v1340 = vpack.c.b16 %v964, %v956
    %v1341 = vpack.c.b16 %v965, %v957
    %v1342 = vpack.c.b16 %v966, %v958
    %v1343 = vpack.c.b16 %v975, %v967
    %v1344 = vpack.c.b16 %v976, %v968
    %v1345 = vpack.c.b16 %v977, %v969
    %v1346 = vpack.c.b16 %v978, %v970
    %v1347 = vpack.c.b16 %v979, %v971
    %v1348 = vpack.c.b16 %v980, %v972
    %v1349 = vpack.c.b16 %v981, %v973
    %v1350 = vpack.c.b16 %v982, %v974
    %v1351 = vpack.c.b16 %v991, %v983
    %v1352 = vpack.c.b16 %v992, %v984
    %v1353 = vpack.c.b16 %v993, %v985
    %v1354 = vpack.c.b16 %v994, %v986
    %v1355 = vpack.c.b16 %v995, %v987
    %v1356 = vpack.c.b16 %v996, %v988
    %v1357 = vpack.c.b16 %v997, %v989
    %v1358 = vpack.c.b16 %v998, %v990
    %v1359 = vpack.c.b16 %v1007, %v999
    %v1360 = vpack.c.b16 %v1008, %v1000
    %v1361 = vpack.c.b16 %v1009, %v1001
    %v1362 = vpack.c.b16 %v1010, %v1002
    %v1363 = vpack.c.b16 %v1011, %v1003
    %v1364 = vpack.c.b16 %v1012, %v1004
    %v1365 = vpack.c.b16 %v1013, %v1005
    %v1366 = vpack.c.b16 %v1014, %v1006
    %v1367 = vpack.c.b16 %v1023, %v1015
    %v1368 = vpack.c.b16 %v1024, %v1016
    %v1369 = vpack.c.b16 %v1025, %v1017
    %v1370 = vpack.c.b16 %v1026, %v1018
    %v1371 = vpack.c.b16 %v1027, %v1019
    %v1372 = vpack.c.b16 %v1028, %v1020
    %v1373 = vpack.c.b16 %v1029, %v1021
    %v1374 = vpack.c.b16 %v1030, %v1022
    %v1375 = vpack.c.b16 %v1039, %v1031
    %v1376 = vpack.c.b16 %v1040, %v1032
    %v1377 = vpack.c.b16 %v1041, %v1033
    %v1378 = vpack.c.b16 %v1042, %v1034
    %v1379 = vpack.c.b16 %v1043, %v1035
    %v1380 = vpack.c.b16 %v1044, %v1036
    %v1381 = vpack.c.b16 %v1045, %v1037
    %v1382 = vpack.c.b16 %v1046, %v1038
    %v1383 = vpack.c.b16 %v1055, %v1047
    %v1384 = vpack.c.b16 %v1056, %v1048
    %v1385 = vpack.c.b16 %v1057, %v1049
    %v1386 = vpack.c.b16 %v1058, %v1050
    %v1387 = vpack.c.b16 %v1059, %v1051
    %v1388 = vpack.c.b16 %v1060, %v1052
    %v1389 = vpack.c.b16 %v1061, %v1053
    %v1390 = vpack.c.b16 %v1062, %v1054
    %v1391 = vpack.c.b16 %v1071, %v1063
    %v1392 = vpack.c.b16 %v1072, %v1064
    %v1393 = vpack.c.b16 %v1073, %v1065
    %v1394 = vpack.c.b16 %v1074, %v1066
    %v1395 = vpack.c.b16 %v1075, %v1067
    %v1396 = vpack.c.b16 %v1076, %v1068
    %v1397 = vpack.c.b16 %v1077, %v1069
    %v1398 = vpack.c.b16 %v1078, %v1070
    %v1399 = vpack.c.b16 %v1087, %v1079
    %v1400 = vpack.c.b16 %v1088, %v1080
    %v1401 = vpack.c.b16 %v1089, %v1081
    %v1402 = vpack.c.b16 %v1090, %v1082
    %v1403 = vpack.c.b16 %v1091, %v1083
    %v1404 = vpack.c.b16 %v1092, %v1084
    %v1405 = vpack.c.b16 %v1093, %v1085
    %v1406 = vpack.c.b16 %v1094, %v1086
    %v1407 = vpack.c.b16 %v1103, %v1095
    %v1408 = vpack.c.b16 %v1104, %v1096
    %v1409 = vpack.c.b16 %v1105, %v1097
    %v1410 = vpack.c.b16 %v1106, %v1098
    %v1411 = vpack.c.b16 %v1107, %v1099
    %v1412 = vpack.c.b16 %v1108, %v1100
    %v1413 = vpack.c.b16 %v1109, %v1101
    %v1414 = vpack.c.b16 %v1110, %v1102
    %v1415 = vpack.c.b16 %v1119, %v1111
    %v1416 = vpack.c.b16 %v1120, %v1112
    %v1417 = vpack.c.b16 %v1121, %v1113
    %v1418 = vpack.c.b16 %v1122, %v1114
    %v1419 = vpack.c.b16 %v1123, %v1115
    %v1420 = vpack.c.b16 %v1124, %v1116
    %v1421 = vpack.c.b16 %v1125, %v1117
    %v1422 = vpack.c.b16 %v1126, %v1118
    %v1423 = vpack.c.b16 %v1135, %v1127
    %v1424 = vpack.c.b16 %v1136, %v1128
    %v1425 = vpack.c.b16 %v1137, %v1129
    %v1426 = vpack.c.b16 %v1138, %v1130
    %v1427 = vpack.c.b16 %v1139, %v1131
    %v1428 = vpack.c.b16 %v1140, %v1132
    %v1429 = vpack.c.b16 %v1141, %v1133
    %v1430 = vpack.c.b16 %v1142, %v1134
    %v1431 = vpack.c.b16 %v1151, %v1143
    %v1432 = vpack.c.b16 %v1152, %v1144
    %v1433 = vpack.c.b16 %v1153, %v1145
    %v1434 = vpack.c.b16 %v1154, %v1146
    %v1435 = vpack.c.b16 %v1155, %v1147
    %v1436 = vpack.c.b16 %v1156, %v1148
    %v1437 = vpack.c.b16 %v1157, %v1149
    %v1438 = vpack.c.b16 %v1158, %v1150
    %v1439 = vpack.c.b16 %v1167, %v1159
    %v1440 = vpack.c.b16 %v1168, %v1160
    %v1441 = vpack.c.b16 %v1169, %v1161
    %v1442 = vpack.c.b16 %v1170, %v1162
    %v1443 = vpack.c.b16 %v1171, %v1163
    %v1444 = vpack.c.b16 %v1172, %v1164
    %v1445 = vpack.c.b16 %v1173, %v1165
    %v1446 = vpack.c.b16 %v1174, %v1166
    %v1447 = vpack.c.b16 %v1183, %v1175
    %v1448 = vpack.c.b16 %v1184, %v1176
    %v1449 = vpack.c.b16 %v1185, %v1177
    %v1450 = vpack.c.b16 %v1186, %v1178
    %v1451 = vpack.c.b16 %v1187, %v1179
    %v1452 = vpack.c.b16 %v1188, %v1180
    %v1453 = vpack.c.b16 %v1189, %v1181
    %v1454 = vpack.c.b16 %v1190, %v1182
    %v1455 = vpack.c.b16 %v1199, %v1191
    %v1456 = vpack.c.b16 %v1200, %v1192
    %v1457 = vpack.c.b16 %v1201, %v1193
    %v1458 = vpack.c.b16 %v1202, %v1194
    %v1459 = vpack.c.b16 %v1203, %v1195
    %v1460 = vpack.c.b16 %v1204, %v1196
    %v1461 = vpack.c.b16 %v1205, %v1197
    %v1462 = vpack.c.b16 %v1206, %v1198
    %1719 = vmatpush.bf16.msra.mxu0 %v1263
    %1720 = vmatpush.bf16.msra.mxu0 %v1255
    %1721 = vmatpush.bf16.msra.mxu0 %v1247
    %1722 = vmatpush.bf16.msra.mxu0 %v1239
    %1723 = vmatpush.bf16.msra.mxu0 %v1231
    %1724 = vmatpush.bf16.msra.mxu0 %v1223
    %1725 = vmatpush.bf16.msra.mxu0 %v1215
    %1726 = vmatpush.bf16.msra.mxu0 %v1207
    %1727 = vmatmul.bf16.gmra.mxu0 %v423
    %v1728 = vpop.f32.mrf.mxu0
    %v1729 = vadd.f32 %v383, %v1728
    %v1730 = vpop.f32.mrf.mxu0
    %v1731 = vadd.f32 %v383, %v1730
    %1732 = vmatmul.bf16.gmra.mxu0 %v427
    %v1733 = vpop.f32.mrf.mxu0
    %v1734 = vadd.f32 %v383, %v1733
    %v1735 = vpop.f32.mrf.mxu0
    %v1736 = vadd.f32 %v383, %v1735
    %1737 = vdwg.mxu0
    %1738 = vmatpush.bf16.msra.mxu0 %v1327
    %1739 = vmatpush.bf16.msra.mxu0 %v1319
    %1740 = vmatpush.bf16.msra.mxu0 %v1311
    %1741 = vmatpush.bf16.msra.mxu0 %v1303
    %1742 = vmatpush.bf16.msra.mxu0 %v1295
    %1743 = vmatpush.bf16.msra.mxu0 %v1287
    %1744 = vmatpush.bf16.msra.mxu0 %v1279
    %1745 = vmatpush.bf16.msra.mxu0 %v1271
    %1746 = vmatmul.bf16.gmra.mxu0 %v424
    %v1747 = vpop.f32.mrf.mxu0
    %v1748 = vadd.f32 %v1729, %v1747
    %v1749 = vpop.f32.mrf.mxu0
    %v1750 = vadd.f32 %v1731, %v1749
    %1751 = vmatmul.bf16.gmra.mxu0 %v428
    %v1752 = vpop.f32.mrf.mxu0
    %v1753 = vadd.f32 %v1734, %v1752
    %v1754 = vpop.f32.mrf.mxu0
    %v1755 = vadd.f32 %v1736, %v1754
    %1756 = vdwg.mxu0
    %1757 = vmatpush.bf16.msra.mxu0 %v1391
    %1758 = vmatpush.bf16.msra.mxu0 %v1383
    %1759 = vmatpush.bf16.msra.mxu0 %v1375
    %1760 = vmatpush.bf16.msra.mxu0 %v1367
    %1761 = vmatpush.bf16.msra.mxu0 %v1359
    %1762 = vmatpush.bf16.msra.mxu0 %v1351
    %1763 = vmatpush.bf16.msra.mxu0 %v1343
    %1764 = vmatpush.bf16.msra.mxu0 %v1335
    %1765 = vmatmul.bf16.gmra.mxu0 %v425
    %v1766 = vpop.f32.mrf.mxu0
    %v1767 = vadd.f32 %v1748, %v1766
    %v1768 = vpop.f32.mrf.mxu0
    %v1769 = vadd.f32 %v1750, %v1768
    %1770 = vmatmul.bf16.gmra.mxu0 %v429
    %v1771 = vpop.f32.mrf.mxu0
    %v1772 = vadd.f32 %v1753, %v1771
    %v1773 = vpop.f32.mrf.mxu0
    %v1774 = vadd.f32 %v1755, %v1773
    %1775 = vdwg.mxu0
    %1776 = vmatpush.bf16.msra.mxu0 %v1455
    %1777 = vmatpush.bf16.msra.mxu0 %v1447
    %1778 = vmatpush.bf16.msra.mxu0 %v1439
    %1779 = vmatpush.bf16.msra.mxu0 %v1431
    %1780 = vmatpush.bf16.msra.mxu0 %v1423
    %1781 = vmatpush.bf16.msra.mxu0 %v1415
    %1782 = vmatpush.bf16.msra.mxu0 %v1407
    %1783 = vmatpush.bf16.msra.mxu0 %v1399
    %1784 = vmatmul.bf16.gmra.mxu0 %v426
    %v1785 = vpop.f32.mrf.mxu0
    %v1786 = vadd.f32 %v1767, %v1785
    %v1787 = vpop.f32.mrf.mxu0
    %v1788 = vadd.f32 %v1769, %v1787
    %1789 = vmatmul.bf16.gmra.mxu0 %v430
    %v1790 = vpop.f32.mrf.mxu0
    %v1791 = vadd.f32 %v1772, %v1790
    %v1792 = vpop.f32.mrf.mxu0
    %v1793 = vadd.f32 %v1774, %v1792
    %1794 = vdwg.mxu0
    %1795 = vmatpush.bf16.msra.mxu0 %v1264
    %1796 = vmatpush.bf16.msra.mxu0 %v1256
    %1797 = vmatpush.bf16.msra.mxu0 %v1248
    %1798 = vmatpush.bf16.msra.mxu0 %v1240
    %1799 = vmatpush.bf16.msra.mxu0 %v1232
    %1800 = vmatpush.bf16.msra.mxu0 %v1224
    %1801 = vmatpush.bf16.msra.mxu0 %v1216
    %1802 = vmatpush.bf16.msra.mxu0 %v1208
    %1803 = vmatmul.bf16.gmra.mxu0 %v423
    %v1804 = vpop.f32.mrf.mxu0
    %v1805 = vadd.f32 %v384, %v1804
    %v1806 = vpop.f32.mrf.mxu0
    %v1807 = vadd.f32 %v384, %v1806
    %1808 = vmatmul.bf16.gmra.mxu0 %v427
    %v1809 = vpop.f32.mrf.mxu0
    %v1810 = vadd.f32 %v384, %v1809
    %v1811 = vpop.f32.mrf.mxu0
    %v1812 = vadd.f32 %v384, %v1811
    %1813 = vdwg.mxu0
    %1814 = vmatpush.bf16.msra.mxu0 %v1328
    %1815 = vmatpush.bf16.msra.mxu0 %v1320
    %1816 = vmatpush.bf16.msra.mxu0 %v1312
    %1817 = vmatpush.bf16.msra.mxu0 %v1304
    %1818 = vmatpush.bf16.msra.mxu0 %v1296
    %1819 = vmatpush.bf16.msra.mxu0 %v1288
    %1820 = vmatpush.bf16.msra.mxu0 %v1280
    %1821 = vmatpush.bf16.msra.mxu0 %v1272
    %1822 = vmatmul.bf16.gmra.mxu0 %v424
    %v1823 = vpop.f32.mrf.mxu0
    %v1824 = vadd.f32 %v1805, %v1823
    %v1825 = vpop.f32.mrf.mxu0
    %v1826 = vadd.f32 %v1807, %v1825
    %1827 = vmatmul.bf16.gmra.mxu0 %v428
    %v1828 = vpop.f32.mrf.mxu0
    %v1829 = vadd.f32 %v1810, %v1828
    %v1830 = vpop.f32.mrf.mxu0
    %v1831 = vadd.f32 %v1812, %v1830
    %1832 = vdwg.mxu0
    %1833 = vmatpush.bf16.msra.mxu0 %v1392
    %1834 = vmatpush.bf16.msra.mxu0 %v1384
    %1835 = vmatpush.bf16.msra.mxu0 %v1376
    %1836 = vmatpush.bf16.msra.mxu0 %v1368
    %1837 = vmatpush.bf16.msra.mxu0 %v1360
    %1838 = vmatpush.bf16.msra.mxu0 %v1352
    %1839 = vmatpush.bf16.msra.mxu0 %v1344
    %1840 = vmatpush.bf16.msra.mxu0 %v1336
    %1841 = vmatmul.bf16.gmra.mxu0 %v425
    %v1842 = vpop.f32.mrf.mxu0
    %v1843 = vadd.f32 %v1824, %v1842
    %v1844 = vpop.f32.mrf.mxu0
    %v1845 = vadd.f32 %v1826, %v1844
    %1846 = vmatmul.bf16.gmra.mxu0 %v429
    %v1847 = vpop.f32.mrf.mxu0
    %v1848 = vadd.f32 %v1829, %v1847
    %v1849 = vpop.f32.mrf.mxu0
    %v1850 = vadd.f32 %v1831, %v1849
    %1851 = vdwg.mxu0
    %1852 = vmatpush.bf16.msra.mxu0 %v1456
    %1853 = vmatpush.bf16.msra.mxu0 %v1448
    %1854 = vmatpush.bf16.msra.mxu0 %v1440
    %1855 = vmatpush.bf16.msra.mxu0 %v1432
    %1856 = vmatpush.bf16.msra.mxu0 %v1424
    %1857 = vmatpush.bf16.msra.mxu0 %v1416
    %1858 = vmatpush.bf16.msra.mxu0 %v1408
    %1859 = vmatpush.bf16.msra.mxu0 %v1400
    %1860 = vmatmul.bf16.gmra.mxu0 %v426
    %v1861 = vpop.f32.mrf.mxu0
    %v1862 = vadd.f32 %v1843, %v1861
    %v1863 = vpop.f32.mrf.mxu0
    %v1864 = vadd.f32 %v1845, %v1863
    %1865 = vmatmul.bf16.gmra.mxu0 %v430
    %v1866 = vpop.f32.mrf.mxu0
    %v1867 = vadd.f32 %v1848, %v1866
    %v1868 = vpop.f32.mrf.mxu0
    %v1869 = vadd.f32 %v1850, %v1868
    %1870 = vdwg.mxu0
    %1871 = vmatpush.bf16.msra.mxu0 %v1265
    %1872 = vmatpush.bf16.msra.mxu0 %v1257
    %1873 = vmatpush.bf16.msra.mxu0 %v1249
    %1874 = vmatpush.bf16.msra.mxu0 %v1241
    %1875 = vmatpush.bf16.msra.mxu0 %v1233
    %1876 = vmatpush.bf16.msra.mxu0 %v1225
    %1877 = vmatpush.bf16.msra.mxu0 %v1217
    %1878 = vmatpush.bf16.msra.mxu0 %v1209
    %1879 = vmatmul.bf16.gmra.mxu0 %v423
    %v1880 = vpop.f32.mrf.mxu0
    %v1881 = vadd.f32 %v385, %v1880
    %v1882 = vpop.f32.mrf.mxu0
    %v1883 = vadd.f32 %v385, %v1882
    %1884 = vmatmul.bf16.gmra.mxu0 %v427
    %v1885 = vpop.f32.mrf.mxu0
    %v1886 = vadd.f32 %v385, %v1885
    %v1887 = vpop.f32.mrf.mxu0
    %v1888 = vadd.f32 %v385, %v1887
    %1889 = vdwg.mxu0
    %1890 = vmatpush.bf16.msra.mxu0 %v1329
    %1891 = vmatpush.bf16.msra.mxu0 %v1321
    %1892 = vmatpush.bf16.msra.mxu0 %v1313
    %1893 = vmatpush.bf16.msra.mxu0 %v1305
    %1894 = vmatpush.bf16.msra.mxu0 %v1297
    %1895 = vmatpush.bf16.msra.mxu0 %v1289
    %1896 = vmatpush.bf16.msra.mxu0 %v1281
    %1897 = vmatpush.bf16.msra.mxu0 %v1273
    %1898 = vmatmul.bf16.gmra.mxu0 %v424
    %v1899 = vpop.f32.mrf.mxu0
    %v1900 = vadd.f32 %v1881, %v1899
    %v1901 = vpop.f32.mrf.mxu0
    %v1902 = vadd.f32 %v1883, %v1901
    %1903 = vmatmul.bf16.gmra.mxu0 %v428
    %v1904 = vpop.f32.mrf.mxu0
    %v1905 = vadd.f32 %v1886, %v1904
    %v1906 = vpop.f32.mrf.mxu0
    %v1907 = vadd.f32 %v1888, %v1906
    %1908 = vdwg.mxu0
    %1909 = vmatpush.bf16.msra.mxu0 %v1393
    %1910 = vmatpush.bf16.msra.mxu0 %v1385
    %1911 = vmatpush.bf16.msra.mxu0 %v1377
    %1912 = vmatpush.bf16.msra.mxu0 %v1369
    %1913 = vmatpush.bf16.msra.mxu0 %v1361
    %1914 = vmatpush.bf16.msra.mxu0 %v1353
    %1915 = vmatpush.bf16.msra.mxu0 %v1345
    %1916 = vmatpush.bf16.msra.mxu0 %v1337
    %1917 = vmatmul.bf16.gmra.mxu0 %v425
    %v1918 = vpop.f32.mrf.mxu0
    %v1919 = vadd.f32 %v1900, %v1918
    %v1920 = vpop.f32.mrf.mxu0
    %v1921 = vadd.f32 %v1902, %v1920
    %1922 = vmatmul.bf16.gmra.mxu0 %v429
    %v1923 = vpop.f32.mrf.mxu0
    %v1924 = vadd.f32 %v1905, %v1923
    %v1925 = vpop.f32.mrf.mxu0
    %v1926 = vadd.f32 %v1907, %v1925
    %1927 = vdwg.mxu0
    %1928 = vmatpush.bf16.msra.mxu0 %v1457
    %1929 = vmatpush.bf16.msra.mxu0 %v1449
    %1930 = vmatpush.bf16.msra.mxu0 %v1441
    %1931 = vmatpush.bf16.msra.mxu0 %v1433
    %1932 = vmatpush.bf16.msra.mxu0 %v1425
    %1933 = vmatpush.bf16.msra.mxu0 %v1417
    %1934 = vmatpush.bf16.msra.mxu0 %v1409
    %1935 = vmatpush.bf16.msra.mxu0 %v1401
    %1936 = vmatmul.bf16.gmra.mxu0 %v426
    %v1937 = vpop.f32.mrf.mxu0
    %v1938 = vadd.f32 %v1919, %v1937
    %v1939 = vpop.f32.mrf.mxu0
    %v1940 = vadd.f32 %v1921, %v1939
    %1941 = vmatmul.bf16.gmra.mxu0 %v430
    %v1942 = vpop.f32.mrf.mxu0
    %v1943 = vadd.f32 %v1924, %v1942
    %v1944 = vpop.f32.mrf.mxu0
    %v1945 = vadd.f32 %v1926, %v1944
    %1946 = vdwg.mxu0
    %1947 = vmatpush.bf16.msra.mxu0 %v1266
    %1948 = vmatpush.bf16.msra.mxu0 %v1258
    %1949 = vmatpush.bf16.msra.mxu0 %v1250
    %1950 = vmatpush.bf16.msra.mxu0 %v1242
    %1951 = vmatpush.bf16.msra.mxu0 %v1234
    %1952 = vmatpush.bf16.msra.mxu0 %v1226
    %1953 = vmatpush.bf16.msra.mxu0 %v1218
    %1954 = vmatpush.bf16.msra.mxu0 %v1210
    %1955 = vmatmul.bf16.gmra.mxu0 %v423
    %v1956 = vpop.f32.mrf.mxu0
    %v1957 = vadd.f32 %v386, %v1956
    %v1958 = vpop.f32.mrf.mxu0
    %v1959 = vadd.f32 %v386, %v1958
    %1960 = vmatmul.bf16.gmra.mxu0 %v427
    %v1961 = vpop.f32.mrf.mxu0
    %v1962 = vadd.f32 %v386, %v1961
    %v1963 = vpop.f32.mrf.mxu0
    %v1964 = vadd.f32 %v386, %v1963
    %1965 = vdwg.mxu0
    %1966 = vmatpush.bf16.msra.mxu0 %v1330
    %1967 = vmatpush.bf16.msra.mxu0 %v1322
    %1968 = vmatpush.bf16.msra.mxu0 %v1314
    %1969 = vmatpush.bf16.msra.mxu0 %v1306
    %1970 = vmatpush.bf16.msra.mxu0 %v1298
    %1971 = vmatpush.bf16.msra.mxu0 %v1290
    %1972 = vmatpush.bf16.msra.mxu0 %v1282
    %1973 = vmatpush.bf16.msra.mxu0 %v1274
    %1974 = vmatmul.bf16.gmra.mxu0 %v424
    %v1975 = vpop.f32.mrf.mxu0
    %v1976 = vadd.f32 %v1957, %v1975
    %v1977 = vpop.f32.mrf.mxu0
    %v1978 = vadd.f32 %v1959, %v1977
    %1979 = vmatmul.bf16.gmra.mxu0 %v428
    %v1980 = vpop.f32.mrf.mxu0
    %v1981 = vadd.f32 %v1962, %v1980
    %v1982 = vpop.f32.mrf.mxu0
    %v1983 = vadd.f32 %v1964, %v1982
    %1984 = vdwg.mxu0
    %1985 = vmatpush.bf16.msra.mxu0 %v1394
    %1986 = vmatpush.bf16.msra.mxu0 %v1386
    %1987 = vmatpush.bf16.msra.mxu0 %v1378
    %1988 = vmatpush.bf16.msra.mxu0 %v1370
    %1989 = vmatpush.bf16.msra.mxu0 %v1362
    %1990 = vmatpush.bf16.msra.mxu0 %v1354
    %1991 = vmatpush.bf16.msra.mxu0 %v1346
    %1992 = vmatpush.bf16.msra.mxu0 %v1338
    %1993 = vmatmul.bf16.gmra.mxu0 %v425
    %v1994 = vpop.f32.mrf.mxu0
    %v1995 = vadd.f32 %v1976, %v1994
    %v1996 = vpop.f32.mrf.mxu0
    %v1997 = vadd.f32 %v1978, %v1996
    %1998 = vmatmul.bf16.gmra.mxu0 %v429
    %v1999 = vpop.f32.mrf.mxu0
    %v2000 = vadd.f32 %v1981, %v1999
    %v2001 = vpop.f32.mrf.mxu0
    %v2002 = vadd.f32 %v1983, %v2001
    %2003 = vdwg.mxu0
    %2004 = vmatpush.bf16.msra.mxu0 %v1458
    %2005 = vmatpush.bf16.msra.mxu0 %v1450
    %2006 = vmatpush.bf16.msra.mxu0 %v1442
    %2007 = vmatpush.bf16.msra.mxu0 %v1434
    %2008 = vmatpush.bf16.msra.mxu0 %v1426
    %2009 = vmatpush.bf16.msra.mxu0 %v1418
    %2010 = vmatpush.bf16.msra.mxu0 %v1410
    %2011 = vmatpush.bf16.msra.mxu0 %v1402
    %2012 = vmatmul.bf16.gmra.mxu0 %v426
    %v2013 = vpop.f32.mrf.mxu0
    %v2014 = vadd.f32 %v1995, %v2013
    %v2015 = vpop.f32.mrf.mxu0
    %v2016 = vadd.f32 %v1997, %v2015
    %2017 = vmatmul.bf16.gmra.mxu0 %v430
    %v2018 = vpop.f32.mrf.mxu0
    %v2019 = vadd.f32 %v2000, %v2018
    %v2020 = vpop.f32.mrf.mxu0
    %v2021 = vadd.f32 %v2002, %v2020
    %2022 = vdwg.mxu0
    %2023 = vmatpush.bf16.msra.mxu0 %v1267
    %2024 = vmatpush.bf16.msra.mxu0 %v1259
    %2025 = vmatpush.bf16.msra.mxu0 %v1251
    %2026 = vmatpush.bf16.msra.mxu0 %v1243
    %2027 = vmatpush.bf16.msra.mxu0 %v1235
    %2028 = vmatpush.bf16.msra.mxu0 %v1227
    %2029 = vmatpush.bf16.msra.mxu0 %v1219
    %2030 = vmatpush.bf16.msra.mxu0 %v1211
    %2031 = vmatmul.bf16.gmra.mxu0 %v423
    %v2032 = vpop.f32.mrf.mxu0
    %v2033 = vadd.f32 %v387, %v2032
    %v2034 = vpop.f32.mrf.mxu0
    %v2035 = vadd.f32 %v387, %v2034
    %2036 = vmatmul.bf16.gmra.mxu0 %v427
    %v2037 = vpop.f32.mrf.mxu0
    %v2038 = vadd.f32 %v387, %v2037
    %v2039 = vpop.f32.mrf.mxu0
    %v2040 = vadd.f32 %v387, %v2039
    %2041 = vdwg.mxu0
    %2042 = vmatpush.bf16.msra.mxu0 %v1331
    %2043 = vmatpush.bf16.msra.mxu0 %v1323
    %2044 = vmatpush.bf16.msra.mxu0 %v1315
    %2045 = vmatpush.bf16.msra.mxu0 %v1307
    %2046 = vmatpush.bf16.msra.mxu0 %v1299
    %2047 = vmatpush.bf16.msra.mxu0 %v1291
    %2048 = vmatpush.bf16.msra.mxu0 %v1283
    %2049 = vmatpush.bf16.msra.mxu0 %v1275
    %2050 = vmatmul.bf16.gmra.mxu0 %v424
    %v2051 = vpop.f32.mrf.mxu0
    %v2052 = vadd.f32 %v2033, %v2051
    %v2053 = vpop.f32.mrf.mxu0
    %v2054 = vadd.f32 %v2035, %v2053
    %2055 = vmatmul.bf16.gmra.mxu0 %v428
    %v2056 = vpop.f32.mrf.mxu0
    %v2057 = vadd.f32 %v2038, %v2056
    %v2058 = vpop.f32.mrf.mxu0
    %v2059 = vadd.f32 %v2040, %v2058
    %2060 = vdwg.mxu0
    %2061 = vmatpush.bf16.msra.mxu0 %v1395
    %2062 = vmatpush.bf16.msra.mxu0 %v1387
    %2063 = vmatpush.bf16.msra.mxu0 %v1379
    %2064 = vmatpush.bf16.msra.mxu0 %v1371
    %2065 = vmatpush.bf16.msra.mxu0 %v1363
    %2066 = vmatpush.bf16.msra.mxu0 %v1355
    %2067 = vmatpush.bf16.msra.mxu0 %v1347
    %2068 = vmatpush.bf16.msra.mxu0 %v1339
    %2069 = vmatmul.bf16.gmra.mxu0 %v425
    %v2070 = vpop.f32.mrf.mxu0
    %v2071 = vadd.f32 %v2052, %v2070
    %v2072 = vpop.f32.mrf.mxu0
    %v2073 = vadd.f32 %v2054, %v2072
    %2074 = vmatmul.bf16.gmra.mxu0 %v429
    %v2075 = vpop.f32.mrf.mxu0
    %v2076 = vadd.f32 %v2057, %v2075
    %v2077 = vpop.f32.mrf.mxu0
    %v2078 = vadd.f32 %v2059, %v2077
    %2079 = vdwg.mxu0
    %2080 = vmatpush.bf16.msra.mxu0 %v1459
    %2081 = vmatpush.bf16.msra.mxu0 %v1451
    %2082 = vmatpush.bf16.msra.mxu0 %v1443
    %2083 = vmatpush.bf16.msra.mxu0 %v1435
    %2084 = vmatpush.bf16.msra.mxu0 %v1427
    %2085 = vmatpush.bf16.msra.mxu0 %v1419
    %2086 = vmatpush.bf16.msra.mxu0 %v1411
    %2087 = vmatpush.bf16.msra.mxu0 %v1403
    %2088 = vmatmul.bf16.gmra.mxu0 %v426
    %v2089 = vpop.f32.mrf.mxu0
    %v2090 = vadd.f32 %v2071, %v2089
    %v2091 = vpop.f32.mrf.mxu0
    %v2092 = vadd.f32 %v2073, %v2091
    %2093 = vmatmul.bf16.gmra.mxu0 %v430
    %v2094 = vpop.f32.mrf.mxu0
    %v2095 = vadd.f32 %v2076, %v2094
    %v2096 = vpop.f32.mrf.mxu0
    %v2097 = vadd.f32 %v2078, %v2096
    %2098 = vdwg.mxu0
    %2099 = vmatpush.bf16.msra.mxu0 %v1268
    %2100 = vmatpush.bf16.msra.mxu0 %v1260
    %2101 = vmatpush.bf16.msra.mxu0 %v1252
    %2102 = vmatpush.bf16.msra.mxu0 %v1244
    %2103 = vmatpush.bf16.msra.mxu0 %v1236
    %2104 = vmatpush.bf16.msra.mxu0 %v1228
    %2105 = vmatpush.bf16.msra.mxu0 %v1220
    %2106 = vmatpush.bf16.msra.mxu0 %v1212
    %2107 = vmatmul.bf16.gmra.mxu0 %v423
    %v2108 = vpop.f32.mrf.mxu0
    %v2109 = vadd.f32 %v388, %v2108
    %v2110 = vpop.f32.mrf.mxu0
    %v2111 = vadd.f32 %v388, %v2110
    %2112 = vmatmul.bf16.gmra.mxu0 %v427
    %v2113 = vpop.f32.mrf.mxu0
    %v2114 = vadd.f32 %v388, %v2113
    %v2115 = vpop.f32.mrf.mxu0
    %v2116 = vadd.f32 %v388, %v2115
    %2117 = vdwg.mxu0
    %2118 = vmatpush.bf16.msra.mxu0 %v1332
    %2119 = vmatpush.bf16.msra.mxu0 %v1324
    %2120 = vmatpush.bf16.msra.mxu0 %v1316
    %2121 = vmatpush.bf16.msra.mxu0 %v1308
    %2122 = vmatpush.bf16.msra.mxu0 %v1300
    %2123 = vmatpush.bf16.msra.mxu0 %v1292
    %2124 = vmatpush.bf16.msra.mxu0 %v1284
    %2125 = vmatpush.bf16.msra.mxu0 %v1276
    %2126 = vmatmul.bf16.gmra.mxu0 %v424
    %v2127 = vpop.f32.mrf.mxu0
    %v2128 = vadd.f32 %v2109, %v2127
    %v2129 = vpop.f32.mrf.mxu0
    %v2130 = vadd.f32 %v2111, %v2129
    %2131 = vmatmul.bf16.gmra.mxu0 %v428
    %v2132 = vpop.f32.mrf.mxu0
    %v2133 = vadd.f32 %v2114, %v2132
    %v2134 = vpop.f32.mrf.mxu0
    %v2135 = vadd.f32 %v2116, %v2134
    %2136 = vdwg.mxu0
    %2137 = vmatpush.bf16.msra.mxu0 %v1396
    %2138 = vmatpush.bf16.msra.mxu0 %v1388
    %2139 = vmatpush.bf16.msra.mxu0 %v1380
    %2140 = vmatpush.bf16.msra.mxu0 %v1372
    %2141 = vmatpush.bf16.msra.mxu0 %v1364
    %2142 = vmatpush.bf16.msra.mxu0 %v1356
    %2143 = vmatpush.bf16.msra.mxu0 %v1348
    %2144 = vmatpush.bf16.msra.mxu0 %v1340
    %2145 = vmatmul.bf16.gmra.mxu0 %v425
    %v2146 = vpop.f32.mrf.mxu0
    %v2147 = vadd.f32 %v2128, %v2146
    %v2148 = vpop.f32.mrf.mxu0
    %v2149 = vadd.f32 %v2130, %v2148
    %2150 = vmatmul.bf16.gmra.mxu0 %v429
    %v2151 = vpop.f32.mrf.mxu0
    %v2152 = vadd.f32 %v2133, %v2151
    %v2153 = vpop.f32.mrf.mxu0
    %v2154 = vadd.f32 %v2135, %v2153
    %2155 = vdwg.mxu0
    %2156 = vmatpush.bf16.msra.mxu0 %v1460
    %2157 = vmatpush.bf16.msra.mxu0 %v1452
    %2158 = vmatpush.bf16.msra.mxu0 %v1444
    %2159 = vmatpush.bf16.msra.mxu0 %v1436
    %2160 = vmatpush.bf16.msra.mxu0 %v1428
    %2161 = vmatpush.bf16.msra.mxu0 %v1420
    %2162 = vmatpush.bf16.msra.mxu0 %v1412
    %2163 = vmatpush.bf16.msra.mxu0 %v1404
    %2164 = vmatmul.bf16.gmra.mxu0 %v426
    %v2165 = vpop.f32.mrf.mxu0
    %v2166 = vadd.f32 %v2147, %v2165
    %v2167 = vpop.f32.mrf.mxu0
    %v2168 = vadd.f32 %v2149, %v2167
    %2169 = vmatmul.bf16.gmra.mxu0 %v430
    %v2170 = vpop.f32.mrf.mxu0
    %v2171 = vadd.f32 %v2152, %v2170
    %v2172 = vpop.f32.mrf.mxu0
    %v2173 = vadd.f32 %v2154, %v2172
    %2174 = vdwg.mxu0
    %2175 = vmatpush.bf16.msra.mxu0 %v1269
    %2176 = vmatpush.bf16.msra.mxu0 %v1261
    %2177 = vmatpush.bf16.msra.mxu0 %v1253
    %2178 = vmatpush.bf16.msra.mxu0 %v1245
    %2179 = vmatpush.bf16.msra.mxu0 %v1237
    %2180 = vmatpush.bf16.msra.mxu0 %v1229
    %2181 = vmatpush.bf16.msra.mxu0 %v1221
    %2182 = vmatpush.bf16.msra.mxu0 %v1213
    %2183 = vmatmul.bf16.gmra.mxu0 %v423
    %v2184 = vpop.f32.mrf.mxu0
    %v2185 = vadd.f32 %v389, %v2184
    %v2186 = vpop.f32.mrf.mxu0
    %v2187 = vadd.f32 %v389, %v2186
    %2188 = vmatmul.bf16.gmra.mxu0 %v427
    %v2189 = vpop.f32.mrf.mxu0
    %v2190 = vadd.f32 %v389, %v2189
    %v2191 = vpop.f32.mrf.mxu0
    %v2192 = vadd.f32 %v389, %v2191
    %2193 = vdwg.mxu0
    %2194 = vmatpush.bf16.msra.mxu0 %v1333
    %2195 = vmatpush.bf16.msra.mxu0 %v1325
    %2196 = vmatpush.bf16.msra.mxu0 %v1317
    %2197 = vmatpush.bf16.msra.mxu0 %v1309
    %2198 = vmatpush.bf16.msra.mxu0 %v1301
    %2199 = vmatpush.bf16.msra.mxu0 %v1293
    %2200 = vmatpush.bf16.msra.mxu0 %v1285
    %2201 = vmatpush.bf16.msra.mxu0 %v1277
    %2202 = vmatmul.bf16.gmra.mxu0 %v424
    %v2203 = vpop.f32.mrf.mxu0
    %v2204 = vadd.f32 %v2185, %v2203
    %v2205 = vpop.f32.mrf.mxu0
    %v2206 = vadd.f32 %v2187, %v2205
    %2207 = vmatmul.bf16.gmra.mxu0 %v428
    %v2208 = vpop.f32.mrf.mxu0
    %v2209 = vadd.f32 %v2190, %v2208
    %v2210 = vpop.f32.mrf.mxu0
    %v2211 = vadd.f32 %v2192, %v2210
    %2212 = vdwg.mxu0
    %2213 = vmatpush.bf16.msra.mxu0 %v1397
    %2214 = vmatpush.bf16.msra.mxu0 %v1389
    %2215 = vmatpush.bf16.msra.mxu0 %v1381
    %2216 = vmatpush.bf16.msra.mxu0 %v1373
    %2217 = vmatpush.bf16.msra.mxu0 %v1365
    %2218 = vmatpush.bf16.msra.mxu0 %v1357
    %2219 = vmatpush.bf16.msra.mxu0 %v1349
    %2220 = vmatpush.bf16.msra.mxu0 %v1341
    %2221 = vmatmul.bf16.gmra.mxu0 %v425
    %v2222 = vpop.f32.mrf.mxu0
    %v2223 = vadd.f32 %v2204, %v2222
    %v2224 = vpop.f32.mrf.mxu0
    %v2225 = vadd.f32 %v2206, %v2224
    %2226 = vmatmul.bf16.gmra.mxu0 %v429
    %v2227 = vpop.f32.mrf.mxu0
    %v2228 = vadd.f32 %v2209, %v2227
    %v2229 = vpop.f32.mrf.mxu0
    %v2230 = vadd.f32 %v2211, %v2229
    %2231 = vdwg.mxu0
    %2232 = vmatpush.bf16.msra.mxu0 %v1461
    %2233 = vmatpush.bf16.msra.mxu0 %v1453
    %2234 = vmatpush.bf16.msra.mxu0 %v1445
    %2235 = vmatpush.bf16.msra.mxu0 %v1437
    %2236 = vmatpush.bf16.msra.mxu0 %v1429
    %2237 = vmatpush.bf16.msra.mxu0 %v1421
    %2238 = vmatpush.bf16.msra.mxu0 %v1413
    %2239 = vmatpush.bf16.msra.mxu0 %v1405
    %2240 = vmatmul.bf16.gmra.mxu0 %v426
    %v2241 = vpop.f32.mrf.mxu0
    %v2242 = vadd.f32 %v2223, %v2241
    %v2243 = vpop.f32.mrf.mxu0
    %v2244 = vadd.f32 %v2225, %v2243
    %2245 = vmatmul.bf16.gmra.mxu0 %v430
    %v2246 = vpop.f32.mrf.mxu0
    %v2247 = vadd.f32 %v2228, %v2246
    %v2248 = vpop.f32.mrf.mxu0
    %v2249 = vadd.f32 %v2230, %v2248
    %2250 = vdwg.mxu0
    %2251 = vmatpush.bf16.msra.mxu0 %v1270
    %2252 = vmatpush.bf16.msra.mxu0 %v1262
    %2253 = vmatpush.bf16.msra.mxu0 %v1254
    %2254 = vmatpush.bf16.msra.mxu0 %v1246
    %2255 = vmatpush.bf16.msra.mxu0 %v1238
    %2256 = vmatpush.bf16.msra.mxu0 %v1230
    %2257 = vmatpush.bf16.msra.mxu0 %v1222
    %2258 = vmatpush.bf16.msra.mxu0 %v1214
    %2259 = vmatmul.bf16.gmra.mxu0 %v423
    %v2260 = vpop.f32.mrf.mxu0
    %v2261 = vadd.f32 %v390, %v2260
    %v2262 = vpop.f32.mrf.mxu0
    %v2263 = vadd.f32 %v390, %v2262
    %2264 = vmatmul.bf16.gmra.mxu0 %v427
    %v2265 = vpop.f32.mrf.mxu0
    %v2266 = vadd.f32 %v390, %v2265
    %v2267 = vpop.f32.mrf.mxu0
    %v2268 = vadd.f32 %v390, %v2267
    %2269 = vdwg.mxu0
    %2270 = vmatpush.bf16.msra.mxu0 %v1334
    %2271 = vmatpush.bf16.msra.mxu0 %v1326
    %2272 = vmatpush.bf16.msra.mxu0 %v1318
    %2273 = vmatpush.bf16.msra.mxu0 %v1310
    %2274 = vmatpush.bf16.msra.mxu0 %v1302
    %2275 = vmatpush.bf16.msra.mxu0 %v1294
    %2276 = vmatpush.bf16.msra.mxu0 %v1286
    %2277 = vmatpush.bf16.msra.mxu0 %v1278
    %2278 = vmatmul.bf16.gmra.mxu0 %v424
    %v2279 = vpop.f32.mrf.mxu0
    %v2280 = vadd.f32 %v2261, %v2279
    %v2281 = vpop.f32.mrf.mxu0
    %v2282 = vadd.f32 %v2263, %v2281
    %2283 = vmatmul.bf16.gmra.mxu0 %v428
    %v2284 = vpop.f32.mrf.mxu0
    %v2285 = vadd.f32 %v2266, %v2284
    %v2286 = vpop.f32.mrf.mxu0
    %v2287 = vadd.f32 %v2268, %v2286
    %2288 = vdwg.mxu0
    %2289 = vmatpush.bf16.msra.mxu0 %v1398
    %2290 = vmatpush.bf16.msra.mxu0 %v1390
    %2291 = vmatpush.bf16.msra.mxu0 %v1382
    %2292 = vmatpush.bf16.msra.mxu0 %v1374
    %2293 = vmatpush.bf16.msra.mxu0 %v1366
    %2294 = vmatpush.bf16.msra.mxu0 %v1358
    %2295 = vmatpush.bf16.msra.mxu0 %v1350
    %2296 = vmatpush.bf16.msra.mxu0 %v1342
    %2297 = vmatmul.bf16.gmra.mxu0 %v425
    %v2298 = vpop.f32.mrf.mxu0
    %v2299 = vadd.f32 %v2280, %v2298
    %v2300 = vpop.f32.mrf.mxu0
    %v2301 = vadd.f32 %v2282, %v2300
    %2302 = vmatmul.bf16.gmra.mxu0 %v429
    %v2303 = vpop.f32.mrf.mxu0
    %v2304 = vadd.f32 %v2285, %v2303
    %v2305 = vpop.f32.mrf.mxu0
    %v2306 = vadd.f32 %v2287, %v2305
    %2307 = vdwg.mxu0
    %2308 = vmatpush.bf16.msra.mxu0 %v1462
    %2309 = vmatpush.bf16.msra.mxu0 %v1454
    %2310 = vmatpush.bf16.msra.mxu0 %v1446
    %2311 = vmatpush.bf16.msra.mxu0 %v1438
    %2312 = vmatpush.bf16.msra.mxu0 %v1430
    %2313 = vmatpush.bf16.msra.mxu0 %v1422
    %2314 = vmatpush.bf16.msra.mxu0 %v1414
    %2315 = vmatpush.bf16.msra.mxu0 %v1406
    %2316 = vmatmul.bf16.gmra.mxu0 %v426
    %v2317 = vpop.f32.mrf.mxu0
    %v2318 = vadd.f32 %v2299, %v2317
    %v2319 = vpop.f32.mrf.mxu0
    %v2320 = vadd.f32 %v2301, %v2319
    %2321 = vmatmul.bf16.gmra.mxu0 %v430
    %v2322 = vpop.f32.mrf.mxu0
    %v2323 = vadd.f32 %v2304, %v2322
    %v2324 = vpop.f32.mrf.mxu0
    %v2325 = vadd.f32 %v2306, %v2324
    %2326 = vdwg.mxu0
    %2327 = vst [vmem:[#allocation2] sm:$0xff] %v1786
    %2328 = vst [vmem:[#allocation2 + $0x8] sm:$0xff] %v1862
    %2329 = vst [vmem:[#allocation2 + $0x10] sm:$0xff] %v1938
    %2330 = vst [vmem:[#allocation2 + $0x18] sm:$0xff] %v2014
    %2331 = vst [vmem:[#allocation2 + $0x20] sm:$0xff] %v2090
    %2332 = vst [vmem:[#allocation2 + $0x28] sm:$0xff] %v2166
    %2333 = vst [vmem:[#allocation2 + $0x30] sm:$0xff] %v2242
    %2334 = vst [vmem:[#allocation2 + $0x38] sm:$0xff] %v2318
    %2335 = vst [vmem:[#allocation2 + $0x40] sm:$0xff] %v1788
    %2336 = vst [vmem:[#allocation2 + $0x48] sm:$0xff] %v1864
    %2337 = vst [vmem:[#allocation2 + $0x50] sm:$0xff] %v1940
    %2338 = vst [vmem:[#allocation2 + $0x58] sm:$0xff] %v2016
    %2339 = vst [vmem:[#allocation2 + $0x60] sm:$0xff] %v2092
    %2340 = vst [vmem:[#allocation2 + $0x68] sm:$0xff] %v2168
    %2341 = vst [vmem:[#allocation2 + $0x70] sm:$0xff] %v2244
    %2342 = vst [vmem:[#allocation2 + $0x78] sm:$0xff] %v2320
    %2343 = vst [vmem:[#allocation2 + $0x80] sm:$0xff] %v1791
    %2344 = vst [vmem:[#allocation2 + $0x88] sm:$0xff] %v1867
    %2345 = vst [vmem:[#allocation2 + $0x90] sm:$0xff] %v1943
    %2346 = vst [vmem:[#allocation2 + $0x98] sm:$0xff] %v2019
    %2347 = vst [vmem:[#allocation2 + $0xa0] sm:$0xff] %v2095
    %2348 = vst [vmem:[#allocation2 + $0xa8] sm:$0xff] %v2171
    %2349 = vst [vmem:[#allocation2 + $0xb0] sm:$0xff] %v2247
    %2350 = vst [vmem:[#allocation2 + $0xb8] sm:$0xff] %v2323
    %2351 = vst [vmem:[#allocation2 + $0xc0] sm:$0xff] %v1793
    %2352 = vst [vmem:[#allocation2 + $0xc8] sm:$0xff] %v1869
    %2353 = vst [vmem:[#allocation2 + $0xd0] sm:$0xff] %v1945
    %2354 = vst [vmem:[#allocation2 + $0xd8] sm:$0xff] %v2021
    %2355 = vst [vmem:[#allocation2 + $0xe0] sm:$0xff] %v2097
    %2356 = vst [vmem:[#allocation2 + $0xe8] sm:$0xff] %v2173
    %2357 = vst [vmem:[#allocation2 + $0xf0] sm:$0xff] %v2249
    %2358 = vst [vmem:[#allocation2 + $0xf8] sm:$0xff] %v2325
    %v2359 = vld [vmem:[#allocation12] sm:$0xff]
    %v2360 = vld [vmem:[#allocation12 + $0x8] sm:$0xff]
    %v2361 = vld [vmem:[#allocation12 + $0x10] sm:$0xff]
    %v2362 = vld [vmem:[#allocation12 + $0x18] sm:$0xff]
    %v2363 = vld [vmem:[#allocation14] sm:$0xff]
    %v2364 = vld [vmem:[#allocation14 + $0x8] sm:$0xff]
    %v2365 = vld [vmem:[#allocation14 + $0x10] sm:$0xff]
    %v2366 = vld [vmem:[#allocation14 + $0x18] sm:$0xff]
    %v2367 = vld [vmem:[#allocation2] sm:$0xff]
    %v2368 = vld [vmem:[#allocation2 + $0x40] sm:$0xff]
    %v2369 = vld [vmem:[#allocation2 + $0x80] sm:$0xff]
    %v2370 = vld [vmem:[#allocation2 + $0xc0] sm:$0xff]
    %2375 = vrot.lane.b32.xlu0 %v2367, 64
    %v2376 = vpop.permute.xlu0 %2375
    %2377 = vrot.lane.b32.xlu0 %v2368, 64
    %v2378 = vpop.permute.xlu0 %2377
    %2379 = vrot.lane.b32.xlu0 %v2369, 64
    %v2380 = vpop.permute.xlu0 %2379
    %2381 = vrot.lane.b32.xlu0 %v2370, 64
    %v2382 = vpop.permute.xlu0 %2381
    %vm2387 = vcmask 523264
    %v2388 = vmul.f32 %v2367, %v2359
    %v2389 = vmul.f32 %v2368, %v2360
    %v2390 = vmul.f32 %v2369, %v2361
    %v2391 = vmul.f32 %v2370, %v2362
    %v2392 = vmul.f32 %v2376, %v2363
    %v2393 = vmul.f32 %v2378, %v2364
    %v2394 = vmul.f32 %v2380, %v2365
    %v2395 = vmul.f32 %v2382, %v2366
    %v2396 = vadd.f32 %v2388, %v2392
    %v2397 = vadd.f32 %v2389, %v2393
    %v2398 = vadd.f32 %v2390, %v2394
    %v2399 = vadd.f32 %v2391, %v2395
    %v2400 = vpack.c.bf16 %v2396, %v2396
    %v2401 = vpack.c.bf16 %v2397, %v2397
    %v2402 = vpack.c.bf16 %v2398, %v2398
    %v2403 = vpack.c.bf16 %v2399, %v2399
    %2404 = vst [vmem:[#allocation3] sm:$0xf] %v2400
    %2405 = vst [vmem:[#allocation3 + $0x4] sm:$0xf] %v2401
    %2406 = vst [vmem:[#allocation3 + $0x8] sm:$0xf] %v2402
    %2407 = vst [vmem:[#allocation3 + $0xc] sm:$0xf] %v2403
    %v2408 = vld [vmem:[#allocation2 + $0x8] sm:$0xff]
    %v2409 = vld [vmem:[#allocation2 + $0x48] sm:$0xff]
    %v2410 = vld [vmem:[#allocation2 + $0x88] sm:$0xff]
    %v2411 = vld [vmem:[#allocation2 + $0xc8] sm:$0xff]
    %2416 = vrot.lane.b32.xlu0 %v2408, 64
    %v2417 = vpop.permute.xlu0 %2416
    %2418 = vrot.lane.b32.xlu0 %v2409, 64
    %v2419 = vpop.permute.xlu0 %2418
    %2420 = vrot.lane.b32.xlu0 %v2410, 64
    %v2421 = vpop.permute.xlu0 %2420
    %2422 = vrot.lane.b32.xlu0 %v2411, 64
    %v2423 = vpop.permute.xlu0 %2422
    %v2428 = vmul.f32 %v2408, %v2359
    %v2429 = vmul.f32 %v2409, %v2360
    %v2430 = vmul.f32 %v2410, %v2361
    %v2431 = vmul.f32 %v2411, %v2362
    %v2432 = vmul.f32 %v2417, %v2363
    %v2433 = vmul.f32 %v2419, %v2364
    %v2434 = vmul.f32 %v2421, %v2365
    %v2435 = vmul.f32 %v2423, %v2366
    %v2436 = vadd.f32 %v2428, %v2432
    %v2437 = vadd.f32 %v2429, %v2433
    %v2438 = vadd.f32 %v2430, %v2434
    %v2439 = vadd.f32 %v2431, %v2435
    %v2440 = vpack.c.bf16 %v2436, %v2436
    %v2441 = vpack.c.bf16 %v2437, %v2437
    %v2442 = vpack.c.bf16 %v2438, %v2438
    %v2443 = vpack.c.bf16 %v2439, %v2439
    %2444 = vst [vmem:[#allocation3 + $0x10] sm:$0xf] %v2440
    %2445 = vst [vmem:[#allocation3 + $0x14] sm:$0xf] %v2441
    %2446 = vst [vmem:[#allocation3 + $0x18] sm:$0xf] %v2442
    %2447 = vst [vmem:[#allocation3 + $0x1c] sm:$0xf] %v2443
    %v2448 = vld [vmem:[#allocation2 + $0x10] sm:$0xff]
    %v2449 = vld [vmem:[#allocation2 + $0x50] sm:$0xff]
    %v2450 = vld [vmem:[#allocation2 + $0x90] sm:$0xff]
    %v2451 = vld [vmem:[#allocation2 + $0xd0] sm:$0xff]
    %2456 = vrot.lane.b32.xlu0 %v2448, 64
    %v2457 = vpop.permute.xlu0 %2456
    %2458 = vrot.lane.b32.xlu0 %v2449, 64
    %v2459 = vpop.permute.xlu0 %2458
    %2460 = vrot.lane.b32.xlu0 %v2450, 64
    %v2461 = vpop.permute.xlu0 %2460
    %2462 = vrot.lane.b32.xlu0 %v2451, 64
    %v2463 = vpop.permute.xlu0 %2462
    %v2468 = vmul.f32 %v2448, %v2359
    %v2469 = vmul.f32 %v2449, %v2360
    %v2470 = vmul.f32 %v2450, %v2361
    %v2471 = vmul.f32 %v2451, %v2362
    %v2472 = vmul.f32 %v2457, %v2363
    %v2473 = vmul.f32 %v2459, %v2364
    %v2474 = vmul.f32 %v2461, %v2365
    %v2475 = vmul.f32 %v2463, %v2366
    %v2476 = vadd.f32 %v2468, %v2472
    %v2477 = vadd.f32 %v2469, %v2473
    %v2478 = vadd.f32 %v2470, %v2474
    %v2479 = vadd.f32 %v2471, %v2475
    %v2480 = vpack.c.bf16 %v2476, %v2476
    %v2481 = vpack.c.bf16 %v2477, %v2477
    %v2482 = vpack.c.bf16 %v2478, %v2478
    %v2483 = vpack.c.bf16 %v2479, %v2479
    %2484 = vst [vmem:[#allocation3 + $0x20] sm:$0xf] %v2480
    %2485 = vst [vmem:[#allocation3 + $0x24] sm:$0xf] %v2481
    %2486 = vst [vmem:[#allocation3 + $0x28] sm:$0xf] %v2482
    %2487 = vst [vmem:[#allocation3 + $0x2c] sm:$0xf] %v2483
    %v2488 = vld [vmem:[#allocation2 + $0x18] sm:$0xff]
    %v2489 = vld [vmem:[#allocation2 + $0x58] sm:$0xff]
    %v2490 = vld [vmem:[#allocation2 + $0x98] sm:$0xff]
    %v2491 = vld [vmem:[#allocation2 + $0xd8] sm:$0xff]
    %2496 = vrot.lane.b32.xlu0 %v2488, 64
    %v2497 = vpop.permute.xlu0 %2496
    %2498 = vrot.lane.b32.xlu0 %v2489, 64
    %v2499 = vpop.permute.xlu0 %2498
    %2500 = vrot.lane.b32.xlu0 %v2490, 64
    %v2501 = vpop.permute.xlu0 %2500
    %2502 = vrot.lane.b32.xlu0 %v2491, 64
    %v2503 = vpop.permute.xlu0 %2502
    %v2508 = vmul.f32 %v2488, %v2359
    %v2509 = vmul.f32 %v2489, %v2360
    %v2510 = vmul.f32 %v2490, %v2361
    %v2511 = vmul.f32 %v2491, %v2362
    %v2512 = vmul.f32 %v2497, %v2363
    %v2513 = vmul.f32 %v2499, %v2364
    %v2514 = vmul.f32 %v2501, %v2365
    %v2515 = vmul.f32 %v2503, %v2366
    %v2516 = vadd.f32 %v2508, %v2512
    %v2517 = vadd.f32 %v2509, %v2513
    %v2518 = vadd.f32 %v2510, %v2514
    %v2519 = vadd.f32 %v2511, %v2515
    %v2520 = vpack.c.bf16 %v2516, %v2516
    %v2521 = vpack.c.bf16 %v2517, %v2517
    %v2522 = vpack.c.bf16 %v2518, %v2518
    %v2523 = vpack.c.bf16 %v2519, %v2519
    %2524 = vst [vmem:[#allocation3 + $0x30] sm:$0xf] %v2520
    %2525 = vst [vmem:[#allocation3 + $0x34] sm:$0xf] %v2521
    %2526 = vst [vmem:[#allocation3 + $0x38] sm:$0xf] %v2522
    %2527 = vst [vmem:[#allocation3 + $0x3c] sm:$0xf] %v2523
    %v2528 = vld [vmem:[#allocation2 + $0x20] sm:$0xff]
    %v2529 = vld [vmem:[#allocation2 + $0x60] sm:$0xff]
    %v2530 = vld [vmem:[#allocation2 + $0xa0] sm:$0xff]
    %v2531 = vld [vmem:[#allocation2 + $0xe0] sm:$0xff]
    %2536 = vrot.lane.b32.xlu0 %v2528, 64
    %v2537 = vpop.permute.xlu0 %2536
    %2538 = vrot.lane.b32.xlu0 %v2529, 64
    %v2539 = vpop.permute.xlu0 %2538
    %2540 = vrot.lane.b32.xlu0 %v2530, 64
    %v2541 = vpop.permute.xlu0 %2540
    %2542 = vrot.lane.b32.xlu0 %v2531, 64
    %v2543 = vpop.permute.xlu0 %2542
    %v2548 = vmul.f32 %v2528, %v2359
    %v2549 = vmul.f32 %v2529, %v2360
    %v2550 = vmul.f32 %v2530, %v2361
    %v2551 = vmul.f32 %v2531, %v2362
    %v2552 = vmul.f32 %v2537, %v2363
    %v2553 = vmul.f32 %v2539, %v2364
    %v2554 = vmul.f32 %v2541, %v2365
    %v2555 = vmul.f32 %v2543, %v2366
    %v2556 = vadd.f32 %v2548, %v2552
    %v2557 = vadd.f32 %v2549, %v2553
    %v2558 = vadd.f32 %v2550, %v2554
    %v2559 = vadd.f32 %v2551, %v2555
    %v2560 = vpack.c.bf16 %v2556, %v2556
    %v2561 = vpack.c.bf16 %v2557, %v2557
    %v2562 = vpack.c.bf16 %v2558, %v2558
    %v2563 = vpack.c.bf16 %v2559, %v2559
    %2564 = vst [vmem:[#allocation4] sm:$0xf] %v2560
    %2565 = vst [vmem:[#allocation4 + $0x4] sm:$0xf] %v2561
    %2566 = vst [vmem:[#allocation4 + $0x8] sm:$0xf] %v2562
    %2567 = vst [vmem:[#allocation4 + $0xc] sm:$0xf] %v2563
    %v2568 = vld [vmem:[#allocation2 + $0x30] sm:$0xff]
    %v2569 = vld [vmem:[#allocation2 + $0x70] sm:$0xff]
    %v2570 = vld [vmem:[#allocation2 + $0xb0] sm:$0xff]
    %v2571 = vld [vmem:[#allocation2 + $0xf0] sm:$0xff]
    %v2572 = vpack.c.bf16 %v2568, %v2568
    %v2573 = vpack.c.bf16 %v2569, %v2569
    %v2574 = vpack.c.bf16 %v2570, %v2570
    %v2575 = vpack.c.bf16 %v2571, %v2571
    %2576 = vst [vmem:[#allocation5] sm:$0xf] %v2572
    %2577 = vst [vmem:[#allocation5 + $0x4] sm:$0xf] %v2573
    %2578 = vst [vmem:[#allocation5 + $0x8] sm:$0xf] %v2574
    %2579 = vst [vmem:[#allocation5 + $0xc] sm:$0xf] %v2575
    %v2580 = vld [vmem:[#allocation2 + $0x28] sm:$0xff]
    %v2581 = vld [vmem:[#allocation2 + $0x68] sm:$0xff]
    %v2582 = vld [vmem:[#allocation2 + $0xa8] sm:$0xff]
    %v2583 = vld [vmem:[#allocation2 + $0xe8] sm:$0xff]
    %2588 = vrot.lane.b32.xlu0 %v2580, 64
    %v2589 = vpop.permute.xlu0 %2588
    %2590 = vrot.lane.b32.xlu0 %v2581, 64
    %v2591 = vpop.permute.xlu0 %2590
    %2592 = vrot.lane.b32.xlu0 %v2582, 64
    %v2593 = vpop.permute.xlu0 %2592
    %2594 = vrot.lane.b32.xlu0 %v2583, 64
    %v2595 = vpop.permute.xlu0 %2594
    %v2600 = vmul.f32 %v2580, %v2359
    %v2601 = vmul.f32 %v2581, %v2360
    %v2602 = vmul.f32 %v2582, %v2361
    %v2603 = vmul.f32 %v2583, %v2362
    %v2604 = vmul.f32 %v2589, %v2363
    %v2605 = vmul.f32 %v2591, %v2364
    %v2606 = vmul.f32 %v2593, %v2365
    %v2607 = vmul.f32 %v2595, %v2366
    %v2608 = vadd.f32 %v2600, %v2604
    %v2609 = vadd.f32 %v2601, %v2605
    %v2610 = vadd.f32 %v2602, %v2606
    %v2611 = vadd.f32 %v2603, %v2607
    %v2612 = vpack.c.bf16 %v2608, %v2608
    %v2613 = vpack.c.bf16 %v2609, %v2609
    %v2614 = vpack.c.bf16 %v2610, %v2610
    %v2615 = vpack.c.bf16 %v2611, %v2611
    %2616 = vst [vmem:[#allocation4 + $0x10] sm:$0xf] %v2612
    %2617 = vst [vmem:[#allocation4 + $0x14] sm:$0xf] %v2613
    %2618 = vst [vmem:[#allocation4 + $0x18] sm:$0xf] %v2614
    %2619 = vst [vmem:[#allocation4 + $0x1c] sm:$0xf] %v2615
    %v2620 = vld [vmem:[#allocation2 + $0x38] sm:$0xff]
    %v2621 = vld [vmem:[#allocation2 + $0x78] sm:$0xff]
    %v2622 = vld [vmem:[#allocation2 + $0xb8] sm:$0xff]
    %v2623 = vld [vmem:[#allocation2 + $0xf8] sm:$0xff]
    %v2624 = vpack.c.bf16 %v2620, %v2620
    %v2625 = vpack.c.bf16 %v2621, %v2621
    %v2626 = vpack.c.bf16 %v2622, %v2622
    %v2627 = vpack.c.bf16 %v2623, %v2623
    %2628 = vst [vmem:[#allocation5 + $0x10] sm:$0xf] %v2624
    %2629 = vst [vmem:[#allocation5 + $0x14] sm:$0xf] %v2625
    %2630 = vst [vmem:[#allocation5 + $0x18] sm:$0xf] %v2626
    %2631 = vst [vmem:[#allocation5 + $0x1c] sm:$0xf] %v2627
    %v2632 = vlaneseq
    %v2633 = vshrl.u32 %v2632, 7
    %v2634 = vadd.s32 %v2633, 8
    %v2635 = vadd.s32 %v2633, 16
    %v2636 = vadd.s32 %v2633, 24
    %v2637 = vadd.s32 %v2633, 32
    %v2638 = vadd.s32 %v2633, 40
    %v2639 = vadd.s32 %v2633, 48
    %v2640 = vadd.s32 %v2633, 56
    %v2641 = vadd.s32 %v2633, 64
    %v2642 = vadd.s32 %v2633, 72
    %v2643 = vadd.s32 %v2633, 80
    %v2644 = vadd.s32 %v2633, 88
    %v2645 = vadd.s32 %v2633, 96
    %v2646 = vadd.s32 %v2633, 104
    %v2647 = vadd.s32 %v2633, 112
    %v2648 = vadd.s32 %v2633, 120
    %v2649 = vlaneseq
    %v2650 = vand.u32 %v2649, 127
    %v2651 = vand.u32 %v2633, 31
    %v2652 = vand.u32 %v2634, 31
    %v2653 = vand.u32 %v2635, 31
    %v2654 = vand.u32 %v2636, 31
    %v2655 = vand.u32 %v2637, 31
    %v2656 = vand.u32 %v2638, 31
    %v2657 = vand.u32 %v2639, 31
    %v2658 = vand.u32 %v2640, 31
    %v2659 = vand.u32 %v2641, 31
    %v2660 = vand.u32 %v2642, 31
    %v2661 = vand.u32 %v2643, 31
    %v2662 = vand.u32 %v2644, 31
    %v2663 = vand.u32 %v2645, 31
    %v2664 = vand.u32 %v2646, 31
    %v2665 = vand.u32 %v2647, 31
    %v2666 = vand.u32 %v2648, 31
    %v2667 = vand.u32 %v2650, 31
    %v2668 = vshra.s32 %v2633, 6
    %v2669 = vshra.s32 %v2634, 6
    %v2670 = vshra.s32 %v2635, 6
    %v2671 = vshra.s32 %v2636, 6
    %v2672 = vshra.s32 %v2637, 6
    %v2673 = vshra.s32 %v2638, 6
    %v2674 = vshra.s32 %v2639, 6
    %v2675 = vshra.s32 %v2640, 6
    %v2676 = vshra.s32 %v2641, 6
    %v2677 = vshra.s32 %v2642, 6
    %v2678 = vshra.s32 %v2643, 6
    %v2679 = vshra.s32 %v2644, 6
    %v2680 = vshra.s32 %v2645, 6
    %v2681 = vshra.s32 %v2646, 6
    %v2682 = vshra.s32 %v2647, 6
    %v2683 = vshra.s32 %v2648, 6
    %v2684 = vshra.s32 %v2650, 5
    %vm2685 = vcmp.eq.s32.totalorder %v2668, %v2684
    %vm2686 = vcmp.eq.s32.totalorder %v2669, %v2684
    %vm2687 = vcmp.eq.s32.totalorder %v2670, %v2684
    %vm2688 = vcmp.eq.s32.totalorder %v2671, %v2684
    %vm2689 = vcmp.eq.s32.totalorder %v2672, %v2684
    %vm2690 = vcmp.eq.s32.totalorder %v2673, %v2684
    %vm2691 = vcmp.eq.s32.totalorder %v2674, %v2684
    %vm2692 = vcmp.eq.s32.totalorder %v2675, %v2684
    %vm2693 = vcmp.eq.s32.totalorder %v2676, %v2684
    %vm2694 = vcmp.eq.s32.totalorder %v2677, %v2684
    %vm2695 = vcmp.eq.s32.totalorder %v2678, %v2684
    %vm2696 = vcmp.eq.s32.totalorder %v2679, %v2684
    %vm2697 = vcmp.eq.s32.totalorder %v2680, %v2684
    %vm2698 = vcmp.eq.s32.totalorder %v2681, %v2684
    %vm2699 = vcmp.eq.s32.totalorder %v2682, %v2684
    %vm2700 = vcmp.eq.s32.totalorder %v2683, %v2684
    %v2701 = vand.u32 %v2651, 1
    %v2702 = vand.u32 %v2652, 1
    %v2703 = vand.u32 %v2653, 1
    %v2704 = vand.u32 %v2654, 1
    %v2705 = vand.u32 %v2655, 1
    %v2706 = vand.u32 %v2656, 1
    %v2707 = vand.u32 %v2657, 1
    %v2708 = vand.u32 %v2658, 1
    %v2709 = vand.u32 %v2659, 1
    %v2710 = vand.u32 %v2660, 1
    %v2711 = vand.u32 %v2661, 1
    %v2712 = vand.u32 %v2662, 1
    %v2713 = vand.u32 %v2663, 1
    %v2714 = vand.u32 %v2664, 1
    %v2715 = vand.u32 %v2665, 1
    %v2716 = vand.u32 %v2666, 1
    %v2717 = vand.u32 %v2667, 1
    %vm2718 = vcmp.eq.s32.totalorder %v2701, %v2717
    %vm2719 = vcmp.eq.s32.totalorder %v2702, %v2717
    %vm2720 = vcmp.eq.s32.totalorder %v2703, %v2717
    %vm2721 = vcmp.eq.s32.totalorder %v2704, %v2717
    %vm2722 = vcmp.eq.s32.totalorder %v2705, %v2717
    %vm2723 = vcmp.eq.s32.totalorder %v2706, %v2717
    %vm2724 = vcmp.eq.s32.totalorder %v2707, %v2717
    %vm2725 = vcmp.eq.s32.totalorder %v2708, %v2717
    %vm2726 = vcmp.eq.s32.totalorder %v2709, %v2717
    %vm2727 = vcmp.eq.s32.totalorder %v2710, %v2717
    %vm2728 = vcmp.eq.s32.totalorder %v2711, %v2717
    %vm2729 = vcmp.eq.s32.totalorder %v2712, %v2717
    %vm2730 = vcmp.eq.s32.totalorder %v2713, %v2717
    %vm2731 = vcmp.eq.s32.totalorder %v2714, %v2717
    %vm2732 = vcmp.eq.s32.totalorder %v2715, %v2717
    %vm2733 = vcmp.eq.s32.totalorder %v2716, %v2717
    %vm2734 = vmand %vm2685, %vm2718
    %vm2735 = vmand %vm2686, %vm2719
    %vm2736 = vmand %vm2687, %vm2720
    %vm2737 = vmand %vm2688, %vm2721
    %vm2738 = vmand %vm2689, %vm2722
    %vm2739 = vmand %vm2690, %vm2723
    %vm2740 = vmand %vm2691, %vm2724
    %vm2741 = vmand %vm2692, %vm2725
    %vm2742 = vmand %vm2693, %vm2726
    %vm2743 = vmand %vm2694, %vm2727
    %vm2744 = vmand %vm2695, %vm2728
    %vm2745 = vmand %vm2696, %vm2729
    %vm2746 = vmand %vm2697, %vm2730
    %vm2747 = vmand %vm2698, %vm2731
    %vm2748 = vmand %vm2699, %vm2732
    %vm2749 = vmand %vm2700, %vm2733
    %v2750 = vshra.s32 %v2651, 1
    %v2751 = vshra.s32 %v2652, 1
    %v2752 = vshra.s32 %v2653, 1
    %v2753 = vshra.s32 %v2654, 1
    %v2754 = vshra.s32 %v2655, 1
    %v2755 = vshra.s32 %v2656, 1
    %v2756 = vshra.s32 %v2657, 1
    %v2757 = vshra.s32 %v2658, 1
    %v2758 = vshra.s32 %v2659, 1
    %v2759 = vshra.s32 %v2660, 1
    %v2760 = vshra.s32 %v2661, 1
    %v2761 = vshra.s32 %v2662, 1
    %v2762 = vshra.s32 %v2663, 1
    %v2763 = vshra.s32 %v2664, 1
    %v2764 = vshra.s32 %v2665, 1
    %v2765 = vshra.s32 %v2666, 1
    %v2766 = vshra.s32 %v2667, 1
    %vm2767 = vcmp.ge.s32.totalorder %v2750, %v2766
    %vm2768 = vcmp.ge.s32.totalorder %v2751, %v2766
    %vm2769 = vcmp.ge.s32.totalorder %v2752, %v2766
    %vm2770 = vcmp.ge.s32.totalorder %v2753, %v2766
    %vm2771 = vcmp.ge.s32.totalorder %v2754, %v2766
    %vm2772 = vcmp.ge.s32.totalorder %v2755, %v2766
    %vm2773 = vcmp.ge.s32.totalorder %v2756, %v2766
    %vm2774 = vcmp.ge.s32.totalorder %v2757, %v2766
    %vm2775 = vcmp.ge.s32.totalorder %v2758, %v2766
    %vm2776 = vcmp.ge.s32.totalorder %v2759, %v2766
    %vm2777 = vcmp.ge.s32.totalorder %v2760, %v2766
    %vm2778 = vcmp.ge.s32.totalorder %v2761, %v2766
    %vm2779 = vcmp.ge.s32.totalorder %v2762, %v2766
    %vm2780 = vcmp.ge.s32.totalorder %v2763, %v2766
    %vm2781 = vcmp.ge.s32.totalorder %v2764, %v2766
    %vm2782 = vcmp.ge.s32.totalorder %v2765, %v2766
    %vm2783 = vmand %vm2734, %vm2767
    %vm2784 = vmand %vm2735, %vm2768
    %vm2785 = vmand %vm2736, %vm2769
    %vm2786 = vmand %vm2737, %vm2770
    %vm2787 = vmand %vm2738, %vm2771
    %vm2788 = vmand %vm2739, %vm2772
    %vm2789 = vmand %vm2740, %vm2773
    %vm2790 = vmand %vm2741, %vm2774
    %vm2791 = vmand %vm2742, %vm2775
    %vm2792 = vmand %vm2743, %vm2776
    %vm2793 = vmand %vm2744, %vm2777
    %vm2794 = vmand %vm2745, %vm2778
    %vm2795 = vmand %vm2746, %vm2779
    %vm2796 = vmand %vm2747, %vm2780
    %vm2797 = vmand %vm2748, %vm2781
    %vm2798 = vmand %vm2749, %vm2782
    %v2799 = vld [vmem:[#allocation3] sm:$0xf]
    %v2800 = vld [vmem:[#allocation3 + $0x4] sm:$0xf]
    %v2801 = vld [vmem:[#allocation3 + $0x8] sm:$0xf]
    %v2802 = vld [vmem:[#allocation3 + $0xc] sm:$0xf]
    %v2803 = vld [vmem:[#allocation3 + $0x10] sm:$0xf]
    %v2804 = vld [vmem:[#allocation3 + $0x14] sm:$0xf]
    %v2805 = vld [vmem:[#allocation3 + $0x18] sm:$0xf]
    %v2806 = vld [vmem:[#allocation3 + $0x1c] sm:$0xf]
    %v2807 = vld [vmem:[#allocation3 + $0x20] sm:$0xf]
    %v2808 = vld [vmem:[#allocation3 + $0x24] sm:$0xf]
    %v2809 = vld [vmem:[#allocation3 + $0x28] sm:$0xf]
    %v2810 = vld [vmem:[#allocation3 + $0x2c] sm:$0xf]
    %v2811 = vld [vmem:[#allocation3 + $0x30] sm:$0xf]
    %v2812 = vld [vmem:[#allocation3 + $0x34] sm:$0xf]
    %v2813 = vld [vmem:[#allocation3 + $0x38] sm:$0xf]
    %v2814 = vld [vmem:[#allocation3 + $0x3c] sm:$0xf]
    %v2815 = vld [vmem:[#allocation4] sm:$0xf]
    %v2816 = vld [vmem:[#allocation4 + $0x4] sm:$0xf]
    %v2817 = vld [vmem:[#allocation4 + $0x8] sm:$0xf]
    %v2818 = vld [vmem:[#allocation4 + $0xc] sm:$0xf]
    %v2819 = vld [vmem:[#allocation4 + $0x10] sm:$0xf]
    %v2820 = vld [vmem:[#allocation4 + $0x14] sm:$0xf]
    %v2821 = vld [vmem:[#allocation4 + $0x18] sm:$0xf]
    %v2822 = vld [vmem:[#allocation4 + $0x1c] sm:$0xf]
    %v2839 = vunpack.c.l.b16 %v2799
    %v2840 = vunpack.c.l.b16 %v2800
    %v2841 = vunpack.c.l.b16 %v2801
    %v2842 = vunpack.c.l.b16 %v2802
    %v2843 = vunpack.c.l.b16 %v2803
    %v2844 = vunpack.c.l.b16 %v2804
    %v2845 = vunpack.c.l.b16 %v2805
    %v2846 = vunpack.c.l.b16 %v2806
    %v2847 = vunpack.c.l.b16 %v2807
    %v2848 = vunpack.c.l.b16 %v2808
    %v2849 = vunpack.c.l.b16 %v2809
    %v2850 = vunpack.c.l.b16 %v2810
    %v2851 = vunpack.c.l.b16 %v2811
    %v2852 = vunpack.c.l.b16 %v2812
    %v2853 = vunpack.c.l.b16 %v2813
    %v2854 = vunpack.c.l.b16 %v2814
    %v2855 = vpack.c.b16 %v2840, %v2839
    %v2856 = vpack.c.b16 %v2842, %v2841
    %v2857 = vpack.c.b16 %v2844, %v2843
    %v2858 = vpack.c.b16 %v2846, %v2845
    %v2859 = vpack.c.b16 %v2848, %v2847
    %v2860 = vpack.c.b16 %v2850, %v2849
    %v2861 = vpack.c.b16 %v2852, %v2851
    %v2862 = vpack.c.b16 %v2854, %v2853
    %v2879 = vunpack.c.l.b16 %v2815
    %v2880 = vunpack.c.l.b16 %v2816
    %v2881 = vunpack.c.l.b16 %v2817
    %v2882 = vunpack.c.l.b16 %v2818
    %v2883 = vunpack.c.l.b16 %v2819
    %v2884 = vunpack.c.l.b16 %v2820
    %v2885 = vunpack.c.l.b16 %v2821
    %v2886 = vunpack.c.l.b16 %v2822
    %v2887 = vpack.c.b16 %v2880, %v2879
    %v2888 = vpack.c.b16 %v2882, %v2881
    %v2889 = vpack.c.b16 %v2884, %v2883
    %v2890 = vpack.c.b16 %v2886, %v2885
    %2895 = vmatpush.bf16.xpose.msra.mxu0 0
    %2896 = vmatpush.bf16.xpose.msra.mxu0 0
    %2897 = vmatpush.bf16.xpose.msra.mxu0 0
    %2898 = vmatpush.bf16.xpose.msra.mxu0 0
    %2899 = vmatpush.bf16.xpose.msra.mxu0 %v2890
    %2900 = vmatpush.bf16.xpose.msra.mxu0 %v2889
    %2901 = vmatpush.bf16.xpose.msra.mxu0 %v2888
    %2902 = vmatpush.bf16.xpose.msra.mxu0 %v2887
    %2903 = vmatmul.bf16.gmra.mxu0 %v2855
    %v2904 = vpop.f32.mrf.mxu0
    %v2905 = vadd.f32 0.0, %v2904
    %v2906 = vpop.f32.mrf.mxu0
    %v2907 = vadd.f32 0.0, %v2906
    %2908 = vmatmul.bf16.gmra.mxu0 %v2856
    %v2909 = vpop.f32.mrf.mxu0
    %v2910 = vadd.f32 0.0, %v2909
    %v2911 = vpop.f32.mrf.mxu0
    %v2912 = vadd.f32 0.0, %v2911
    %2913 = vmatmul.bf16.gmra.mxu0 %v2857
    %v2914 = vpop.f32.mrf.mxu0
    %v2915 = vadd.f32 0.0, %v2914
    %v2916 = vpop.f32.mrf.mxu0
    %v2917 = vadd.f32 0.0, %v2916
    %2918 = vmatmul.bf16.gmra.mxu0 %v2858
    %v2919 = vpop.f32.mrf.mxu0
    %v2920 = vadd.f32 0.0, %v2919
    %v2921 = vpop.f32.mrf.mxu0
    %v2922 = vadd.f32 0.0, %v2921
    %2923 = vmatmul.bf16.gmra.mxu0 %v2859
    %v2924 = vpop.f32.mrf.mxu0
    %v2925 = vadd.f32 0.0, %v2924
    %v2926 = vpop.f32.mrf.mxu0
    %v2927 = vadd.f32 0.0, %v2926
    %2928 = vmatmul.bf16.gmra.mxu0 %v2860
    %v2929 = vpop.f32.mrf.mxu0
    %v2930 = vadd.f32 0.0, %v2929
    %v2931 = vpop.f32.mrf.mxu0
    %v2932 = vadd.f32 0.0, %v2931
    %2933 = vmatmul.bf16.gmra.mxu0 %v2861
    %v2934 = vpop.f32.mrf.mxu0
    %v2935 = vadd.f32 0.0, %v2934
    %v2936 = vpop.f32.mrf.mxu0
    %v2937 = vadd.f32 0.0, %v2936
    %2938 = vmatmul.bf16.gmra.mxu0 %v2862
    %v2939 = vpop.f32.mrf.mxu0
    %v2940 = vadd.f32 0.0, %v2939
    %v2941 = vpop.f32.mrf.mxu0
    %v2942 = vadd.f32 0.0, %v2941
    %2943 = vdwg.mxu0
    %v2944 = vsel %vm2783, %v2905, -1e+30
    %v2945 = vsel %vm2784, %v2907, -1e+30
    %v2946 = vsel %vm2785, %v2910, -1e+30
    %v2947 = vsel %vm2786, %v2912, -1e+30
    %v2948 = vsel %vm2787, %v2915, -1e+30
    %v2949 = vsel %vm2788, %v2917, -1e+30
    %v2950 = vsel %vm2789, %v2920, -1e+30
    %v2951 = vsel %vm2790, %v2922, -1e+30
    %v2952 = vsel %vm2791, %v2925, -1e+30
    %v2953 = vsel %vm2792, %v2927, -1e+30
    %v2954 = vsel %vm2793, %v2930, -1e+30
    %v2955 = vsel %vm2794, %v2932, -1e+30
    %v2956 = vsel %vm2795, %v2935, -1e+30
    %v2957 = vsel %vm2796, %v2937, -1e+30
    %v2958 = vsel %vm2797, %v2940, -1e+30
    %v2959 = vsel %vm2798, %v2942, -1e+30
    %v2960 = vsel %vm2387, %v2944, -inf
    %2961 = vmax.xlane.f32.xlu0 %v2960
    %v2962 = vpop.xlane.xlu0 %2961
    %v2963 = vsel %vm2387, %v2945, -inf
    %2964 = vmax.xlane.f32.xlu0 %v2963
    %v2965 = vpop.xlane.xlu0 %2964
    %v2966 = vsel %vm2387, %v2946, -inf
    %2967 = vmax.xlane.f32.xlu0 %v2966
    %v2968 = vpop.xlane.xlu0 %2967
    %v2969 = vsel %vm2387, %v2947, -inf
    %2970 = vmax.xlane.f32.xlu0 %v2969
    %v2971 = vpop.xlane.xlu0 %2970
    %v2972 = vsel %vm2387, %v2948, -inf
    %2973 = vmax.xlane.f32.xlu0 %v2972
    %v2974 = vpop.xlane.xlu0 %2973
    %v2975 = vsel %vm2387, %v2949, -inf
    %2976 = vmax.xlane.f32.xlu0 %v2975
    %v2977 = vpop.xlane.xlu0 %2976
    %v2978 = vsel %vm2387, %v2950, -inf
    %2979 = vmax.xlane.f32.xlu0 %v2978
    %v2980 = vpop.xlane.xlu0 %2979
    %v2981 = vsel %vm2387, %v2951, -inf
    %2982 = vmax.xlane.f32.xlu0 %v2981
    %v2983 = vpop.xlane.xlu0 %2982
    %v2984 = vsel %vm2387, %v2952, -inf
    %2985 = vmax.xlane.f32.xlu0 %v2984
    %v2986 = vpop.xlane.xlu0 %2985
    %v2987 = vsel %vm2387, %v2953, -inf
    %2988 = vmax.xlane.f32.xlu0 %v2987
    %v2989 = vpop.xlane.xlu0 %2988
    %v2990 = vsel %vm2387, %v2954, -inf
    %2991 = vmax.xlane.f32.xlu0 %v2990
    %v2992 = vpop.xlane.xlu0 %2991
    %v2993 = vsel %vm2387, %v2955, -inf
    %2994 = vmax.xlane.f32.xlu0 %v2993
    %v2995 = vpop.xlane.xlu0 %2994
    %v2996 = vsel %vm2387, %v2956, -inf
    %2997 = vmax.xlane.f32.xlu0 %v2996
    %v2998 = vpop.xlane.xlu0 %2997
    %v2999 = vsel %vm2387, %v2957, -inf
    %3000 = vmax.xlane.f32.xlu0 %v2999
    %v3001 = vpop.xlane.xlu0 %3000
    %v3002 = vsel %vm2387, %v2958, -inf
    %3003 = vmax.xlane.f32.xlu0 %v3002
    %v3004 = vpop.xlane.xlu0 %3003
    %v3005 = vsel %vm2387, %v2959, -inf
    %3006 = vmax.xlane.f32.xlu0 %v3005
    %v3007 = vpop.xlane.xlu0 %3006
    %v3008 = vsub.f32 %v2944, %v2962
    %v3009 = vsub.f32 %v2945, %v2965
    %v3010 = vsub.f32 %v2946, %v2968
    %v3011 = vsub.f32 %v2947, %v2971
    %v3012 = vsub.f32 %v2948, %v2974
    %v3013 = vsub.f32 %v2949, %v2977
    %v3014 = vsub.f32 %v2950, %v2980
    %v3015 = vsub.f32 %v2951, %v2983
    %v3016 = vsub.f32 %v2952, %v2986
    %v3017 = vsub.f32 %v2953, %v2989
    %v3018 = vsub.f32 %v2954, %v2992
    %v3019 = vsub.f32 %v2955, %v2995
    %v3020 = vsub.f32 %v2956, %v2998
    %v3021 = vsub.f32 %v2957, %v3001
    %v3022 = vsub.f32 %v2958, %v3004
    %v3023 = vsub.f32 %v2959, %v3007
    %v3024 = vmul.f32 %v3008, 1.442695
    %v3025 = vpow.pop %v3024
    %v3026 = vmul.f32 %v3009, 1.442695
    %v3027 = vpow.pop %v3026
    %v3028 = vmul.f32 %v3010, 1.442695
    %v3029 = vpow.pop %v3028
    %v3030 = vmul.f32 %v3011, 1.442695
    %v3031 = vpow.pop %v3030
    %v3032 = vmul.f32 %v3012, 1.442695
    %v3033 = vpow.pop %v3032
    %v3034 = vmul.f32 %v3013, 1.442695
    %v3035 = vpow.pop %v3034
    %v3036 = vmul.f32 %v3014, 1.442695
    %v3037 = vpow.pop %v3036
    %v3038 = vmul.f32 %v3015, 1.442695
    %v3039 = vpow.pop %v3038
    %v3040 = vmul.f32 %v3016, 1.442695
    %v3041 = vpow.pop %v3040
    %v3042 = vmul.f32 %v3017, 1.442695
    %v3043 = vpow.pop %v3042
    %v3044 = vmul.f32 %v3018, 1.442695
    %v3045 = vpow.pop %v3044
    %v3046 = vmul.f32 %v3019, 1.442695
    %v3047 = vpow.pop %v3046
    %v3048 = vmul.f32 %v3020, 1.442695
    %v3049 = vpow.pop %v3048
    %v3050 = vmul.f32 %v3021, 1.442695
    %v3051 = vpow.pop %v3050
    %v3052 = vmul.f32 %v3022, 1.442695
    %v3053 = vpow.pop %v3052
    %v3054 = vmul.f32 %v3023, 1.442695
    %v3055 = vpow.pop %v3054
    %v3056 = vsel %vm2387, %v3025, 0.0
    %3057 = vadd.xlane.f32.xlu0 %v3056
    %v3058 = vpop.xlane.xlu0 %3057
    %v3059 = vsel %vm2387, %v3027, 0.0
    %3060 = vadd.xlane.f32.xlu0 %v3059
    %v3061 = vpop.xlane.xlu0 %3060
    %v3062 = vsel %vm2387, %v3029, 0.0
    %3063 = vadd.xlane.f32.xlu0 %v3062
    %v3064 = vpop.xlane.xlu0 %3063
    %v3065 = vsel %vm2387, %v3031, 0.0
    %3066 = vadd.xlane.f32.xlu0 %v3065
    %v3067 = vpop.xlane.xlu0 %3066
    %v3068 = vsel %vm2387, %v3033, 0.0
    %3069 = vadd.xlane.f32.xlu0 %v3068
    %v3070 = vpop.xlane.xlu0 %3069
    %v3071 = vsel %vm2387, %v3035, 0.0
    %3072 = vadd.xlane.f32.xlu0 %v3071
    %v3073 = vpop.xlane.xlu0 %3072
    %v3074 = vsel %vm2387, %v3037, 0.0
    %3075 = vadd.xlane.f32.xlu0 %v3074
    %v3076 = vpop.xlane.xlu0 %3075
    %v3077 = vsel %vm2387, %v3039, 0.0
    %3078 = vadd.xlane.f32.xlu0 %v3077
    %v3079 = vpop.xlane.xlu0 %3078
    %v3080 = vsel %vm2387, %v3041, 0.0
    %3081 = vadd.xlane.f32.xlu0 %v3080
    %v3082 = vpop.xlane.xlu0 %3081
    %v3083 = vsel %vm2387, %v3043, 0.0
    %3084 = vadd.xlane.f32.xlu0 %v3083
    %v3085 = vpop.xlane.xlu0 %3084
    %v3086 = vsel %vm2387, %v3045, 0.0
    %3087 = vadd.xlane.f32.xlu0 %v3086
    %v3088 = vpop.xlane.xlu0 %3087
    %v3089 = vsel %vm2387, %v3047, 0.0
    %3090 = vadd.xlane.f32.xlu0 %v3089
    %v3091 = vpop.xlane.xlu0 %3090
    %v3092 = vsel %vm2387, %v3049, 0.0
    %3093 = vadd.xlane.f32.xlu0 %v3092
    %v3094 = vpop.xlane.xlu0 %3093
    %v3095 = vsel %vm2387, %v3051, 0.0
    %3096 = vadd.xlane.f32.xlu0 %v3095
    %v3097 = vpop.xlane.xlu0 %3096
    %v3098 = vsel %vm2387, %v3053, 0.0
    %3099 = vadd.xlane.f32.xlu0 %v3098
    %v3100 = vpop.xlane.xlu0 %3099
    %v3101 = vsel %vm2387, %v3055, 0.0
    %3102 = vadd.xlane.f32.xlu0 %v3101
    %v3103 = vpop.xlane.xlu0 %3102
    %v3104 = vrcp.pop %v3058
    %v3105 = vmul.f32 %v3058, %v3104
    %v3106 = vsub.f32 1.0, %v3105
    %v3107 = vmul.f32 %v3104, %v3106
    %v3108 = vadd.f32 %v3104, %v3107
    %vm3109 = vweird.f32 %v3058
    %vm3110 = vweird.f32 %v3104
    %vm3111 = vmor %vm3109, %vm3110
    %v3112 = vsel %vm3111, %v3104, %v3108
    %v3113 = vand.u32 2147483647, %v3058
    %vm3114 = vcmp.eq.f32.partialorder %v3113, 8.507059e+37
    %v3115 = vand.u32 %v3058, 2147483648
    %v3116 = vor.u32 1.1754944e-38, %v3115
    %v3117 = vsel %vm3114, %v3116, %v3112
    %v3118 = vmul.f32 %v3025, %v3117
    %v3119 = vrcp.pop %v3061
    %v3120 = vmul.f32 %v3061, %v3119
    %v3121 = vsub.f32 1.0, %v3120
    %v3122 = vmul.f32 %v3119, %v3121
    %v3123 = vadd.f32 %v3119, %v3122
    %vm3124 = vweird.f32 %v3061
    %vm3125 = vweird.f32 %v3119
    %vm3126 = vmor %vm3124, %vm3125
    %v3127 = vsel %vm3126, %v3119, %v3123
    %v3128 = vand.u32 2147483647, %v3061
    %vm3129 = vcmp.eq.f32.partialorder %v3128, 8.507059e+37
    %v3130 = vand.u32 %v3061, 2147483648
    %v3131 = vor.u32 1.1754944e-38, %v3130
    %v3132 = vsel %vm3129, %v3131, %v3127
    %v3133 = vmul.f32 %v3027, %v3132
    %v3134 = vrcp.pop %v3064
    %v3135 = vmul.f32 %v3064, %v3134
    %v3136 = vsub.f32 1.0, %v3135
    %v3137 = vmul.f32 %v3134, %v3136
    %v3138 = vadd.f32 %v3134, %v3137
    %vm3139 = vweird.f32 %v3064
    %vm3140 = vweird.f32 %v3134
    %vm3141 = vmor %vm3139, %vm3140
    %v3142 = vsel %vm3141, %v3134, %v3138
    %v3143 = vand.u32 2147483647, %v3064
    %vm3144 = vcmp.eq.f32.partialorder %v3143, 8.507059e+37
    %v3145 = vand.u32 %v3064, 2147483648
    %v3146 = vor.u32 1.1754944e-38, %v3145
    %v3147 = vsel %vm3144, %v3146, %v3142
    %v3148 = vmul.f32 %v3029, %v3147
    %v3149 = vrcp.pop %v3067
    %v3150 = vmul.f32 %v3067, %v3149
    %v3151 = vsub.f32 1.0, %v3150
    %v3152 = vmul.f32 %v3149, %v3151
    %v3153 = vadd.f32 %v3149, %v3152
    %vm3154 = vweird.f32 %v3067
    %vm3155 = vweird.f32 %v3149
    %vm3156 = vmor %vm3154, %vm3155
    %v3157 = vsel %vm3156, %v3149, %v3153
    %v3158 = vand.u32 2147483647, %v3067
    %vm3159 = vcmp.eq.f32.partialorder %v3158, 8.507059e+37
    %v3160 = vand.u32 %v3067, 2147483648
    %v3161 = vor.u32 1.1754944e-38, %v3160
    %v3162 = vsel %vm3159, %v3161, %v3157
    %v3163 = vmul.f32 %v3031, %v3162
    %v3164 = vrcp.pop %v3070
    %v3165 = vmul.f32 %v3070, %v3164
    %v3166 = vsub.f32 1.0, %v3165
    %v3167 = vmul.f32 %v3164, %v3166
    %v3168 = vadd.f32 %v3164, %v3167
    %vm3169 = vweird.f32 %v3070
    %vm3170 = vweird.f32 %v3164
    %vm3171 = vmor %vm3169, %vm3170
    %v3172 = vsel %vm3171, %v3164, %v3168
    %v3173 = vand.u32 2147483647, %v3070
    %vm3174 = vcmp.eq.f32.partialorder %v3173, 8.507059e+37
    %v3175 = vand.u32 %v3070, 2147483648
    %v3176 = vor.u32 1.1754944e-38, %v3175
    %v3177 = vsel %vm3174, %v3176, %v3172
    %v3178 = vmul.f32 %v3033, %v3177
    %v3179 = vrcp.pop %v3073
    %v3180 = vmul.f32 %v3073, %v3179
    %v3181 = vsub.f32 1.0, %v3180
    %v3182 = vmul.f32 %v3179, %v3181
    %v3183 = vadd.f32 %v3179, %v3182
    %vm3184 = vweird.f32 %v3073
    %vm3185 = vweird.f32 %v3179
    %vm3186 = vmor %vm3184, %vm3185
    %v3187 = vsel %vm3186, %v3179, %v3183
    %v3188 = vand.u32 2147483647, %v3073
    %vm3189 = vcmp.eq.f32.partialorder %v3188, 8.507059e+37
    %v3190 = vand.u32 %v3073, 2147483648
    %v3191 = vor.u32 1.1754944e-38, %v3190
    %v3192 = vsel %vm3189, %v3191, %v3187
    %v3193 = vmul.f32 %v3035, %v3192
    %v3194 = vrcp.pop %v3076
    %v3195 = vmul.f32 %v3076, %v3194
    %v3196 = vsub.f32 1.0, %v3195
    %v3197 = vmul.f32 %v3194, %v3196
    %v3198 = vadd.f32 %v3194, %v3197
    %vm3199 = vweird.f32 %v3076
    %vm3200 = vweird.f32 %v3194
    %vm3201 = vmor %vm3199, %vm3200
    %v3202 = vsel %vm3201, %v3194, %v3198
    %v3203 = vand.u32 2147483647, %v3076
    %vm3204 = vcmp.eq.f32.partialorder %v3203, 8.507059e+37
    %v3205 = vand.u32 %v3076, 2147483648
    %v3206 = vor.u32 1.1754944e-38, %v3205
    %v3207 = vsel %vm3204, %v3206, %v3202
    %v3208 = vmul.f32 %v3037, %v3207
    %v3209 = vrcp.pop %v3079
    %v3210 = vmul.f32 %v3079, %v3209
    %v3211 = vsub.f32 1.0, %v3210
    %v3212 = vmul.f32 %v3209, %v3211
    %v3213 = vadd.f32 %v3209, %v3212
    %vm3214 = vweird.f32 %v3079
    %vm3215 = vweird.f32 %v3209
    %vm3216 = vmor %vm3214, %vm3215
    %v3217 = vsel %vm3216, %v3209, %v3213
    %v3218 = vand.u32 2147483647, %v3079
    %vm3219 = vcmp.eq.f32.partialorder %v3218, 8.507059e+37
    %v3220 = vand.u32 %v3079, 2147483648
    %v3221 = vor.u32 1.1754944e-38, %v3220
    %v3222 = vsel %vm3219, %v3221, %v3217
    %v3223 = vmul.f32 %v3039, %v3222
    %v3224 = vrcp.pop %v3082
    %v3225 = vmul.f32 %v3082, %v3224
    %v3226 = vsub.f32 1.0, %v3225
    %v3227 = vmul.f32 %v3224, %v3226
    %v3228 = vadd.f32 %v3224, %v3227
    %vm3229 = vweird.f32 %v3082
    %vm3230 = vweird.f32 %v3224
    %vm3231 = vmor %vm3229, %vm3230
    %v3232 = vsel %vm3231, %v3224, %v3228
    %v3233 = vand.u32 2147483647, %v3082
    %vm3234 = vcmp.eq.f32.partialorder %v3233, 8.507059e+37
    %v3235 = vand.u32 %v3082, 2147483648
    %v3236 = vor.u32 1.1754944e-38, %v3235
    %v3237 = vsel %vm3234, %v3236, %v3232
    %v3238 = vmul.f32 %v3041, %v3237
    %v3239 = vrcp.pop %v3085
    %v3240 = vmul.f32 %v3085, %v3239
    %v3241 = vsub.f32 1.0, %v3240
    %v3242 = vmul.f32 %v3239, %v3241
    %v3243 = vadd.f32 %v3239, %v3242
    %vm3244 = vweird.f32 %v3085
    %vm3245 = vweird.f32 %v3239
    %vm3246 = vmor %vm3244, %vm3245
    %v3247 = vsel %vm3246, %v3239, %v3243
    %v3248 = vand.u32 2147483647, %v3085
    %vm3249 = vcmp.eq.f32.partialorder %v3248, 8.507059e+37
    %v3250 = vand.u32 %v3085, 2147483648
    %v3251 = vor.u32 1.1754944e-38, %v3250
    %v3252 = vsel %vm3249, %v3251, %v3247
    %v3253 = vmul.f32 %v3043, %v3252
    %v3254 = vrcp.pop %v3088
    %v3255 = vmul.f32 %v3088, %v3254
    %v3256 = vsub.f32 1.0, %v3255
    %v3257 = vmul.f32 %v3254, %v3256
    %v3258 = vadd.f32 %v3254, %v3257
    %vm3259 = vweird.f32 %v3088
    %vm3260 = vweird.f32 %v3254
    %vm3261 = vmor %vm3259, %vm3260
    %v3262 = vsel %vm3261, %v3254, %v3258
    %v3263 = vand.u32 2147483647, %v3088
    %vm3264 = vcmp.eq.f32.partialorder %v3263, 8.507059e+37
    %v3265 = vand.u32 %v3088, 2147483648
    %v3266 = vor.u32 1.1754944e-38, %v3265
    %v3267 = vsel %vm3264, %v3266, %v3262
    %v3268 = vmul.f32 %v3045, %v3267
    %v3269 = vrcp.pop %v3091
    %v3270 = vmul.f32 %v3091, %v3269
    %v3271 = vsub.f32 1.0, %v3270
    %v3272 = vmul.f32 %v3269, %v3271
    %v3273 = vadd.f32 %v3269, %v3272
    %vm3274 = vweird.f32 %v3091
    %vm3275 = vweird.f32 %v3269
    %vm3276 = vmor %vm3274, %vm3275
    %v3277 = vsel %vm3276, %v3269, %v3273
    %v3278 = vand.u32 2147483647, %v3091
    %vm3279 = vcmp.eq.f32.partialorder %v3278, 8.507059e+37
    %v3280 = vand.u32 %v3091, 2147483648
    %v3281 = vor.u32 1.1754944e-38, %v3280
    %v3282 = vsel %vm3279, %v3281, %v3277
    %v3283 = vmul.f32 %v3047, %v3282
    %v3284 = vrcp.pop %v3094
    %v3285 = vmul.f32 %v3094, %v3284
    %v3286 = vsub.f32 1.0, %v3285
    %v3287 = vmul.f32 %v3284, %v3286
    %v3288 = vadd.f32 %v3284, %v3287
    %vm3289 = vweird.f32 %v3094
    %vm3290 = vweird.f32 %v3284
    %vm3291 = vmor %vm3289, %vm3290
    %v3292 = vsel %vm3291, %v3284, %v3288
    %v3293 = vand.u32 2147483647, %v3094
    %vm3294 = vcmp.eq.f32.partialorder %v3293, 8.507059e+37
    %v3295 = vand.u32 %v3094, 2147483648
    %v3296 = vor.u32 1.1754944e-38, %v3295
    %v3297 = vsel %vm3294, %v3296, %v3292
    %v3298 = vmul.f32 %v3049, %v3297
    %v3299 = vrcp.pop %v3097
    %v3300 = vmul.f32 %v3097, %v3299
    %v3301 = vsub.f32 1.0, %v3300
    %v3302 = vmul.f32 %v3299, %v3301
    %v3303 = vadd.f32 %v3299, %v3302
    %vm3304 = vweird.f32 %v3097
    %vm3305 = vweird.f32 %v3299
    %vm3306 = vmor %vm3304, %vm3305
    %v3307 = vsel %vm3306, %v3299, %v3303
    %v3308 = vand.u32 2147483647, %v3097
    %vm3309 = vcmp.eq.f32.partialorder %v3308, 8.507059e+37
    %v3310 = vand.u32 %v3097, 2147483648
    %v3311 = vor.u32 1.1754944e-38, %v3310
    %v3312 = vsel %vm3309, %v3311, %v3307
    %v3313 = vmul.f32 %v3051, %v3312
    %v3314 = vrcp.pop %v3100
    %v3315 = vmul.f32 %v3100, %v3314
    %v3316 = vsub.f32 1.0, %v3315
    %v3317 = vmul.f32 %v3314, %v3316
    %v3318 = vadd.f32 %v3314, %v3317
    %vm3319 = vweird.f32 %v3100
    %vm3320 = vweird.f32 %v3314
    %vm3321 = vmor %vm3319, %vm3320
    %v3322 = vsel %vm3321, %v3314, %v3318
    %v3323 = vand.u32 2147483647, %v3100
    %vm3324 = vcmp.eq.f32.partialorder %v3323, 8.507059e+37
    %v3325 = vand.u32 %v3100, 2147483648
    %v3326 = vor.u32 1.1754944e-38, %v3325
    %v3327 = vsel %vm3324, %v3326, %v3322
    %v3328 = vmul.f32 %v3053, %v3327
    %v3329 = vrcp.pop %v3103
    %v3330 = vmul.f32 %v3103, %v3329
    %v3331 = vsub.f32 1.0, %v3330
    %v3332 = vmul.f32 %v3329, %v3331
    %v3333 = vadd.f32 %v3329, %v3332
    %vm3334 = vweird.f32 %v3103
    %vm3335 = vweird.f32 %v3329
    %vm3336 = vmor %vm3334, %vm3335
    %v3337 = vsel %vm3336, %v3329, %v3333
    %v3338 = vand.u32 2147483647, %v3103
    %vm3339 = vcmp.eq.f32.partialorder %v3338, 8.507059e+37
    %v3340 = vand.u32 %v3103, 2147483648
    %v3341 = vor.u32 1.1754944e-38, %v3340
    %v3342 = vsel %vm3339, %v3341, %v3337
    %v3343 = vmul.f32 %v3055, %v3342
    %v3344 = vpack.c.bf16 %v3133, %v3118
    %v3345 = vpack.c.bf16 %v3163, %v3148
    %v3346 = vpack.c.bf16 %v3193, %v3178
    %v3347 = vpack.c.bf16 %v3223, %v3208
    %v3348 = vpack.c.bf16 %v3253, %v3238
    %v3349 = vpack.c.bf16 %v3283, %v3268
    %v3350 = vpack.c.bf16 %v3313, %v3298
    %v3351 = vpack.c.bf16 %v3343, %v3328
    %v3352 = vld [vmem:[#allocation5] sm:$0xf]
    %v3353 = vld [vmem:[#allocation5 + $0x4] sm:$0xf]
    %v3354 = vld [vmem:[#allocation5 + $0x8] sm:$0xf]
    %v3355 = vld [vmem:[#allocation5 + $0xc] sm:$0xf]
    %v3356 = vld [vmem:[#allocation5 + $0x10] sm:$0xf]
    %v3357 = vld [vmem:[#allocation5 + $0x14] sm:$0xf]
    %v3358 = vld [vmem:[#allocation5 + $0x18] sm:$0xf]
    %v3359 = vld [vmem:[#allocation5 + $0x1c] sm:$0xf]
    %v3368 = vunpack.c.l.b16 %v3352
    %v3369 = vunpack.c.l.b16 %v3353
    %v3370 = vunpack.c.l.b16 %v3354
    %v3371 = vunpack.c.l.b16 %v3355
    %v3372 = vunpack.c.l.b16 %v3356
    %v3373 = vunpack.c.l.b16 %v3357
    %v3374 = vunpack.c.l.b16 %v3358
    %v3375 = vunpack.c.l.b16 %v3359
    %v3376 = vpack.c.b16 %v3369, %v3368
    %v3377 = vpack.c.b16 %v3371, %v3370
    %v3378 = vpack.c.b16 %v3373, %v3372
    %v3379 = vpack.c.b16 %v3375, %v3374
    %v3385 = vsel %vm2387, %v3344, 0
    %v3388 = vsel %vm2387, %v3345, 0
    %v3391 = vsel %vm2387, %v3346, 0
    %v3394 = vsel %vm2387, %v3347, 0
    %v3397 = vsel %vm2387, %v3348, 0
    %v3400 = vsel %vm2387, %v3349, 0
    %v3403 = vsel %vm2387, %v3350, 0
    %v3406 = vsel %vm2387, %v3351, 0
    %3408 = vmatpush.bf16.msra.mxu0 0
    %3409 = vmatpush.bf16.msra.mxu0 0
    %3410 = vmatpush.bf16.msra.mxu0 0
    %3411 = vmatpush.bf16.msra.mxu0 0
    %3412 = vmatpush.bf16.msra.mxu0 %v3379
    %3413 = vmatpush.bf16.msra.mxu0 %v3378
    %3414 = vmatpush.bf16.msra.mxu0 %v3377
    %3415 = vmatpush.bf16.msra.mxu0 %v3376
    %3416 = vmatmul.bf16.gmra.mxu0 %v3385
    %v3417 = vpop.f32.mrf.mxu0
    %v3418 = vadd.f32 0.0, %v3417
    %v3419 = vpop.f32.mrf.mxu0
    %v3420 = vadd.f32 0.0, %v3419
    %3421 = vmatmul.bf16.gmra.mxu0 %v3388
    %v3422 = vpop.f32.mrf.mxu0
    %v3423 = vadd.f32 0.0, %v3422
    %v3424 = vpop.f32.mrf.mxu0
    %v3425 = vadd.f32 0.0, %v3424
    %3426 = vmatmul.bf16.gmra.mxu0 %v3391
    %v3427 = vpop.f32.mrf.mxu0
    %v3428 = vadd.f32 0.0, %v3427
    %v3429 = vpop.f32.mrf.mxu0
    %v3430 = vadd.f32 0.0, %v3429
    %3431 = vmatmul.bf16.gmra.mxu0 %v3394
    %v3432 = vpop.f32.mrf.mxu0
    %v3433 = vadd.f32 0.0, %v3432
    %v3434 = vpop.f32.mrf.mxu0
    %v3435 = vadd.f32 0.0, %v3434
    %3436 = vmatmul.bf16.gmra.mxu0 %v3397
    %v3437 = vpop.f32.mrf.mxu0
    %v3438 = vadd.f32 0.0, %v3437
    %v3439 = vpop.f32.mrf.mxu0
    %v3440 = vadd.f32 0.0, %v3439
    %3441 = vmatmul.bf16.gmra.mxu0 %v3400
    %v3442 = vpop.f32.mrf.mxu0
    %v3443 = vadd.f32 0.0, %v3442
    %v3444 = vpop.f32.mrf.mxu0
    %v3445 = vadd.f32 0.0, %v3444
    %3446 = vmatmul.bf16.gmra.mxu0 %v3403
    %v3447 = vpop.f32.mrf.mxu0
    %v3448 = vadd.f32 0.0, %v3447
    %v3449 = vpop.f32.mrf.mxu0
    %v3450 = vadd.f32 0.0, %v3449
    %3451 = vmatmul.bf16.gmra.mxu0 %v3406
    %v3452 = vpop.f32.mrf.mxu0
    %v3453 = vadd.f32 0.0, %v3452
    %v3454 = vpop.f32.mrf.mxu0
    %v3455 = vadd.f32 0.0, %v3454
    %3456 = vdwg.mxu0
    %v3457 = vpack.c.bf16 %v3420, %v3418
    %v3458 = vpack.c.bf16 %v3430, %v3428
    %v3459 = vpack.c.bf16 %v3440, %v3438
    %v3460 = vpack.c.bf16 %v3450, %v3448
    %v3461 = vpack.c.bf16 %v3425, %v3423
    %v3462 = vpack.c.bf16 %v3435, %v3433
    %v3463 = vpack.c.bf16 %v3445, %v3443
    %v3464 = vpack.c.bf16 %v3455, %v3453
    %v3465 = vld [vmem:[#allocation15] sm:$0xff]
    %v3466 = vld [vmem:[#allocation15 + $0x8] sm:$0xff]
    %v3467 = vld [vmem:[#allocation15 + $0x10] sm:$0xff]
    %v3468 = vld [vmem:[#allocation15 + $0x18] sm:$0xff]
    %v3469 = vld [vmem:[#allocation15 + $0x20] sm:$0xff]
    %v3470 = vld [vmem:[#allocation15 + $0x28] sm:$0xff]
    %v3471 = vld [vmem:[#allocation15 + $0x30] sm:$0xff]
    %v3472 = vld [vmem:[#allocation15 + $0x38] sm:$0xff]
    %v3473 = vld [vmem:[#allocation15 + $0x40] sm:$0xff]
    %v3474 = vld [vmem:[#allocation15 + $0x48] sm:$0xff]
    %v3475 = vld [vmem:[#allocation15 + $0x50] sm:$0xff]
    %v3476 = vld [vmem:[#allocation15 + $0x58] sm:$0xff]
    %v3477 = vld [vmem:[#allocation15 + $0x60] sm:$0xff]
    %v3478 = vld [vmem:[#allocation15 + $0x68] sm:$0xff]
    %v3479 = vld [vmem:[#allocation15 + $0x70] sm:$0xff]
    %v3480 = vld [vmem:[#allocation15 + $0x78] sm:$0xff]
    %v3481 = vld [vmem:[#allocation15 + $0x80] sm:$0xff]
    %v3482 = vld [vmem:[#allocation15 + $0x88] sm:$0xff]
    %v3483 = vld [vmem:[#allocation15 + $0x90] sm:$0xff]
    %v3484 = vld [vmem:[#allocation15 + $0x98] sm:$0xff]
    %v3485 = vld [vmem:[#allocation15 + $0xa0] sm:$0xff]
    %v3486 = vld [vmem:[#allocation15 + $0xa8] sm:$0xff]
    %v3487 = vld [vmem:[#allocation15 + $0xb0] sm:$0xff]
    %v3488 = vld [vmem:[#allocation15 + $0xb8] sm:$0xff]
    %v3489 = vld [vmem:[#allocation15 + $0xc0] sm:$0xff]
    %v3490 = vld [vmem:[#allocation15 + $0xc8] sm:$0xff]
    %v3491 = vld [vmem:[#allocation15 + $0xd0] sm:$0xff]
    %v3492 = vld [vmem:[#allocation15 + $0xd8] sm:$0xff]
    %v3493 = vld [vmem:[#allocation15 + $0xe0] sm:$0xff]
    %v3494 = vld [vmem:[#allocation15 + $0xe8] sm:$0xff]
    %v3495 = vld [vmem:[#allocation15 + $0xf0] sm:$0xff]
    %v3496 = vld [vmem:[#allocation15 + $0xf8] sm:$0xff]
    %v3497 = vld [vmem:[#allocation15 + $0x100] sm:$0xff]
    %v3498 = vld [vmem:[#allocation15 + $0x108] sm:$0xff]
    %v3499 = vld [vmem:[#allocation15 + $0x110] sm:$0xff]
    %v3500 = vld [vmem:[#allocation15 + $0x118] sm:$0xff]
    %v3501 = vld [vmem:[#allocation15 + $0x120] sm:$0xff]
    %v3502 = vld [vmem:[#allocation15 + $0x128] sm:$0xff]
    %v3503 = vld [vmem:[#allocation15 + $0x130] sm:$0xff]
    %v3504 = vld [vmem:[#allocation15 + $0x138] sm:$0xff]
    %v3505 = vld [vmem:[#allocation15 + $0x140] sm:$0xff]
    %v3506 = vld [vmem:[#allocation15 + $0x148] sm:$0xff]
    %v3507 = vld [vmem:[#allocation15 + $0x150] sm:$0xff]
    %v3508 = vld [vmem:[#allocation15 + $0x158] sm:$0xff]
    %v3509 = vld [vmem:[#allocation15 + $0x160] sm:$0xff]
    %v3510 = vld [vmem:[#allocation15 + $0x168] sm:$0xff]
    %v3511 = vld [vmem:[#allocation15 + $0x170] sm:$0xff]
    %v3512 = vld [vmem:[#allocation15 + $0x178] sm:$0xff]
    %v3513 = vld [vmem:[#allocation15 + $0x180] sm:$0xff]
    %v3514 = vld [vmem:[#allocation15 + $0x188] sm:$0xff]
    %v3515 = vld [vmem:[#allocation15 + $0x190] sm:$0xff]
    %v3516 = vld [vmem:[#allocation15 + $0x198] sm:$0xff]
    %v3517 = vld [vmem:[#allocation15 + $0x1a0] sm:$0xff]
    %v3518 = vld [vmem:[#allocation15 + $0x1a8] sm:$0xff]
    %v3519 = vld [vmem:[#allocation15 + $0x1b0] sm:$0xff]
    %v3520 = vld [vmem:[#allocation15 + $0x1b8] sm:$0xff]
    %v3521 = vld [vmem:[#allocation15 + $0x1c0] sm:$0xff]
    %v3522 = vld [vmem:[#allocation15 + $0x1c8] sm:$0xff]
    %v3523 = vld [vmem:[#allocation15 + $0x1d0] sm:$0xff]
    %v3524 = vld [vmem:[#allocation15 + $0x1d8] sm:$0xff]
    %v3525 = vld [vmem:[#allocation15 + $0x1e0] sm:$0xff]
    %v3526 = vld [vmem:[#allocation15 + $0x1e8] sm:$0xff]
    %v3527 = vld [vmem:[#allocation15 + $0x1f0] sm:$0xff]
    %v3528 = vld [vmem:[#allocation15 + $0x1f8] sm:$0xff]
    %v3529 = vld [vmem:[#allocation15 + $0x200] sm:$0xff]
    %v3530 = vld [vmem:[#allocation15 + $0x208] sm:$0xff]
    %v3531 = vld [vmem:[#allocation15 + $0x210] sm:$0xff]
    %v3532 = vld [vmem:[#allocation15 + $0x218] sm:$0xff]
    %v3533 = vld [vmem:[#allocation15 + $0x220] sm:$0xff]
    %v3534 = vld [vmem:[#allocation15 + $0x228] sm:$0xff]
    %v3535 = vld [vmem:[#allocation15 + $0x230] sm:$0xff]
    %v3536 = vld [vmem:[#allocation15 + $0x238] sm:$0xff]
    %v3537 = vld [vmem:[#allocation15 + $0x240] sm:$0xff]
    %v3538 = vld [vmem:[#allocation15 + $0x248] sm:$0xff]
    %v3539 = vld [vmem:[#allocation15 + $0x250] sm:$0xff]
    %v3540 = vld [vmem:[#allocation15 + $0x258] sm:$0xff]
    %v3541 = vld [vmem:[#allocation15 + $0x260] sm:$0xff]
    %v3542 = vld [vmem:[#allocation15 + $0x268] sm:$0xff]
    %v3543 = vld [vmem:[#allocation15 + $0x270] sm:$0xff]
    %v3544 = vld [vmem:[#allocation15 + $0x278] sm:$0xff]
    %v3545 = vld [vmem:[#allocation15 + $0x280] sm:$0xff]
    %v3546 = vld [vmem:[#allocation15 + $0x288] sm:$0xff]
    %v3547 = vld [vmem:[#allocation15 + $0x290] sm:$0xff]
    %v3548 = vld [vmem:[#allocation15 + $0x298] sm:$0xff]
    %v3549 = vld [vmem:[#allocation15 + $0x2a0] sm:$0xff]
    %v3550 = vld [vmem:[#allocation15 + $0x2a8] sm:$0xff]
    %v3551 = vld [vmem:[#allocation15 + $0x2b0] sm:$0xff]
    %v3552 = vld [vmem:[#allocation15 + $0x2b8] sm:$0xff]
    %v3553 = vld [vmem:[#allocation15 + $0x2c0] sm:$0xff]
    %v3554 = vld [vmem:[#allocation15 + $0x2c8] sm:$0xff]
    %v3555 = vld [vmem:[#allocation15 + $0x2d0] sm:$0xff]
    %v3556 = vld [vmem:[#allocation15 + $0x2d8] sm:$0xff]
    %v3557 = vld [vmem:[#allocation15 + $0x2e0] sm:$0xff]
    %v3558 = vld [vmem:[#allocation15 + $0x2e8] sm:$0xff]
    %v3559 = vld [vmem:[#allocation15 + $0x2f0] sm:$0xff]
    %v3560 = vld [vmem:[#allocation15 + $0x2f8] sm:$0xff]
    %v3561 = vld [vmem:[#allocation15 + $0x300] sm:$0xff]
    %v3562 = vld [vmem:[#allocation15 + $0x308] sm:$0xff]
    %v3563 = vld [vmem:[#allocation15 + $0x310] sm:$0xff]
    %v3564 = vld [vmem:[#allocation15 + $0x318] sm:$0xff]
    %v3565 = vld [vmem:[#allocation15 + $0x320] sm:$0xff]
    %v3566 = vld [vmem:[#allocation15 + $0x328] sm:$0xff]
    %v3567 = vld [vmem:[#allocation15 + $0x330] sm:$0xff]
    %v3568 = vld [vmem:[#allocation15 + $0x338] sm:$0xff]
    %v3569 = vld [vmem:[#allocation15 + $0x340] sm:$0xff]
    %v3570 = vld [vmem:[#allocation15 + $0x348] sm:$0xff]
    %v3571 = vld [vmem:[#allocation15 + $0x350] sm:$0xff]
    %v3572 = vld [vmem:[#allocation15 + $0x358] sm:$0xff]
    %v3573 = vld [vmem:[#allocation15 + $0x360] sm:$0xff]
    %v3574 = vld [vmem:[#allocation15 + $0x368] sm:$0xff]
    %v3575 = vld [vmem:[#allocation15 + $0x370] sm:$0xff]
    %v3576 = vld [vmem:[#allocation15 + $0x378] sm:$0xff]
    %v3577 = vld [vmem:[#allocation15 + $0x380] sm:$0xff]
    %v3578 = vld [vmem:[#allocation15 + $0x388] sm:$0xff]
    %v3579 = vld [vmem:[#allocation15 + $0x390] sm:$0xff]
    %v3580 = vld [vmem:[#allocation15 + $0x398] sm:$0xff]
    %v3581 = vld [vmem:[#allocation15 + $0x3a0] sm:$0xff]
    %v3582 = vld [vmem:[#allocation15 + $0x3a8] sm:$0xff]
    %v3583 = vld [vmem:[#allocation15 + $0x3b0] sm:$0xff]
    %v3584 = vld [vmem:[#allocation15 + $0x3b8] sm:$0xff]
    %v3585 = vld [vmem:[#allocation15 + $0x3c0] sm:$0xff]
    %v3586 = vld [vmem:[#allocation15 + $0x3c8] sm:$0xff]
    %v3587 = vld [vmem:[#allocation15 + $0x3d0] sm:$0xff]
    %v3588 = vld [vmem:[#allocation15 + $0x3d8] sm:$0xff]
    %v3589 = vld [vmem:[#allocation15 + $0x3e0] sm:$0xff]
    %v3590 = vld [vmem:[#allocation15 + $0x3e8] sm:$0xff]
    %v3591 = vld [vmem:[#allocation15 + $0x3f0] sm:$0xff]
    %v3592 = vld [vmem:[#allocation15 + $0x3f8] sm:$0xff]
    %v3721 = vunpack.c.l.b16 %v3465
    %v3722 = vunpack.c.h.b16 %v3465
    %v3723 = vunpack.c.l.b16 %v3466
    %v3724 = vunpack.c.h.b16 %v3466
    %v3725 = vunpack.c.l.b16 %v3467
    %v3726 = vunpack.c.h.b16 %v3467
    %v3727 = vunpack.c.l.b16 %v3468
    %v3728 = vunpack.c.h.b16 %v3468
    %v3729 = vunpack.c.l.b16 %v3469
    %v3730 = vunpack.c.h.b16 %v3469
    %v3731 = vunpack.c.l.b16 %v3470
    %v3732 = vunpack.c.h.b16 %v3470
    %v3733 = vunpack.c.l.b16 %v3471
    %v3734 = vunpack.c.h.b16 %v3471
    %v3735 = vunpack.c.l.b16 %v3472
    %v3736 = vunpack.c.h.b16 %v3472
    %v3737 = vunpack.c.l.b16 %v3473
    %v3738 = vunpack.c.h.b16 %v3473
    %v3739 = vunpack.c.l.b16 %v3474
    %v3740 = vunpack.c.h.b16 %v3474
    %v3741 = vunpack.c.l.b16 %v3475
    %v3742 = vunpack.c.h.b16 %v3475
    %v3743 = vunpack.c.l.b16 %v3476
    %v3744 = vunpack.c.h.b16 %v3476
    %v3745 = vunpack.c.l.b16 %v3477
    %v3746 = vunpack.c.h.b16 %v3477
    %v3747 = vunpack.c.l.b16 %v3478
    %v3748 = vunpack.c.h.b16 %v3478
    %v3749 = vunpack.c.l.b16 %v3479
    %v3750 = vunpack.c.h.b16 %v3479
    %v3751 = vunpack.c.l.b16 %v3480
    %v3752 = vunpack.c.h.b16 %v3480
    %v3753 = vunpack.c.l.b16 %v3481
    %v3754 = vunpack.c.h.b16 %v3481
    %v3755 = vunpack.c.l.b16 %v3482
    %v3756 = vunpack.c.h.b16 %v3482
    %v3757 = vunpack.c.l.b16 %v3483
    %v3758 = vunpack.c.h.b16 %v3483
    %v3759 = vunpack.c.l.b16 %v3484
    %v3760 = vunpack.c.h.b16 %v3484
    %v3761 = vunpack.c.l.b16 %v3485
    %v3762 = vunpack.c.h.b16 %v3485
    %v3763 = vunpack.c.l.b16 %v3486
    %v3764 = vunpack.c.h.b16 %v3486
    %v3765 = vunpack.c.l.b16 %v3487
    %v3766 = vunpack.c.h.b16 %v3487
    %v3767 = vunpack.c.l.b16 %v3488
    %v3768 = vunpack.c.h.b16 %v3488
    %v3769 = vunpack.c.l.b16 %v3489
    %v3770 = vunpack.c.h.b16 %v3489
    %v3771 = vunpack.c.l.b16 %v3490
    %v3772 = vunpack.c.h.b16 %v3490
    %v3773 = vunpack.c.l.b16 %v3491
    %v3774 = vunpack.c.h.b16 %v3491
    %v3775 = vunpack.c.l.b16 %v3492
    %v3776 = vunpack.c.h.b16 %v3492
    %v3777 = vunpack.c.l.b16 %v3493
    %v3778 = vunpack.c.h.b16 %v3493
    %v3779 = vunpack.c.l.b16 %v3494
    %v3780 = vunpack.c.h.b16 %v3494
    %v3781 = vunpack.c.l.b16 %v3495
    %v3782 = vunpack.c.h.b16 %v3495
    %v3783 = vunpack.c.l.b16 %v3496
    %v3784 = vunpack.c.h.b16 %v3496
    %v3785 = vunpack.c.l.b16 %v3497
    %v3786 = vunpack.c.h.b16 %v3497
    %v3787 = vunpack.c.l.b16 %v3498
    %v3788 = vunpack.c.h.b16 %v3498
    %v3789 = vunpack.c.l.b16 %v3499
    %v3790 = vunpack.c.h.b16 %v3499
    %v3791 = vunpack.c.l.b16 %v3500
    %v3792 = vunpack.c.h.b16 %v3500
    %v3793 = vunpack.c.l.b16 %v3501
    %v3794 = vunpack.c.h.b16 %v3501
    %v3795 = vunpack.c.l.b16 %v3502
    %v3796 = vunpack.c.h.b16 %v3502
    %v3797 = vunpack.c.l.b16 %v3503
    %v3798 = vunpack.c.h.b16 %v3503
    %v3799 = vunpack.c.l.b16 %v3504
    %v3800 = vunpack.c.h.b16 %v3504
    %v3801 = vunpack.c.l.b16 %v3505
    %v3802 = vunpack.c.h.b16 %v3505
    %v3803 = vunpack.c.l.b16 %v3506
    %v3804 = vunpack.c.h.b16 %v3506
    %v3805 = vunpack.c.l.b16 %v3507
    %v3806 = vunpack.c.h.b16 %v3507
    %v3807 = vunpack.c.l.b16 %v3508
    %v3808 = vunpack.c.h.b16 %v3508
    %v3809 = vunpack.c.l.b16 %v3509
    %v3810 = vunpack.c.h.b16 %v3509
    %v3811 = vunpack.c.l.b16 %v3510
    %v3812 = vunpack.c.h.b16 %v3510
    %v3813 = vunpack.c.l.b16 %v3511
    %v3814 = vunpack.c.h.b16 %v3511
    %v3815 = vunpack.c.l.b16 %v3512
    %v3816 = vunpack.c.h.b16 %v3512
    %v3817 = vunpack.c.l.b16 %v3513
    %v3818 = vunpack.c.h.b16 %v3513
    %v3819 = vunpack.c.l.b16 %v3514
    %v3820 = vunpack.c.h.b16 %v3514
    %v3821 = vunpack.c.l.b16 %v3515
    %v3822 = vunpack.c.h.b16 %v3515
    %v3823 = vunpack.c.l.b16 %v3516
    %v3824 = vunpack.c.h.b16 %v3516
    %v3825 = vunpack.c.l.b16 %v3517
    %v3826 = vunpack.c.h.b16 %v3517
    %v3827 = vunpack.c.l.b16 %v3518
    %v3828 = vunpack.c.h.b16 %v3518
    %v3829 = vunpack.c.l.b16 %v3519
    %v3830 = vunpack.c.h.b16 %v3519
    %v3831 = vunpack.c.l.b16 %v3520
    %v3832 = vunpack.c.h.b16 %v3520
    %v3833 = vunpack.c.l.b16 %v3521
    %v3834 = vunpack.c.h.b16 %v3521
    %v3835 = vunpack.c.l.b16 %v3522
    %v3836 = vunpack.c.h.b16 %v3522
    %v3837 = vunpack.c.l.b16 %v3523
    %v3838 = vunpack.c.h.b16 %v3523
    %v3839 = vunpack.c.l.b16 %v3524
    %v3840 = vunpack.c.h.b16 %v3524
    %v3841 = vunpack.c.l.b16 %v3525
    %v3842 = vunpack.c.h.b16 %v3525
    %v3843 = vunpack.c.l.b16 %v3526
    %v3844 = vunpack.c.h.b16 %v3526
    %v3845 = vunpack.c.l.b16 %v3527
    %v3846 = vunpack.c.h.b16 %v3527
    %v3847 = vunpack.c.l.b16 %v3528
    %v3848 = vunpack.c.h.b16 %v3528
    %v3849 = vunpack.c.l.b16 %v3529
    %v3850 = vunpack.c.h.b16 %v3529
    %v3851 = vunpack.c.l.b16 %v3530
    %v3852 = vunpack.c.h.b16 %v3530
    %v3853 = vunpack.c.l.b16 %v3531
    %v3854 = vunpack.c.h.b16 %v3531
    %v3855 = vunpack.c.l.b16 %v3532
    %v3856 = vunpack.c.h.b16 %v3532
    %v3857 = vunpack.c.l.b16 %v3533
    %v3858 = vunpack.c.h.b16 %v3533
    %v3859 = vunpack.c.l.b16 %v3534
    %v3860 = vunpack.c.h.b16 %v3534
    %v3861 = vunpack.c.l.b16 %v3535
    %v3862 = vunpack.c.h.b16 %v3535
    %v3863 = vunpack.c.l.b16 %v3536
    %v3864 = vunpack.c.h.b16 %v3536
    %v3865 = vunpack.c.l.b16 %v3537
    %v3866 = vunpack.c.h.b16 %v3537
    %v3867 = vunpack.c.l.b16 %v3538
    %v3868 = vunpack.c.h.b16 %v3538
    %v3869 = vunpack.c.l.b16 %v3539
    %v3870 = vunpack.c.h.b16 %v3539
    %v3871 = vunpack.c.l.b16 %v3540
    %v3872 = vunpack.c.h.b16 %v3540
    %v3873 = vunpack.c.l.b16 %v3541
    %v3874 = vunpack.c.h.b16 %v3541
    %v3875 = vunpack.c.l.b16 %v3542
    %v3876 = vunpack.c.h.b16 %v3542
    %v3877 = vunpack.c.l.b16 %v3543
    %v3878 = vunpack.c.h.b16 %v3543
    %v3879 = vunpack.c.l.b16 %v3544
    %v3880 = vunpack.c.h.b16 %v3544
    %v3881 = vunpack.c.l.b16 %v3545
    %v3882 = vunpack.c.h.b16 %v3545
    %v3883 = vunpack.c.l.b16 %v3546
    %v3884 = vunpack.c.h.b16 %v3546
    %v3885 = vunpack.c.l.b16 %v3547
    %v3886 = vunpack.c.h.b16 %v3547
    %v3887 = vunpack.c.l.b16 %v3548
    %v3888 = vunpack.c.h.b16 %v3548
    %v3889 = vunpack.c.l.b16 %v3549
    %v3890 = vunpack.c.h.b16 %v3549
    %v3891 = vunpack.c.l.b16 %v3550
    %v3892 = vunpack.c.h.b16 %v3550
    %v3893 = vunpack.c.l.b16 %v3551
    %v3894 = vunpack.c.h.b16 %v3551
    %v3895 = vunpack.c.l.b16 %v3552
    %v3896 = vunpack.c.h.b16 %v3552
    %v3897 = vunpack.c.l.b16 %v3553
    %v3898 = vunpack.c.h.b16 %v3553
    %v3899 = vunpack.c.l.b16 %v3554
    %v3900 = vunpack.c.h.b16 %v3554
    %v3901 = vunpack.c.l.b16 %v3555
    %v3902 = vunpack.c.h.b16 %v3555
    %v3903 = vunpack.c.l.b16 %v3556
    %v3904 = vunpack.c.h.b16 %v3556
    %v3905 = vunpack.c.l.b16 %v3557
    %v3906 = vunpack.c.h.b16 %v3557
    %v3907 = vunpack.c.l.b16 %v3558
    %v3908 = vunpack.c.h.b16 %v3558
    %v3909 = vunpack.c.l.b16 %v3559
    %v3910 = vunpack.c.h.b16 %v3559
    %v3911 = vunpack.c.l.b16 %v3560
    %v3912 = vunpack.c.h.b16 %v3560
    %v3913 = vunpack.c.l.b16 %v3561
    %v3914 = vunpack.c.h.b16 %v3561
    %v3915 = vunpack.c.l.b16 %v3562
    %v3916 = vunpack.c.h.b16 %v3562
    %v3917 = vunpack.c.l.b16 %v3563
    %v3918 = vunpack.c.h.b16 %v3563
    %v3919 = vunpack.c.l.b16 %v3564
    %v3920 = vunpack.c.h.b16 %v3564
    %v3921 = vunpack.c.l.b16 %v3565
    %v3922 = vunpack.c.h.b16 %v3565
    %v3923 = vunpack.c.l.b16 %v3566
    %v3924 = vunpack.c.h.b16 %v3566
    %v3925 = vunpack.c.l.b16 %v3567
    %v3926 = vunpack.c.h.b16 %v3567
    %v3927 = vunpack.c.l.b16 %v3568
    %v3928 = vunpack.c.h.b16 %v3568
    %v3929 = vunpack.c.l.b16 %v3569
    %v3930 = vunpack.c.h.b16 %v3569
    %v3931 = vunpack.c.l.b16 %v3570
    %v3932 = vunpack.c.h.b16 %v3570
    %v3933 = vunpack.c.l.b16 %v3571
    %v3934 = vunpack.c.h.b16 %v3571
    %v3935 = vunpack.c.l.b16 %v3572
    %v3936 = vunpack.c.h.b16 %v3572
    %v3937 = vunpack.c.l.b16 %v3573
    %v3938 = vunpack.c.h.b16 %v3573
    %v3939 = vunpack.c.l.b16 %v3574
    %v3940 = vunpack.c.h.b16 %v3574
    %v3941 = vunpack.c.l.b16 %v3575
    %v3942 = vunpack.c.h.b16 %v3575
    %v3943 = vunpack.c.l.b16 %v3576
    %v3944 = vunpack.c.h.b16 %v3576
    %v3945 = vunpack.c.l.b16 %v3577
    %v3946 = vunpack.c.h.b16 %v3577
    %v3947 = vunpack.c.l.b16 %v3578
    %v3948 = vunpack.c.h.b16 %v3578
    %v3949 = vunpack.c.l.b16 %v3579
    %v3950 = vunpack.c.h.b16 %v3579
    %v3951 = vunpack.c.l.b16 %v3580
    %v3952 = vunpack.c.h.b16 %v3580
    %v3953 = vunpack.c.l.b16 %v3581
    %v3954 = vunpack.c.h.b16 %v3581
    %v3955 = vunpack.c.l.b16 %v3582
    %v3956 = vunpack.c.h.b16 %v3582
    %v3957 = vunpack.c.l.b16 %v3583
    %v3958 = vunpack.c.h.b16 %v3583
    %v3959 = vunpack.c.l.b16 %v3584
    %v3960 = vunpack.c.h.b16 %v3584
    %v3961 = vunpack.c.l.b16 %v3585
    %v3962 = vunpack.c.h.b16 %v3585
    %v3963 = vunpack.c.l.b16 %v3586
    %v3964 = vunpack.c.h.b16 %v3586
    %v3965 = vunpack.c.l.b16 %v3587
    %v3966 = vunpack.c.h.b16 %v3587
    %v3967 = vunpack.c.l.b16 %v3588
    %v3968 = vunpack.c.h.b16 %v3588
    %v3969 = vunpack.c.l.b16 %v3589
    %v3970 = vunpack.c.h.b16 %v3589
    %v3971 = vunpack.c.l.b16 %v3590
    %v3972 = vunpack.c.h.b16 %v3590
    %v3973 = vunpack.c.l.b16 %v3591
    %v3974 = vunpack.c.h.b16 %v3591
    %v3975 = vunpack.c.l.b16 %v3592
    %v3976 = vunpack.c.h.b16 %v3592
    %v3977 = vpack.c.b16 %v3725, %v3721
    %v3978 = vpack.c.b16 %v3726, %v3722
    %v3979 = vpack.c.b16 %v3727, %v3723
    %v3980 = vpack.c.b16 %v3728, %v3724
    %v3981 = vpack.c.b16 %v3733, %v3729
    %v3982 = vpack.c.b16 %v3734, %v3730
    %v3983 = vpack.c.b16 %v3735, %v3731
    %v3984 = vpack.c.b16 %v3736, %v3732
    %v3985 = vpack.c.b16 %v3741, %v3737
    %v3986 = vpack.c.b16 %v3742, %v3738
    %v3987 = vpack.c.b16 %v3743, %v3739
    %v3988 = vpack.c.b16 %v3744, %v3740
    %v3989 = vpack.c.b16 %v3749, %v3745
    %v3990 = vpack.c.b16 %v3750, %v3746
    %v3991 = vpack.c.b16 %v3751, %v3747
    %v3992 = vpack.c.b16 %v3752, %v3748
    %v3993 = vpack.c.b16 %v3757, %v3753
    %v3994 = vpack.c.b16 %v3758, %v3754
    %v3995 = vpack.c.b16 %v3759, %v3755
    %v3996 = vpack.c.b16 %v3760, %v3756
    %v3997 = vpack.c.b16 %v3765, %v3761
    %v3998 = vpack.c.b16 %v3766, %v3762
    %v3999 = vpack.c.b16 %v3767, %v3763
    %v4000 = vpack.c.b16 %v3768, %v3764
    %v4001 = vpack.c.b16 %v3773, %v3769
    %v4002 = vpack.c.b16 %v3774, %v3770
    %v4003 = vpack.c.b16 %v3775, %v3771
    %v4004 = vpack.c.b16 %v3776, %v3772
    %v4005 = vpack.c.b16 %v3781, %v3777
    %v4006 = vpack.c.b16 %v3782, %v3778
    %v4007 = vpack.c.b16 %v3783, %v3779
    %v4008 = vpack.c.b16 %v3784, %v3780
    %v4009 = vpack.c.b16 %v3789, %v3785
    %v4010 = vpack.c.b16 %v3790, %v3786
    %v4011 = vpack.c.b16 %v3791, %v3787
    %v4012 = vpack.c.b16 %v3792, %v3788
    %v4013 = vpack.c.b16 %v3797, %v3793
    %v4014 = vpack.c.b16 %v3798, %v3794
    %v4015 = vpack.c.b16 %v3799, %v3795
    %v4016 = vpack.c.b16 %v3800, %v3796
    %v4017 = vpack.c.b16 %v3805, %v3801
    %v4018 = vpack.c.b16 %v3806, %v3802
    %v4019 = vpack.c.b16 %v3807, %v3803
    %v4020 = vpack.c.b16 %v3808, %v3804
    %v4021 = vpack.c.b16 %v3813, %v3809
    %v4022 = vpack.c.b16 %v3814, %v3810
    %v4023 = vpack.c.b16 %v3815, %v3811
    %v4024 = vpack.c.b16 %v3816, %v3812
    %v4025 = vpack.c.b16 %v3821, %v3817
    %v4026 = vpack.c.b16 %v3822, %v3818
    %v4027 = vpack.c.b16 %v3823, %v3819
    %v4028 = vpack.c.b16 %v3824, %v3820
    %v4029 = vpack.c.b16 %v3829, %v3825
    %v4030 = vpack.c.b16 %v3830, %v3826
    %v4031 = vpack.c.b16 %v3831, %v3827
    %v4032 = vpack.c.b16 %v3832, %v3828
    %v4033 = vpack.c.b16 %v3837, %v3833
    %v4034 = vpack.c.b16 %v3838, %v3834
    %v4035 = vpack.c.b16 %v3839, %v3835
    %v4036 = vpack.c.b16 %v3840, %v3836
    %v4037 = vpack.c.b16 %v3845, %v3841
    %v4038 = vpack.c.b16 %v3846, %v3842
    %v4039 = vpack.c.b16 %v3847, %v3843
    %v4040 = vpack.c.b16 %v3848, %v3844
    %v4041 = vpack.c.b16 %v3853, %v3849
    %v4042 = vpack.c.b16 %v3854, %v3850
    %v4043 = vpack.c.b16 %v3855, %v3851
    %v4044 = vpack.c.b16 %v3856, %v3852
    %v4045 = vpack.c.b16 %v3861, %v3857
    %v4046 = vpack.c.b16 %v3862, %v3858
    %v4047 = vpack.c.b16 %v3863, %v3859
    %v4048 = vpack.c.b16 %v3864, %v3860
    %v4049 = vpack.c.b16 %v3869, %v3865
    %v4050 = vpack.c.b16 %v3870, %v3866
    %v4051 = vpack.c.b16 %v3871, %v3867
    %v4052 = vpack.c.b16 %v3872, %v3868
    %v4053 = vpack.c.b16 %v3877, %v3873
    %v4054 = vpack.c.b16 %v3878, %v3874
    %v4055 = vpack.c.b16 %v3879, %v3875
    %v4056 = vpack.c.b16 %v3880, %v3876
    %v4057 = vpack.c.b16 %v3885, %v3881
    %v4058 = vpack.c.b16 %v3886, %v3882
    %v4059 = vpack.c.b16 %v3887, %v3883
    %v4060 = vpack.c.b16 %v3888, %v3884
    %v4061 = vpack.c.b16 %v3893, %v3889
    %v4062 = vpack.c.b16 %v3894, %v3890
    %v4063 = vpack.c.b16 %v3895, %v3891
    %v4064 = vpack.c.b16 %v3896, %v3892
    %v4065 = vpack.c.b16 %v3901, %v3897
    %v4066 = vpack.c.b16 %v3902, %v3898
    %v4067 = vpack.c.b16 %v3903, %v3899
    %v4068 = vpack.c.b16 %v3904, %v3900
    %v4069 = vpack.c.b16 %v3909, %v3905
    %v4070 = vpack.c.b16 %v3910, %v3906
    %v4071 = vpack.c.b16 %v3911, %v3907
    %v4072 = vpack.c.b16 %v3912, %v3908
    %v4073 = vpack.c.b16 %v3917, %v3913
    %v4074 = vpack.c.b16 %v3918, %v3914
    %v4075 = vpack.c.b16 %v3919, %v3915
    %v4076 = vpack.c.b16 %v3920, %v3916
    %v4077 = vpack.c.b16 %v3925, %v3921
    %v4078 = vpack.c.b16 %v3926, %v3922
    %v4079 = vpack.c.b16 %v3927, %v3923
    %v4080 = vpack.c.b16 %v3928, %v3924
    %v4081 = vpack.c.b16 %v3933, %v3929
    %v4082 = vpack.c.b16 %v3934, %v3930
    %v4083 = vpack.c.b16 %v3935, %v3931
    %v4084 = vpack.c.b16 %v3936, %v3932
    %v4085 = vpack.c.b16 %v3941, %v3937
    %v4086 = vpack.c.b16 %v3942, %v3938
    %v4087 = vpack.c.b16 %v3943, %v3939
    %v4088 = vpack.c.b16 %v3944, %v3940
    %v4089 = vpack.c.b16 %v3949, %v3945
    %v4090 = vpack.c.b16 %v3950, %v3946
    %v4091 = vpack.c.b16 %v3951, %v3947
    %v4092 = vpack.c.b16 %v3952, %v3948
    %v4093 = vpack.c.b16 %v3957, %v3953
    %v4094 = vpack.c.b16 %v3958, %v3954
    %v4095 = vpack.c.b16 %v3959, %v3955
    %v4096 = vpack.c.b16 %v3960, %v3956
    %v4097 = vpack.c.b16 %v3965, %v3961
    %v4098 = vpack.c.b16 %v3966, %v3962
    %v4099 = vpack.c.b16 %v3967, %v3963
    %v4100 = vpack.c.b16 %v3968, %v3964
    %v4101 = vpack.c.b16 %v3973, %v3969
    %v4102 = vpack.c.b16 %v3974, %v3970
    %v4103 = vpack.c.b16 %v3975, %v3971
    %v4104 = vpack.c.b16 %v3976, %v3972
    %4233 = vmatpush.bf16.msra.mxu0 %v4005
    %4234 = vmatpush.bf16.msra.mxu0 %v4001
    %4235 = vmatpush.bf16.msra.mxu0 %v3997
    %4236 = vmatpush.bf16.msra.mxu0 %v3993
    %4237 = vmatpush.bf16.msra.mxu0 %v3989
    %4238 = vmatpush.bf16.msra.mxu0 %v3985
    %4239 = vmatpush.bf16.msra.mxu0 %v3981
    %4240 = vmatpush.bf16.msra.mxu0 %v3977
    %4241 = vmatmul.bf16.gmra.mxu0 %v3457
    %v4242 = vpop.f32.mrf.mxu0
    %v4243 = vadd.f32 0.0, %v4242
    %v4244 = vpop.f32.mrf.mxu0
    %v4245 = vadd.f32 0.0, %v4244
    %4246 = vmatmul.bf16.gmra.mxu0 %v3461
    %v4247 = vpop.f32.mrf.mxu0
    %v4248 = vadd.f32 0.0, %v4247
    %v4249 = vpop.f32.mrf.mxu0
    %v4250 = vadd.f32 0.0, %v4249
    %4251 = vdwg.mxu0
    %4252 = vmatpush.bf16.msra.mxu0 %v4037
    %4253 = vmatpush.bf16.msra.mxu0 %v4033
    %4254 = vmatpush.bf16.msra.mxu0 %v4029
    %4255 = vmatpush.bf16.msra.mxu0 %v4025
    %4256 = vmatpush.bf16.msra.mxu0 %v4021
    %4257 = vmatpush.bf16.msra.mxu0 %v4017
    %4258 = vmatpush.bf16.msra.mxu0 %v4013
    %4259 = vmatpush.bf16.msra.mxu0 %v4009
    %4260 = vmatmul.bf16.gmra.mxu0 %v3458
    %v4261 = vpop.f32.mrf.mxu0
    %v4262 = vadd.f32 %v4243, %v4261
    %v4263 = vpop.f32.mrf.mxu0
    %v4264 = vadd.f32 %v4245, %v4263
    %4265 = vmatmul.bf16.gmra.mxu0 %v3462
    %v4266 = vpop.f32.mrf.mxu0
    %v4267 = vadd.f32 %v4248, %v4266
    %v4268 = vpop.f32.mrf.mxu0
    %v4269 = vadd.f32 %v4250, %v4268
    %4270 = vdwg.mxu0
    %4271 = vmatpush.bf16.msra.mxu0 %v4069
    %4272 = vmatpush.bf16.msra.mxu0 %v4065
    %4273 = vmatpush.bf16.msra.mxu0 %v4061
    %4274 = vmatpush.bf16.msra.mxu0 %v4057
    %4275 = vmatpush.bf16.msra.mxu0 %v4053
    %4276 = vmatpush.bf16.msra.mxu0 %v4049
    %4277 = vmatpush.bf16.msra.mxu0 %v4045
    %4278 = vmatpush.bf16.msra.mxu0 %v4041
    %4279 = vmatmul.bf16.gmra.mxu0 %v3459
    %v4280 = vpop.f32.mrf.mxu0
    %v4281 = vadd.f32 %v4262, %v4280
    %v4282 = vpop.f32.mrf.mxu0
    %v4283 = vadd.f32 %v4264, %v4282
    %4284 = vmatmul.bf16.gmra.mxu0 %v3463
    %v4285 = vpop.f32.mrf.mxu0
    %v4286 = vadd.f32 %v4267, %v4285
    %v4287 = vpop.f32.mrf.mxu0
    %v4288 = vadd.f32 %v4269, %v4287
    %4289 = vdwg.mxu0
    %4290 = vmatpush.bf16.msra.mxu0 %v4101
    %4291 = vmatpush.bf16.msra.mxu0 %v4097
    %4292 = vmatpush.bf16.msra.mxu0 %v4093
    %4293 = vmatpush.bf16.msra.mxu0 %v4089
    %4294 = vmatpush.bf16.msra.mxu0 %v4085
    %4295 = vmatpush.bf16.msra.mxu0 %v4081
    %4296 = vmatpush.bf16.msra.mxu0 %v4077
    %4297 = vmatpush.bf16.msra.mxu0 %v4073
    %4298 = vmatmul.bf16.gmra.mxu0 %v3460
    %v4299 = vpop.f32.mrf.mxu0
    %v4300 = vadd.f32 %v4281, %v4299
    %v4301 = vpop.f32.mrf.mxu0
    %v4302 = vadd.f32 %v4283, %v4301
    %4303 = vmatmul.bf16.gmra.mxu0 %v3464
    %v4304 = vpop.f32.mrf.mxu0
    %v4305 = vadd.f32 %v4286, %v4304
    %v4306 = vpop.f32.mrf.mxu0
    %v4307 = vadd.f32 %v4288, %v4306
    %4308 = vdwg.mxu0
    %4309 = vmatpush.bf16.msra.mxu0 %v4006
    %4310 = vmatpush.bf16.msra.mxu0 %v4002
    %4311 = vmatpush.bf16.msra.mxu0 %v3998
    %4312 = vmatpush.bf16.msra.mxu0 %v3994
    %4313 = vmatpush.bf16.msra.mxu0 %v3990
    %4314 = vmatpush.bf16.msra.mxu0 %v3986
    %4315 = vmatpush.bf16.msra.mxu0 %v3982
    %4316 = vmatpush.bf16.msra.mxu0 %v3978
    %4317 = vmatmul.bf16.gmra.mxu0 %v3457
    %v4318 = vpop.f32.mrf.mxu0
    %v4319 = vadd.f32 0.0, %v4318
    %v4320 = vpop.f32.mrf.mxu0
    %v4321 = vadd.f32 0.0, %v4320
    %4322 = vmatmul.bf16.gmra.mxu0 %v3461
    %v4323 = vpop.f32.mrf.mxu0
    %v4324 = vadd.f32 0.0, %v4323
    %v4325 = vpop.f32.mrf.mxu0
    %v4326 = vadd.f32 0.0, %v4325
    %4327 = vdwg.mxu0
    %4328 = vmatpush.bf16.msra.mxu0 %v4038
    %4329 = vmatpush.bf16.msra.mxu0 %v4034
    %4330 = vmatpush.bf16.msra.mxu0 %v4030
    %4331 = vmatpush.bf16.msra.mxu0 %v4026
    %4332 = vmatpush.bf16.msra.mxu0 %v4022
    %4333 = vmatpush.bf16.msra.mxu0 %v4018
    %4334 = vmatpush.bf16.msra.mxu0 %v4014
    %4335 = vmatpush.bf16.msra.mxu0 %v4010
    %4336 = vmatmul.bf16.gmra.mxu0 %v3458
    %v4337 = vpop.f32.mrf.mxu0
    %v4338 = vadd.f32 %v4319, %v4337
    %v4339 = vpop.f32.mrf.mxu0
    %v4340 = vadd.f32 %v4321, %v4339
    %4341 = vmatmul.bf16.gmra.mxu0 %v3462
    %v4342 = vpop.f32.mrf.mxu0
    %v4343 = vadd.f32 %v4324, %v4342
    %v4344 = vpop.f32.mrf.mxu0
    %v4345 = vadd.f32 %v4326, %v4344
    %4346 = vdwg.mxu0
    %4347 = vmatpush.bf16.msra.mxu0 %v4070
    %4348 = vmatpush.bf16.msra.mxu0 %v4066
    %4349 = vmatpush.bf16.msra.mxu0 %v4062
    %4350 = vmatpush.bf16.msra.mxu0 %v4058
    %4351 = vmatpush.bf16.msra.mxu0 %v4054
    %4352 = vmatpush.bf16.msra.mxu0 %v4050
    %4353 = vmatpush.bf16.msra.mxu0 %v4046
    %4354 = vmatpush.bf16.msra.mxu0 %v4042
    %4355 = vmatmul.bf16.gmra.mxu0 %v3459
    %v4356 = vpop.f32.mrf.mxu0
    %v4357 = vadd.f32 %v4338, %v4356
    %v4358 = vpop.f32.mrf.mxu0
    %v4359 = vadd.f32 %v4340, %v4358
    %4360 = vmatmul.bf16.gmra.mxu0 %v3463
    %v4361 = vpop.f32.mrf.mxu0
    %v4362 = vadd.f32 %v4343, %v4361
    %v4363 = vpop.f32.mrf.mxu0
    %v4364 = vadd.f32 %v4345, %v4363
    %4365 = vdwg.mxu0
    %4366 = vmatpush.bf16.msra.mxu0 %v4102
    %4367 = vmatpush.bf16.msra.mxu0 %v4098
    %4368 = vmatpush.bf16.msra.mxu0 %v4094
    %4369 = vmatpush.bf16.msra.mxu0 %v4090
    %4370 = vmatpush.bf16.msra.mxu0 %v4086
    %4371 = vmatpush.bf16.msra.mxu0 %v4082
    %4372 = vmatpush.bf16.msra.mxu0 %v4078
    %4373 = vmatpush.bf16.msra.mxu0 %v4074
    %4374 = vmatmul.bf16.gmra.mxu0 %v3460
    %v4375 = vpop.f32.mrf.mxu0
    %v4376 = vadd.f32 %v4357, %v4375
    %v4377 = vpop.f32.mrf.mxu0
    %v4378 = vadd.f32 %v4359, %v4377
    %4379 = vmatmul.bf16.gmra.mxu0 %v3464
    %v4380 = vpop.f32.mrf.mxu0
    %v4381 = vadd.f32 %v4362, %v4380
    %v4382 = vpop.f32.mrf.mxu0
    %v4383 = vadd.f32 %v4364, %v4382
    %4384 = vdwg.mxu0
    %4385 = vmatpush.bf16.msra.mxu0 %v4007
    %4386 = vmatpush.bf16.msra.mxu0 %v4003
    %4387 = vmatpush.bf16.msra.mxu0 %v3999
    %4388 = vmatpush.bf16.msra.mxu0 %v3995
    %4389 = vmatpush.bf16.msra.mxu0 %v3991
    %4390 = vmatpush.bf16.msra.mxu0 %v3987
    %4391 = vmatpush.bf16.msra.mxu0 %v3983
    %4392 = vmatpush.bf16.msra.mxu0 %v3979
    %4393 = vmatmul.bf16.gmra.mxu0 %v3457
    %v4394 = vpop.f32.mrf.mxu0
    %v4395 = vadd.f32 0.0, %v4394
    %v4396 = vpop.f32.mrf.mxu0
    %v4397 = vadd.f32 0.0, %v4396
    %4398 = vmatmul.bf16.gmra.mxu0 %v3461
    %v4399 = vpop.f32.mrf.mxu0
    %v4400 = vadd.f32 0.0, %v4399
    %v4401 = vpop.f32.mrf.mxu0
    %v4402 = vadd.f32 0.0, %v4401
    %4403 = vdwg.mxu0
    %4404 = vmatpush.bf16.msra.mxu0 %v4039
    %4405 = vmatpush.bf16.msra.mxu0 %v4035
    %4406 = vmatpush.bf16.msra.mxu0 %v4031
    %4407 = vmatpush.bf16.msra.mxu0 %v4027
    %4408 = vmatpush.bf16.msra.mxu0 %v4023
    %4409 = vmatpush.bf16.msra.mxu0 %v4019
    %4410 = vmatpush.bf16.msra.mxu0 %v4015
    %4411 = vmatpush.bf16.msra.mxu0 %v4011
    %4412 = vmatmul.bf16.gmra.mxu0 %v3458
    %v4413 = vpop.f32.mrf.mxu0
    %v4414 = vadd.f32 %v4395, %v4413
    %v4415 = vpop.f32.mrf.mxu0
    %v4416 = vadd.f32 %v4397, %v4415
    %4417 = vmatmul.bf16.gmra.mxu0 %v3462
    %v4418 = vpop.f32.mrf.mxu0
    %v4419 = vadd.f32 %v4400, %v4418
    %v4420 = vpop.f32.mrf.mxu0
    %v4421 = vadd.f32 %v4402, %v4420
    %4422 = vdwg.mxu0
    %4423 = vmatpush.bf16.msra.mxu0 %v4071
    %4424 = vmatpush.bf16.msra.mxu0 %v4067
    %4425 = vmatpush.bf16.msra.mxu0 %v4063
    %4426 = vmatpush.bf16.msra.mxu0 %v4059
    %4427 = vmatpush.bf16.msra.mxu0 %v4055
    %4428 = vmatpush.bf16.msra.mxu0 %v4051
    %4429 = vmatpush.bf16.msra.mxu0 %v4047
    %4430 = vmatpush.bf16.msra.mxu0 %v4043
    %4431 = vmatmul.bf16.gmra.mxu0 %v3459
    %v4432 = vpop.f32.mrf.mxu0
    %v4433 = vadd.f32 %v4414, %v4432
    %v4434 = vpop.f32.mrf.mxu0
    %v4435 = vadd.f32 %v4416, %v4434
    %4436 = vmatmul.bf16.gmra.mxu0 %v3463
    %v4437 = vpop.f32.mrf.mxu0
    %v4438 = vadd.f32 %v4419, %v4437
    %v4439 = vpop.f32.mrf.mxu0
    %v4440 = vadd.f32 %v4421, %v4439
    %4441 = vdwg.mxu0
    %4442 = vmatpush.bf16.msra.mxu0 %v4103
    %4443 = vmatpush.bf16.msra.mxu0 %v4099
    %4444 = vmatpush.bf16.msra.mxu0 %v4095
    %4445 = vmatpush.bf16.msra.mxu0 %v4091
    %4446 = vmatpush.bf16.msra.mxu0 %v4087
    %4447 = vmatpush.bf16.msra.mxu0 %v4083
    %4448 = vmatpush.bf16.msra.mxu0 %v4079
    %4449 = vmatpush.bf16.msra.mxu0 %v4075
    %4450 = vmatmul.bf16.gmra.mxu0 %v3460
    %v4451 = vpop.f32.mrf.mxu0
    %v4452 = vadd.f32 %v4433, %v4451
    %v4453 = vpop.f32.mrf.mxu0
    %v4454 = vadd.f32 %v4435, %v4453
    %4455 = vmatmul.bf16.gmra.mxu0 %v3464
    %v4456 = vpop.f32.mrf.mxu0
    %v4457 = vadd.f32 %v4438, %v4456
    %v4458 = vpop.f32.mrf.mxu0
    %v4459 = vadd.f32 %v4440, %v4458
    %4460 = vdwg.mxu0
    %4461 = vmatpush.bf16.msra.mxu0 %v4008
    %4462 = vmatpush.bf16.msra.mxu0 %v4004
    %4463 = vmatpush.bf16.msra.mxu0 %v4000
    %4464 = vmatpush.bf16.msra.mxu0 %v3996
    %4465 = vmatpush.bf16.msra.mxu0 %v3992
    %4466 = vmatpush.bf16.msra.mxu0 %v3988
    %4467 = vmatpush.bf16.msra.mxu0 %v3984
    %4468 = vmatpush.bf16.msra.mxu0 %v3980
    %4469 = vmatmul.bf16.gmra.mxu0 %v3457
    %v4470 = vpop.f32.mrf.mxu0
    %v4471 = vadd.f32 0.0, %v4470
    %v4472 = vpop.f32.mrf.mxu0
    %v4473 = vadd.f32 0.0, %v4472
    %4474 = vmatmul.bf16.gmra.mxu0 %v3461
    %v4475 = vpop.f32.mrf.mxu0
    %v4476 = vadd.f32 0.0, %v4475
    %v4477 = vpop.f32.mrf.mxu0
    %v4478 = vadd.f32 0.0, %v4477
    %4479 = vdwg.mxu0
    %4480 = vmatpush.bf16.msra.mxu0 %v4040
    %4481 = vmatpush.bf16.msra.mxu0 %v4036
    %4482 = vmatpush.bf16.msra.mxu0 %v4032
    %4483 = vmatpush.bf16.msra.mxu0 %v4028
    %4484 = vmatpush.bf16.msra.mxu0 %v4024
    %4485 = vmatpush.bf16.msra.mxu0 %v4020
    %4486 = vmatpush.bf16.msra.mxu0 %v4016
    %4487 = vmatpush.bf16.msra.mxu0 %v4012
    %4488 = vmatmul.bf16.gmra.mxu0 %v3458
    %v4489 = vpop.f32.mrf.mxu0
    %v4490 = vadd.f32 %v4471, %v4489
    %v4491 = vpop.f32.mrf.mxu0
    %v4492 = vadd.f32 %v4473, %v4491
    %4493 = vmatmul.bf16.gmra.mxu0 %v3462
    %v4494 = vpop.f32.mrf.mxu0
    %v4495 = vadd.f32 %v4476, %v4494
    %v4496 = vpop.f32.mrf.mxu0
    %v4497 = vadd.f32 %v4478, %v4496
    %4498 = vdwg.mxu0
    %4499 = vmatpush.bf16.msra.mxu0 %v4072
    %4500 = vmatpush.bf16.msra.mxu0 %v4068
    %4501 = vmatpush.bf16.msra.mxu0 %v4064
    %4502 = vmatpush.bf16.msra.mxu0 %v4060
    %4503 = vmatpush.bf16.msra.mxu0 %v4056
    %4504 = vmatpush.bf16.msra.mxu0 %v4052
    %4505 = vmatpush.bf16.msra.mxu0 %v4048
    %4506 = vmatpush.bf16.msra.mxu0 %v4044
    %4507 = vmatmul.bf16.gmra.mxu0 %v3459
    %v4508 = vpop.f32.mrf.mxu0
    %v4509 = vadd.f32 %v4490, %v4508
    %v4510 = vpop.f32.mrf.mxu0
    %v4511 = vadd.f32 %v4492, %v4510
    %4512 = vmatmul.bf16.gmra.mxu0 %v3463
    %v4513 = vpop.f32.mrf.mxu0
    %v4514 = vadd.f32 %v4495, %v4513
    %v4515 = vpop.f32.mrf.mxu0
    %v4516 = vadd.f32 %v4497, %v4515
    %4517 = vdwg.mxu0
    %4518 = vmatpush.bf16.msra.mxu0 %v4104
    %4519 = vmatpush.bf16.msra.mxu0 %v4100
    %4520 = vmatpush.bf16.msra.mxu0 %v4096
    %4521 = vmatpush.bf16.msra.mxu0 %v4092
    %4522 = vmatpush.bf16.msra.mxu0 %v4088
    %4523 = vmatpush.bf16.msra.mxu0 %v4084
    %4524 = vmatpush.bf16.msra.mxu0 %v4080
    %4525 = vmatpush.bf16.msra.mxu0 %v4076
    %4526 = vmatmul.bf16.gmra.mxu0 %v3460
    %v4527 = vpop.f32.mrf.mxu0
    %v4528 = vadd.f32 %v4509, %v4527
    %v4529 = vpop.f32.mrf.mxu0
    %v4530 = vadd.f32 %v4511, %v4529
    %4531 = vmatmul.bf16.gmra.mxu0 %v3464
    %v4532 = vpop.f32.mrf.mxu0
    %v4533 = vadd.f32 %v4514, %v4532
    %v4534 = vpop.f32.mrf.mxu0
    %v4535 = vadd.f32 %v4516, %v4534
    %4536 = vdwg.mxu0
    %4537 = vst [vmem:[#allocation17] sm:$0xff] %v4300
    %4538 = vst [vmem:[#allocation17 + $0x8] sm:$0xff] %v4376
    %4539 = vst [vmem:[#allocation17 + $0x10] sm:$0xff] %v4452
    %4540 = vst [vmem:[#allocation17 + $0x18] sm:$0xff] %v4528
    %4541 = vst [vmem:[#allocation17 + $0x20] sm:$0xff] %v4302
    %4542 = vst [vmem:[#allocation17 + $0x28] sm:$0xff] %v4378
    %4543 = vst [vmem:[#allocation17 + $0x30] sm:$0xff] %v4454
    %4544 = vst [vmem:[#allocation17 + $0x38] sm:$0xff] %v4530
    %4545 = vst [vmem:[#allocation17 + $0x40] sm:$0xff] %v4305
    %4546 = vst [vmem:[#allocation17 + $0x48] sm:$0xff] %v4381
    %4547 = vst [vmem:[#allocation17 + $0x50] sm:$0xff] %v4457
    %4548 = vst [vmem:[#allocation17 + $0x58] sm:$0xff] %v4533
    %4549 = vst [vmem:[#allocation17 + $0x60] sm:$0xff] %v4307
    %4550 = vst [vmem:[#allocation17 + $0x68] sm:$0xff] %v4383
    %4551 = vst [vmem:[#allocation17 + $0x70] sm:$0xff] %v4459
    %4552 = vst [vmem:[#allocation17 + $0x78] sm:$0xff] %v4535
    // Predicated region
    $region50: #{tpu_custom_call.1} parent=1 // pred_check
      _
    $region51: #{tpu_custom_call.1} parent=1 // pred_check_branch
      %4554 = sbr.rel (0) target = $region53
    $region52: #{tpu_custom_call.1} parent=1 // pred_region
      %4556 = vsyncadd [#allocation8], 0
      %s4557 = sshll.u32 [#allocation17], 4
      %s4558 = int_to_ptr.vmem [resolvable:$true] %s4557
      %s4559 = sshll.u32 %s6, 4
      %s4560 = int_to_ptr.hbm [resolvable:$true] %s4559
      %4565 = dma.vmem_to_hbm [thread:$0]  %s4558, 2048, %s4560, [#allocation8], 512, 512, 32
    $region53: #{tpu_custom_call.1} parent=1 // pred_fallthru
      _
    // Predicated region
    $region54: #{tpu_custom_call.1} parent=1 // pred_check
      _
    $region55: #{tpu_custom_call.1} parent=1 // pred_check_branch
      %4567 = sbr.rel (0) target = $region57
    $region56: #{tpu_custom_call.1} parent=1 // pred_region
      %4569 = dma.done [#allocation8], 2048
    $region57: #{tpu_custom_call.1} parent=1 // pred_fallthru
      _
    %4570 = vsyncpa [#allocation7], 1
    %4571 = vsyncpa [#allocation10], 1
    %4572 = vsyncpa [#allocation13], 1
    %4573 = vsyncpa [#allocation16], 1
    %4574 = vsyncpa [#allocation8], 1

</llo_original>
